<compile_context>
chip_gen: v7x
topology: tpu7x:2x2x1
jax: 0.10.0
libtpu: 0.0.40
codegen_flags: <defaults>
</compile_context>

<pallas_src>
import functools

import jax
import jax.numpy as jnp
import numpy as np
from jax.experimental import pallas as pl
from jax.experimental.pallas import tpu as pltpu

INPUT_SIZE = 512
HIDDEN = 64
NUM_CLASSES = 2
GATES = 8 * HIDDEN          # 512 = [fwd i,f,o,g | rev i,f,o,g], 64 each
GATES_DIR = 4 * HIDDEN      # 256 per direction


def _vmem_limit_bytes():
    """Scoped-VMEM limit per generation (v5e/v6e: 128 MiB phys, v7x: 64 MiB)."""
    try:
        cap = int(pltpu.get_tpu_info().vmem_capacity_bytes)
    except Exception:
        cap = 64 << 20                      # conservative (v7x physical VMEM)
    return max(16 << 20, min(cap // 2, 64 << 20))


def _pick_time_chunk(T, B, feat_isz, gates_isz, vmem_limit):
    """Largest multiple-of-8 divisor of T (<=1024) whose double-buffered block
    working set fits in ~half the scoped VMEM limit; falls back to T."""
    budget = vmem_limit // 2
    weights = (INPUT_SIZE * GATES * feat_isz          # w_in
               + 2 * HIDDEN * GATES_DIR * 4           # whh_f / whh_r
               + 8192)                                # biases / head / slack

    def block_bytes(c):
        k1 = B * c * INPUT_SIZE * feat_isz + c * B * GATES_DIR * gates_isz
        k2 = 2 * c * B * GATES_DIR * gates_isz
        return 2 * max(k1, k2)                        # double-buffered

    best = None
    c = 8
    while c <= min(T, 1024):
        if T % c == 0 and block_bytes(c) + weights <= budget:
            best = c
        c += 8
    return best if best is not None else T


def _reorder_ifog(w):
    """Reorder last axis from PyTorch gate order [i|f|g|o] to [i|f|o|g]."""
    H = HIDDEN
    return jnp.concatenate(
        [w[..., 0:H], w[..., H:2 * H], w[..., 3 * H:4 * H], w[..., 2 * H:3 * H]],
        axis=-1)


def prepare_params(p):
    """Pack / pre-transpose PyTorch-layout weights ONCE (outside the hot path)."""
    wih_f = _reorder_ifog(p["w_ih_f"].T.astype(jnp.float32))     # (512, 256)
    wih_r = _reorder_ifog(p["w_ih_r"].T.astype(jnp.float32))     # (512, 256)
    w_in = jnp.concatenate([wih_f, wih_r], axis=1)               # (512, 512)

    b_f = _reorder_ifog((p["b_ih_f"] + p["b_hh_f"]).astype(jnp.float32))
    b_r = _reorder_ifog((p["b_ih_r"] + p["b_hh_r"]).astype(jnp.float32))
    b_in = jnp.concatenate([b_f, b_r])[None, :]                  # (1, 512)

    w_hh_f = _reorder_ifog(p["w_hh_f"].T.astype(jnp.float32))    # (64, 256)
    w_hh_r = _reorder_ifog(p["w_hh_r"].T.astype(jnp.float32))    # (64, 256)

    # 0.5 * (h_f + h_r) @ w_fc.T  ==  (h_f + h_r) @ (0.5 * w_fc.T)
    w_fc = 0.5 * p["w_fc"].T.astype(jnp.float32)                 # (64, 2)
    b_fc = p["b_fc"].astype(jnp.float32)[None, :]                # (1, 2)
    return dict(w_in=w_in, b_in=b_in, w_hh_f=w_hh_f, w_hh_r=w_hh_r,
                w_fc=w_fc, b_fc=b_fc)


# --------------------------------------------------------------------------- #
# Kernel 1: hoisted input projection (one direction-half per grid cell),
#           batch-first -> time-major, single flattened matmul per chunk.
# --------------------------------------------------------------------------- #
def _proj_kernel(x_ref,      # (B, tT, 512)   batch-first feat chunk
                 w_ref,      # (512, 256)     fused input weights (one dir)
                 b_ref,      # (1, 256)       fused biases (b_ih + b_hh, one dir)
                 g_ref):     # (tT, B, 256)   time-major gate pre-activations
    B, tT, D = x_ref.shape
    N = g_ref.shape[-1]
    x = x_ref[...].reshape(B * tT, D)                  # trivial leading-dim merge
    g = jnp.dot(x, w_ref[...], preferred_element_type=jnp.float32) + b_ref[...]
    g = g.reshape(B, tT, N)
    # Single (B,tT)->(tT,B) major-dim transpose (XLU, hidden under pipeline),
    # then one lane-dense store; cast to the gates dtype at the store.
    g_ref[...] = jnp.swapaxes(g, 0, 1).astype(g_ref.dtype)


# --------------------------------------------------------------------------- #
# Kernel 2: bidirectional recurrence + fc head + softmax.
# --------------------------------------------------------------------------- #
def _recurrence_kernel(gf_ref,    # (tT, B, 256) forward-dir gate preacts, chunk i
                       gr_ref,    # (tT, B, 256) reverse-dir gate preacts, chunk NC-1-i
                       whh_f_ref, # (64, 256)    forward recurrent weight [i|f|o|g]
                       whh_r_ref, # (64, 256)    reverse recurrent weight [i|f|o|g]
                       wfc_ref,   # (64, 2)      head weight (0.5 mean folded in)
                       bfc_ref,   # (1, 2)       head bias
                       out_ref,   # (B, 2)       softmax probabilities
                       hf_scr,    # (B, 64) VMEM: h_f carried across chunks
                       hr_scr,    # (B, 64) VMEM: h_r carried across chunks
                       cf_scr,    # (B, 64) VMEM: c_f carried across chunks
                       cr_scr):   # (B, 64) VMEM: c_r carried across chunks
    tT, B, _ = gf_ref.shape
    H = HIDDEN

    @pl.when(pl.program_id(0) == 0)
    def _init():
        hf_scr[...] = jnp.zeros_like(hf_scr)
        hr_scr[...] = jnp.zeros_like(hr_scr)
        cf_scr[...] = jnp.zeros_like(cf_scr)
        cr_scr[...] = jnp.zeros_like(cr_scr)

    # Hoisted once per chunk; Mosaic keeps them resident across the unrolled loop.
    whh_f = whh_f_ref[...]
    whh_r = whh_r_ref[...]

    def step(l, carry):
        h_f, h_r, c_f, c_r = carry                               # four (B, 64)
        # Two per-direction recurrent matmuls (K=64, N=256) -> no lane concat
        # and no carry re-slicing on the serial critical path.
        gh_f = jnp.dot(h_f, whh_f, preferred_element_type=jnp.float32)
        gh_r = jnp.dot(h_r, whh_r, preferred_element_type=jnp.float32)
        gf = gf_ref[l].astype(jnp.float32) + gh_f                # fwd [i,f,o,g]
        gr = gr_ref[tT - 1 - l].astype(jnp.float32) + gh_r       # rev [i,f,o,g]
        # Contiguous sigmoid block [i|f|o], tanh block [g] per direction.
        sf = jax.nn.sigmoid(gf[:, :3 * H])
        sr = jax.nn.sigmoid(gr[:, :3 * H])
        gft = jnp.tanh(gf[:, 3 * H:])
        grt = jnp.tanh(gr[:, 3 * H:])
        c_f = sf[:, H:2 * H] * c_f + sf[:, :H] * gft
        c_r = sr[:, H:2 * H] * c_r + sr[:, :H] * grt
        h_f = sf[:, 2 * H:3 * H] * jnp.tanh(c_f)
        h_r = sr[:, 2 * H:3 * H] * jnp.tanh(c_r)
        return (h_f, h_r, c_f, c_r)

    unroll = True if tT <= 64 else 8
    h_f, h_r, c_f, c_r = jax.lax.fori_loop(
        0, tT, step,
        (hf_scr[...], hr_scr[...], cf_scr[...], cr_scr[...]),
        unroll=unroll)
    hf_scr[...] = h_f
    hr_scr[...] = h_r
    cf_scr[...] = c_f
    cr_scr[...] = c_r

    @pl.when(pl.program_id(0) == pl.num_programs(0) - 1)
    def _head():
        logits = (jnp.dot(h_f + h_r, wfc_ref[...],
                          preferred_element_type=jnp.float32) + bfc_ref[...])
        m = jnp.max(logits, axis=1, keepdims=True)
        e = jnp.exp(logits - m)
        out_ref[...] = e / jnp.sum(e, axis=1, keepdims=True)


# --------------------------------------------------------------------------- #
# Wrapper
# --------------------------------------------------------------------------- #
@functools.partial(jax.jit, static_argnames=("projection_dtype",))
def anomaly_clip_lstm3_forward(feat, packed, projection_dtype=jnp.bfloat16):
    """feat: (B, T, 512) -> (B, 2) softmax probabilities."""
    B, T, D = feat.shape
    assert D == INPUT_SIZE
    H = HIDDEN

    gates_dtype = projection_dtype            # gates intermediate follows the
    feat_isz = int(jnp.dtype(projection_dtype).itemsize)  # projection dtype
    gates_isz = int(jnp.dtype(gates_dtype).itemsize)

    vmem_limit = _vmem_limit_bytes()
    tT = _pick_time_chunk(T, B, feat_isz, gates_isz, vmem_limit)
    NC = T // tT

    feat_p = feat.astype(projection_dtype)
    w_in = packed["w_in"].astype(projection_dtype)
    b_in = packed["b_in"]                     # bias stays f32 (added post-MXU)

    proj_cost = pl.CostEstimate(
        flops=int(2 * T * B * D * GATES),
        transcendentals=0,
        bytes_accessed=int(T * B * D * feat_isz + D * GATES * feat_isz
                           + GATES * 4 + T * B * GATES * gates_isz))

    # Kernel 1: (B, T, 512) -> time-major gate pre-activations (T, B, 512).
    # Grid (NC, 2): time chunks x {fwd, rev} gate-column halves, both parallel.
    gates = pl.pallas_call(
        _proj_kernel,
        out_shape=jax.ShapeDtypeStruct((T, B, GATES), gates_dtype),
        grid=(NC, 2),
        in_specs=[
            pl.BlockSpec((B, tT, D), lambda i, j: (0, i, 0)),
            pl.BlockSpec((D, GATES_DIR), lambda i, j: (0, j)),
            pl.BlockSpec((1, GATES_DIR), lambda i, j: (0, j)),
        ],
        out_specs=pl.BlockSpec((tT, B, GATES_DIR), lambda i, j: (i, 0, j)),
        compiler_params=pltpu.CompilerParams(
            dimension_semantics=("parallel", "parallel"),
            vmem_limit_bytes=vmem_limit),
        cost_estimate=proj_cost,
    )(feat_p, w_in, b_in)

    recur_cost = pl.CostEstimate(
        flops=int(2 * T * B * H * GATES_DIR * 2 + 2 * B * H * NUM_CLASSES),
        transcendentals=int(T * B * 10 * H + B * NUM_CLASSES),
        bytes_accessed=int(T * B * GATES * gates_isz
                           + 2 * H * GATES_DIR * 4
                           + (H * NUM_CLASSES + NUM_CLASSES) * 4
                           + B * NUM_CLASSES * 4))

    # Kernel 2: chunked recurrence with scratch-carried (h_f,h_r,c_f,c_r),
    # forward chunks read in order, reverse chunks via reversed index_map,
    # head at the last grid step.
    out = pl.pallas_call(
        _recurrence_kernel,
        out_shape=jax.ShapeDtypeStruct((B, NUM_CLASSES), jnp.float32),
        grid=(NC,),
        in_specs=[
            pl.BlockSpec((tT, B, GATES_DIR), lambda i: (i, 0, 0)),           # fwd
            pl.BlockSpec((tT, B, GATES_DIR), lambda i: (NC - 1 - i, 0, 1)),  # rev
            pl.BlockSpec((H, GATES_DIR), lambda i: (0, 0)),
            pl.BlockSpec((H, GATES_DIR), lambda i: (0, 0)),
            pl.BlockSpec((H, NUM_CLASSES), lambda i: (0, 0)),
            pl.BlockSpec((1, NUM_CLASSES), lambda i: (0, 0)),
        ],
        out_specs=pl.BlockSpec((B, NUM_CLASSES), lambda i: (0, 0)),
        scratch_shapes=[pltpu.VMEM((B, H), jnp.float32)] * 4,
        compiler_params=pltpu.CompilerParams(
            dimension_semantics=("arbitrary",),
            vmem_limit_bytes=vmem_limit),
        cost_estimate=recur_cost,
    )(gates, gates, packed["w_hh_f"], packed["w_hh_r"],
      packed["w_fc"], packed["b_fc"])
    return out


# --------------------------------------------------------------------------- #
# Pure-JAX reference (matches PyTorch bidirectional LSTM + head, eval mode)
# --------------------------------------------------------------------------- #
def reference_forward(feat, params):
    feat = feat.astype(jnp.float32)
    B, T, _ = feat.shape

    def run_dir(wih, whh, bih, bhh, reverse):
        h = jnp.zeros((B, HIDDEN), jnp.float32)
        c = jnp.zeros((B, HIDDEN), jnp.float32)
        order = range(T - 1, -1, -1) if reverse else range(T)
        for t in order:
            x = feat[:, t, :]
            gates = x @ wih.T + bih + h @ whh.T + bhh
            i, f, g, o = jnp.split(gates, 4, axis=1)
            i, f, o = jax.nn.sigmoid(i), jax.nn.sigmoid(f), jax.nn.sigmoid(o)
            g = jnp.tanh(g)
            c = f * c + i * g
            h = o * jnp.tanh(c)
        return h

    h_f = run_dir(params["w_ih_f"], params["w_hh_f"],
                  params["b_ih_f"], params["b_hh_f"], reverse=False)
    h_r = run_dir(params["w_ih_r"], params["w_hh_r"],
                  params["b_ih_r"], params["b_hh_r"], reverse=True)
    h_mean = 0.5 * (h_f + h_r)
    logits = h_mean @ params["w_fc"].T + params["b_fc"]
    return jax.nn.softmax(logits, axis=1)


if __name__ == "__main__":
    key = jax.random.PRNGKey(0)
    keys = jax.random.split(key, 11)
    bound = 1.0 / float(np.sqrt(HIDDEN))   # PyTorch default uniform init bound

    def u(k_, shape):
        return jax.random.uniform(k_, shape, jnp.float32, -bound, bound)

    params = {
        "w_ih_f": u(keys[0], (4 * HIDDEN, INPUT_SIZE)),
        "w_hh_f": u(keys[1], (4 * HIDDEN, HIDDEN)),
        "b_ih_f": u(keys[2], (4 * HIDDEN,)),
        "b_hh_f": u(keys[3], (4 * HIDDEN,)),
        "w_ih_r": u(keys[4], (4 * HIDDEN, INPUT_SIZE)),
        "w_hh_r": u(keys[5], (4 * HIDDEN, HIDDEN)),
        "b_ih_r": u(keys[6], (4 * HIDDEN,)),
        "b_hh_r": u(keys[7], (4 * HIDDEN,)),
        "w_fc":   u(keys[8], (NUM_CLASSES, HIDDEN)),
        "b_fc":   u(keys[9], (NUM_CLASSES,)),
    }

    B, T = 2, 8
    feat = jax.random.normal(keys[10], (B, T, INPUT_SIZE), jnp.float32)

    packed = jax.tree_util.tree_map(jax.block_until_ready, prepare_params(params))
    ref = jax.block_until_ready(reference_forward(feat, params))

    # f32 path (tight check against the reference).
    out_f32 = jax.block_until_ready(
        anomaly_clip_lstm3_forward(feat, packed, projection_dtype=jnp.float32))
    np.testing.assert_allclose(np.asarray(out_f32), np.asarray(ref),
                               rtol=2e-5, atol=2e-5)

    # Default path: bf16 input projection + bf16 gates intermediate (halved
    # HBM traffic, MXU-native); recurrence stays f32. Looser tolerance.
    out_bf16 = jax.block_until_ready(anomaly_clip_lstm3_forward(feat, packed))
    np.testing.assert_allclose(np.asarray(out_bf16), np.asarray(ref),
                               rtol=5e-2, atol=5e-2)

    print("KERNEL_OK")
</pallas_src>

<mosaic_0001>
module attributes {stable_mosaic.version = 11 : i64} {
  func.func @_proj_kernel(%arg0: i32, %arg1: i32, %arg2: memref<2x8x512xf32, #tpu.memory_space<vmem>>, %arg3: memref<512x256xf32, #tpu.memory_space<vmem>>, %arg4: memref<1x256xf32, #tpu.memory_space<vmem>>, %arg5: memref<8x2x256xf32, #tpu.memory_space<vmem>>) attributes {dimension_semantics = [#tpu.dimension_semantics<parallel>, #tpu.dimension_semantics<parallel>], iteration_bounds = array<i64: 1, 2>, scalar_prefetch = 0 : i64, scratch_operands = 0 : i64, tpu.core_type = #tpu.core_type<tc>, window_params = [{transform_indices = @transform_0, window_bounds = array<i64: 2, 8, 512>}, {transform_indices = @transform_1, window_bounds = array<i64: 512, 256>}, {transform_indices = @transform_2, window_bounds = array<i64: 1, 256>}, {transform_indices = @transform_3, window_bounds = array<i64: 8, 2, 256>}]} {
    %c0 = arith.constant 0 : index
    %c0_0 = arith.constant 0 : index
    %c0_1 = arith.constant 0 : index
    %0 = vector.load %arg2[%c0, %c0_0, %c0_1] : memref<2x8x512xf32, #tpu.memory_space<vmem>>, vector<2x8x512xf32>
    %1 = vector.shape_cast %0 : vector<2x8x512xf32> to vector<16x512xf32>
    %c0_2 = arith.constant 0 : index
    %c0_3 = arith.constant 0 : index
    %2 = vector.load %arg3[%c0_2, %c0_3] : memref<512x256xf32, #tpu.memory_space<vmem>>, vector<512x256xf32>
    %cst = arith.constant dense<0.000000e+00> : vector<16x256xf32>
    %3 = tpu.matmul %1, %2, %cst {dimension_numbers = #tpu.dot_dimension_numbers<[1], [0], [0], [1], [0, 0, 1, 1], [], []>} : vector<16x512xf32>, vector<512x256xf32>, vector<16x256xf32> -> vector<16x256xf32>
    %c0_4 = arith.constant 0 : index
    %c0_5 = arith.constant 0 : index
    %4 = vector.load %arg4[%c0_4, %c0_5] : memref<1x256xf32, #tpu.memory_space<vmem>>, vector<1x256xf32>
    %5 = vector.broadcast %4 : vector<1x256xf32> to vector<16x256xf32>
    %6 = arith.addf %3, %5 : vector<16x256xf32>
    %7 = vector.shape_cast %6 : vector<16x256xf32> to vector<2x8x256xf32>
    %8 = tpu.transpose %7, [1, 0, 2] : vector<2x8x256xf32> -> vector<8x2x256xf32>
    %c0_6 = arith.constant 0 : index
    %c0_7 = arith.constant 0 : index
    %c0_8 = arith.constant 0 : index
    %9 = vector.load %arg5[%c0_6, %c0_7, %c0_8] : memref<8x2x256xf32, #tpu.memory_space<vmem>>, vector<8x2x256xf32>
    tpu.vector_store %arg5[%c0_6, %c0_7, %c0_8], %8 {strides = array<i32>} : memref<8x2x256xf32, #tpu.memory_space<vmem>>, vector<8x2x256xf32>,
    return
  }
  func.func @transform_0(%arg0: i32, %arg1: i32) -> (i32, i32, i32) {
    %c0_i32 = arith.constant 0 : i32
    %c0_i32_0 = arith.constant 0 : i32
    %c0_i32_1 = arith.constant 0 : i32
    return %c0_i32, %arg0, %c0_i32_0 : i32, i32, i32
  }
  func.func @transform_1(%arg0: i32, %arg1: i32) -> (i32, i32) {
    %c0_i32 = arith.constant 0 : i32
    %c0_i32_0 = arith.constant 0 : i32
    return %c0_i32, %arg1 : i32, i32
  }
  func.func @transform_2(%arg0: i32, %arg1: i32) -> (i32, i32) {
    %c0_i32 = arith.constant 0 : i32
    %c0_i32_0 = arith.constant 0 : i32
    return %c0_i32, %arg1 : i32, i32
  }
  func.func @transform_3(%arg0: i32, %arg1: i32) -> (i32, i32, i32) {
    %c0_i32 = arith.constant 0 : i32
    %c0_i32_0 = arith.constant 0 : i32
    return %arg0, %c0_i32, %arg1 : i32, i32, i32
  }
}

module attributes {stable_mosaic.version = 11 : i64} {
  func.func @_recurrence_kernel(%arg0: i32, %arg1: memref<8x2x256xf32, #tpu.memory_space<vmem>>, %arg2: memref<8x2x256xf32, #tpu.memory_space<vmem>>, %arg3: memref<64x256xf32, #tpu.memory_space<vmem>>, %arg4: memref<64x256xf32, #tpu.memory_space<vmem>>, %arg5: memref<64x2xf32, #tpu.memory_space<vmem>>, %arg6: memref<1x2xf32, #tpu.memory_space<vmem>>, %arg7: memref<2x2xf32, #tpu.memory_space<vmem>>, %arg8: memref<2x64xf32, #tpu.memory_space<vmem>>, %arg9: memref<2x64xf32, #tpu.memory_space<vmem>>, %arg10: memref<2x64xf32, #tpu.memory_space<vmem>>, %arg11: memref<2x64xf32, #tpu.memory_space<vmem>>) attributes {dimension_semantics = [#tpu.dimension_semantics<arbitrary>], iteration_bounds = array<i64: 1>, scalar_prefetch = 0 : i64, scratch_operands = 4 : i64, tpu.core_type = #tpu.core_type<tc>, window_params = [{transform_indices = @transform_0, window_bounds = array<i64: 8, 2, 256>}, {transform_indices = @transform_1, window_bounds = array<i64: 8, 2, 256>}, {pipeline_mode = #tpu.pipeline_mode<synchronous>, transform_indices = @transform_2, window_bounds = array<i64: 64, 256>}, {pipeline_mode = #tpu.pipeline_mode<synchronous>, transform_indices = @transform_3, window_bounds = array<i64: 64, 256>}, {pipeline_mode = #tpu.pipeline_mode<synchronous>, transform_indices = @transform_4, window_bounds = array<i64: 64, 2>}, {pipeline_mode = #tpu.pipeline_mode<synchronous>, transform_indices = @transform_5, window_bounds = array<i64: 1, 2>}, {pipeline_mode = #tpu.pipeline_mode<synchronous>, transform_indices = @transform_6, window_bounds = array<i64: 2, 2>}]} {
    %c0_i32 = arith.constant 0 : i32
    %0 = arith.cmpi eq, %arg0, %c0_i32 : i32
    %1 = arith.extui %0 : i1 to i32
    %c0_i32_0 = arith.constant 0 : i32
    %2 = arith.cmpi ne, %1, %c0_i32_0 : i32
    scf.if %2 {
      %cst_94 = arith.constant 0.000000e+00 : f32
      %360 = vector.broadcast %cst_94 : f32 to vector<2x64xf32>
      %c0_95 = arith.constant 0 : index
      %c0_96 = arith.constant 0 : index
      %361 = vector.load %arg8[%c0_95, %c0_96] : memref<2x64xf32, #tpu.memory_space<vmem>>, vector<2x64xf32>
      tpu.vector_store %arg8[%c0_95, %c0_96], %360 {strides = array<i32>} : memref<2x64xf32, #tpu.memory_space<vmem>>, vector<2x64xf32>,
      %cst_97 = arith.constant 0.000000e+00 : f32
      %362 = vector.broadcast %cst_97 : f32 to vector<2x64xf32>
      %c0_98 = arith.constant 0 : index
      %c0_99 = arith.constant 0 : index
      %363 = vector.load %arg9[%c0_98, %c0_99] : memref<2x64xf32, #tpu.memory_space<vmem>>, vector<2x64xf32>
      tpu.vector_store %arg9[%c0_98, %c0_99], %362 {strides = array<i32>} : memref<2x64xf32, #tpu.memory_space<vmem>>, vector<2x64xf32>,
      %cst_100 = arith.constant 0.000000e+00 : f32
      %364 = vector.broadcast %cst_100 : f32 to vector<2x64xf32>
      %c0_101 = arith.constant 0 : index
      %c0_102 = arith.constant 0 : index
      %365 = vector.load %arg10[%c0_101, %c0_102] : memref<2x64xf32, #tpu.memory_space<vmem>>, vector<2x64xf32>
      tpu.vector_store %arg10[%c0_101, %c0_102], %364 {strides = array<i32>} : memref<2x64xf32, #tpu.memory_space<vmem>>, vector<2x64xf32>,
      %cst_103 = arith.constant 0.000000e+00 : f32
      %366 = vector.broadcast %cst_103 : f32 to vector<2x64xf32>
      %c0_104 = arith.constant 0 : index
      %c0_105 = arith.constant 0 : index
      %367 = vector.load %arg11[%c0_104, %c0_105] : memref<2x64xf32, #tpu.memory_space<vmem>>, vector<2x64xf32>
      tpu.vector_store %arg11[%c0_104, %c0_105], %366 {strides = array<i32>} : memref<2x64xf32, #tpu.memory_space<vmem>>, vector<2x64xf32>,
    } else {
    }
    %c0 = arith.constant 0 : index
    %c0_1 = arith.constant 0 : index
    %3 = vector.load %arg3[%c0, %c0_1] : memref<64x256xf32, #tpu.memory_space<vmem>>, vector<64x256xf32>
    %c0_2 = arith.constant 0 : index
    %c0_3 = arith.constant 0 : index
    %4 = vector.load %arg4[%c0_2, %c0_3] : memref<64x256xf32, #tpu.memory_space<vmem>>, vector<64x256xf32>
    %c0_4 = arith.constant 0 : index
    %c0_5 = arith.constant 0 : index
    %5 = vector.load %arg8[%c0_4, %c0_5] : memref<2x64xf32, #tpu.memory_space<vmem>>, vector<2x64xf32>
    %c0_6 = arith.constant 0 : index
    %c0_7 = arith.constant 0 : index
    %6 = vector.load %arg9[%c0_6, %c0_7] : memref<2x64xf32, #tpu.memory_space<vmem>>, vector<2x64xf32>
    %c0_8 = arith.constant 0 : index
    %c0_9 = arith.constant 0 : index
    %7 = vector.load %arg10[%c0_8, %c0_9] : memref<2x64xf32, #tpu.memory_space<vmem>>, vector<2x64xf32>
    %c0_10 = arith.constant 0 : index
    %c0_11 = arith.constant 0 : index
    %8 = vector.load %arg11[%c0_10, %c0_11] : memref<2x64xf32, #tpu.memory_space<vmem>>, vector<2x64xf32>
    %c0_i32_12 = arith.constant 0 : i32
    %cst = arith.constant dense<0.000000e+00> : vector<2x256xf32>
    %9 = tpu.matmul %5, %3, %cst {dimension_numbers = #tpu.dot_dimension_numbers<[1], [0], [0], [1], [0, 0, 1, 1], [], []>} : vector<2x64xf32>, vector<64x256xf32>, vector<2x256xf32> -> vector<2x256xf32>
    %cst_13 = arith.constant dense<0.000000e+00> : vector<2x256xf32>
    %10 = tpu.matmul %6, %4, %cst_13 {dimension_numbers = #tpu.dot_dimension_numbers<[1], [0], [0], [1], [0, 0, 1, 1], [], []>} : vector<2x64xf32>, vector<64x256xf32>, vector<2x256xf32> -> vector<2x256xf32>
    %11 = arith.index_cast %c0_i32_12 : i32 to index
    %c0_14 = arith.constant 0 : index
    %c0_15 = arith.constant 0 : index
    %12 = vector.load %arg1[%11, %c0_14, %c0_15] : memref<8x2x256xf32, #tpu.memory_space<vmem>>, vector<1x2x256xf32>
    %13 = vector.shape_cast %12 : vector<1x2x256xf32> to vector<2x256xf32>
    %14 = arith.addf %13, %9 : vector<2x256xf32>
    %c7_i32 = arith.constant 7 : i32
    %15 = arith.subi %c7_i32, %c0_i32_12 : i32
    %16 = arith.index_cast %15 : i32 to index
    %c0_16 = arith.constant 0 : index
    %c0_17 = arith.constant 0 : index
    %17 = vector.load %arg2[%16, %c0_16, %c0_17] : memref<8x2x256xf32, #tpu.memory_space<vmem>>, vector<1x2x256xf32>
    %18 = vector.shape_cast %17 : vector<1x2x256xf32> to vector<2x256xf32>
    %19 = arith.addf %18, %10 : vector<2x256xf32>
    %20 = vector.extract_strided_slice %14 {offsets = [0, 0], sizes = [2, 192], strides = [1, 1]} : vector<2x256xf32> to vector<2x192xf32>
    %21 = arith.negf %20 : vector<2x192xf32>
    %22 = math.exp %21 : vector<2x192xf32>
    %cst_18 = arith.constant 1.000000e+00 : f32
    %23 = vector.broadcast %cst_18 : f32 to vector<2x192xf32>
    %24 = arith.addf %23, %22 : vector<2x192xf32>
    %25 = arith.divf %23, %24 : vector<2x192xf32>
    %26 = vector.extract_strided_slice %19 {offsets = [0, 0], sizes = [2, 192], strides = [1, 1]} : vector<2x256xf32> to vector<2x192xf32>
    %27 = arith.negf %26 : vector<2x192xf32>
    %28 = math.exp %27 : vector<2x192xf32>
    %cst_19 = arith.constant 1.000000e+00 : f32
    %29 = vector.broadcast %cst_19 : f32 to vector<2x192xf32>
    %30 = arith.addf %29, %28 : vector<2x192xf32>
    %31 = arith.divf %29, %30 : vector<2x192xf32>
    %32 = vector.extract_strided_slice %14 {offsets = [0, 192], sizes = [2, 64], strides = [1, 1]} : vector<2x256xf32> to vector<2x64xf32>
    %33 = math.tanh %32 : vector<2x64xf32>
    %34 = vector.extract_strided_slice %19 {offsets = [0, 192], sizes = [2, 64], strides = [1, 1]} : vector<2x256xf32> to vector<2x64xf32>
    %35 = math.tanh %34 : vector<2x64xf32>
    %36 = vector.extract_strided_slice %25 {offsets = [0, 64], sizes = [2, 64], strides = [1, 1]} : vector<2x192xf32> to vector<2x64xf32>
    %37 = arith.mulf %36, %7 : vector<2x64xf32>
    %38 = vector.extract_strided_slice %25 {offsets = [0, 0], sizes = [2, 64], strides = [1, 1]} : vector<2x192xf32> to vector<2x64xf32>
    %39 = arith.mulf %38, %33 : vector<2x64xf32>
    %40 = arith.addf %37, %39 : vector<2x64xf32>
    %41 = vector.extract_strided_slice %31 {offsets = [0, 64], sizes = [2, 64], strides = [1, 1]} : vector<2x192xf32> to vector<2x64xf32>
    %42 = arith.mulf %41, %8 : vector<2x64xf32>
    %43 = vector.extract_strided_slice %31 {offsets = [0, 0], sizes = [2, 64], strides = [1, 1]} : vector<2x192xf32> to vector<2x64xf32>
    %44 = arith.mulf %43, %35 : vector<2x64xf32>
    %45 = arith.addf %42, %44 : vector<2x64xf32>
    %46 = vector.extract_strided_slice %25 {offsets = [0, 128], sizes = [2, 64], strides = [1, 1]} : vector<2x192xf32> to vector<2x64xf32>
    %47 = math.tanh %40 : vector<2x64xf32>
    %48 = arith.mulf %46, %47 : vector<2x64xf32>
    %49 = vector.extract_strided_slice %31 {offsets = [0, 128], sizes = [2, 64], strides = [1, 1]} : vector<2x192xf32> to vector<2x64xf32>
    %50 = math.tanh %45 : vector<2x64xf32>
    %51 = arith.mulf %49, %50 : vector<2x64xf32>
    %c1_i32 = arith.constant 1 : i32
    %cst_20 = arith.constant dense<0.000000e+00> : vector<2x256xf32>
    %52 = tpu.matmul %48, %3, %cst_20 {dimension_numbers = #tpu.dot_dimension_numbers<[1], [0], [0], [1], [0, 0, 1, 1], [], []>} : vector<2x64xf32>, vector<64x256xf32>, vector<2x256xf32> -> vector<2x256xf32>
    %cst_21 = arith.constant dense<0.000000e+00> : vector<2x256xf32>
    %53 = tpu.matmul %51, %4, %cst_21 {dimension_numbers = #tpu.dot_dimension_numbers<[1], [0], [0], [1], [0, 0, 1, 1], [], []>} : vector<2x64xf32>, vector<64x256xf32>, vector<2x256xf32> -> vector<2x256xf32>
    %54 = arith.index_cast %c1_i32 : i32 to index
    %c0_22 = arith.constant 0 : index
    %c0_23 = arith.constant 0 : index
    %55 = vector.load %arg1[%54, %c0_22, %c0_23] : memref<8x2x256xf32, #tpu.memory_space<vmem>>, vector<1x2x256xf32>
    %56 = vector.shape_cast %55 : vector<1x2x256xf32> to vector<2x256xf32>
    %57 = arith.addf %56, %52 : vector<2x256xf32>
    %c7_i32_24 = arith.constant 7 : i32
    %58 = arith.subi %c7_i32_24, %c1_i32 : i32
    %59 = arith.index_cast %58 : i32 to index
    %c0_25 = arith.constant 0 : index
    %c0_26 = arith.constant 0 : index
    %60 = vector.load %arg2[%59, %c0_25, %c0_26] : memref<8x2x256xf32, #tpu.memory_space<vmem>>, vector<1x2x256xf32>
    %61 = vector.shape_cast %60 : vector<1x2x256xf32> to vector<2x256xf32>
    %62 = arith.addf %61, %53 : vector<2x256xf32>
    %63 = vector.extract_strided_slice %57 {offsets = [0, 0], sizes = [2, 192], strides = [1, 1]} : vector<2x256xf32> to vector<2x192xf32>
    %64 = arith.negf %63 : vector<2x192xf32>
    %65 = math.exp %64 : vector<2x192xf32>
    %cst_27 = arith.constant 1.000000e+00 : f32
    %66 = vector.broadcast %cst_27 : f32 to vector<2x192xf32>
    %67 = arith.addf %66, %65 : vector<2x192xf32>
    %68 = arith.divf %66, %67 : vector<2x192xf32>
    %69 = vector.extract_strided_slice %62 {offsets = [0, 0], sizes = [2, 192], strides = [1, 1]} : vector<2x256xf32> to vector<2x192xf32>
    %70 = arith.negf %69 : vector<2x192xf32>
    %71 = math.exp %70 : vector<2x192xf32>
    %cst_28 = arith.constant 1.000000e+00 : f32
    %72 = vector.broadcast %cst_28 : f32 to vector<2x192xf32>
    %73 = arith.addf %72, %71 : vector<2x192xf32>
    %74 = arith.divf %72, %73 : vector<2x192xf32>
    %75 = vector.extract_strided_slice %57 {offsets = [0, 192], sizes = [2, 64], strides = [1, 1]} : vector<2x256xf32> to vector<2x64xf32>
    %76 = math.tanh %75 : vector<2x64xf32>
    %77 = vector.extract_strided_slice %62 {offsets = [0, 192], sizes = [2, 64], strides = [1, 1]} : vector<2x256xf32> to vector<2x64xf32>
    %78 = math.tanh %77 : vector<2x64xf32>
    %79 = vector.extract_strided_slice %68 {offsets = [0, 64], sizes = [2, 64], strides = [1, 1]} : vector<2x192xf32> to vector<2x64xf32>
    %80 = arith.mulf %79, %40 : vector<2x64xf32>
    %81 = vector.extract_strided_slice %68 {offsets = [0, 0], sizes = [2, 64], strides = [1, 1]} : vector<2x192xf32> to vector<2x64xf32>
    %82 = arith.mulf %81, %76 : vector<2x64xf32>
    %83 = arith.addf %80, %82 : vector<2x64xf32>
    %84 = vector.extract_strided_slice %74 {offsets = [0, 64], sizes = [2, 64], strides = [1, 1]} : vector<2x192xf32> to vector<2x64xf32>
    %85 = arith.mulf %84, %45 : vector<2x64xf32>
    %86 = vector.extract_strided_slice %74 {offsets = [0, 0], sizes = [2, 64], strides = [1, 1]} : vector<2x192xf32> to vector<2x64xf32>
    %87 = arith.mulf %86, %78 : vector<2x64xf32>
    %88 = arith.addf %85, %87 : vector<2x64xf32>
    %89 = vector.extract_strided_slice %68 {offsets = [0, 128], sizes = [2, 64], strides = [1, 1]} : vector<2x192xf32> to vector<2x64xf32>
    %90 = math.tanh %83 : vector<2x64xf32>
    %91 = arith.mulf %89, %90 : vector<2x64xf32>
    %92 = vector.extract_strided_slice %74 {offsets = [0, 128], sizes = [2, 64], strides = [1, 1]} : vector<2x192xf32> to vector<2x64xf32>
    %93 = math.tanh %88 : vector<2x64xf32>
    %94 = arith.mulf %92, %93 : vector<2x64xf32>
    %c2_i32 = arith.constant 2 : i32
    %cst_29 = arith.constant dense<0.000000e+00> : vector<2x256xf32>
    %95 = tpu.matmul %91, %3, %cst_29 {dimension_numbers = #tpu.dot_dimension_numbers<[1], [0], [0], [1], [0, 0, 1, 1], [], []>} : vector<2x64xf32>, vector<64x256xf32>, vector<2x256xf32> -> vector<2x256xf32>
    %cst_30 = arith.constant dense<0.000000e+00> : vector<2x256xf32>
    %96 = tpu.matmul %94, %4, %cst_30 {dimension_numbers = #tpu.dot_dimension_numbers<[1], [0], [0], [1], [0, 0, 1, 1], [], []>} : vector<2x64xf32>, vector<64x256xf32>, vector<2x256xf32> -> vector<2x256xf32>
    %97 = arith.index_cast %c2_i32 : i32 to index
    %c0_31 = arith.constant 0 : index
    %c0_32 = arith.constant 0 : index
    %98 = vector.load %arg1[%97, %c0_31, %c0_32] : memref<8x2x256xf32, #tpu.memory_space<vmem>>, vector<1x2x256xf32>
    %99 = vector.shape_cast %98 : vector<1x2x256xf32> to vector<2x256xf32>
    %100 = arith.addf %99, %95 : vector<2x256xf32>
    %c7_i32_33 = arith.constant 7 : i32
    %101 = arith.subi %c7_i32_33, %c2_i32 : i32
    %102 = arith.index_cast %101 : i32 to index
    %c0_34 = arith.constant 0 : index
    %c0_35 = arith.constant 0 : index
    %103 = vector.load %arg2[%102, %c0_34, %c0_35] : memref<8x2x256xf32, #tpu.memory_space<vmem>>, vector<1x2x256xf32>
    %104 = vector.shape_cast %103 : vector<1x2x256xf32> to vector<2x256xf32>
    %105 = arith.addf %104, %96 : vector<2x256xf32>
    %106 = vector.extract_strided_slice %100 {offsets = [0, 0], sizes = [2, 192], strides = [1, 1]} : vector<2x256xf32> to vector<2x192xf32>
    %107 = arith.negf %106 : vector<2x192xf32>
    %108 = math.exp %107 : vector<2x192xf32>
    %cst_36 = arith.constant 1.000000e+00 : f32
    %109 = vector.broadcast %cst_36 : f32 to vector<2x192xf32>
    %110 = arith.addf %109, %108 : vector<2x192xf32>
    %111 = arith.divf %109, %110 : vector<2x192xf32>
    %112 = vector.extract_strided_slice %105 {offsets = [0, 0], sizes = [2, 192], strides = [1, 1]} : vector<2x256xf32> to vector<2x192xf32>
    %113 = arith.negf %112 : vector<2x192xf32>
    %114 = math.exp %113 : vector<2x192xf32>
    %cst_37 = arith.constant 1.000000e+00 : f32
    %115 = vector.broadcast %cst_37 : f32 to vector<2x192xf32>
    %116 = arith.addf %115, %114 : vector<2x192xf32>
    %117 = arith.divf %115, %116 : vector<2x192xf32>
    %118 = vector.extract_strided_slice %100 {offsets = [0, 192], sizes = [2, 64], strides = [1, 1]} : vector<2x256xf32> to vector<2x64xf32>
    %119 = math.tanh %118 : vector<2x64xf32>
    %120 = vector.extract_strided_slice %105 {offsets = [0, 192], sizes = [2, 64], strides = [1, 1]} : vector<2x256xf32> to vector<2x64xf32>
    %121 = math.tanh %120 : vector<2x64xf32>
    %122 = vector.extract_strided_slice %111 {offsets = [0, 64], sizes = [2, 64], strides = [1, 1]} : vector<2x192xf32> to vector<2x64xf32>
    %123 = arith.mulf %122, %83 : vector<2x64xf32>
    %124 = vector.extract_strided_slice %111 {offsets = [0, 0], sizes = [2, 64], strides = [1, 1]} : vector<2x192xf32> to vector<2x64xf32>
    %125 = arith.mulf %124, %119 : vector<2x64xf32>
    %126 = arith.addf %123, %125 : vector<2x64xf32>
    %127 = vector.extract_strided_slice %117 {offsets = [0, 64], sizes = [2, 64], strides = [1, 1]} : vector<2x192xf32> to vector<2x64xf32>
    %128 = arith.mulf %127, %88 : vector<2x64xf32>
    %129 = vector.extract_strided_slice %117 {offsets = [0, 0], sizes = [2, 64], strides = [1, 1]} : vector<2x192xf32> to vector<2x64xf32>
    %130 = arith.mulf %129, %121 : vector<2x64xf32>
    %131 = arith.addf %128, %130 : vector<2x64xf32>
    %132 = vector.extract_strided_slice %111 {offsets = [0, 128], sizes = [2, 64], strides = [1, 1]} : vector<2x192xf32> to vector<2x64xf32>
    %133 = math.tanh %126 : vector<2x64xf32>
    %134 = arith.mulf %132, %133 : vector<2x64xf32>
    %135 = vector.extract_strided_slice %117 {offsets = [0, 128], sizes = [2, 64], strides = [1, 1]} : vector<2x192xf32> to vector<2x64xf32>
    %136 = math.tanh %131 : vector<2x64xf32>
    %137 = arith.mulf %135, %136 : vector<2x64xf32>
    %c3_i32 = arith.constant 3 : i32
    %cst_38 = arith.constant dense<0.000000e+00> : vector<2x256xf32>
    %138 = tpu.matmul %134, %3, %cst_38 {dimension_numbers = #tpu.dot_dimension_numbers<[1], [0], [0], [1], [0, 0, 1, 1], [], []>} : vector<2x64xf32>, vector<64x256xf32>, vector<2x256xf32> -> vector<2x256xf32>
    %cst_39 = arith.constant dense<0.000000e+00> : vector<2x256xf32>
    %139 = tpu.matmul %137, %4, %cst_39 {dimension_numbers = #tpu.dot_dimension_numbers<[1], [0], [0], [1], [0, 0, 1, 1], [], []>} : vector<2x64xf32>, vector<64x256xf32>, vector<2x256xf32> -> vector<2x256xf32>
    %140 = arith.index_cast %c3_i32 : i32 to index
    %c0_40 = arith.constant 0 : index
    %c0_41 = arith.constant 0 : index
    %141 = vector.load %arg1[%140, %c0_40, %c0_41] : memref<8x2x256xf32, #tpu.memory_space<vmem>>, vector<1x2x256xf32>
    %142 = vector.shape_cast %141 : vector<1x2x256xf32> to vector<2x256xf32>
    %143 = arith.addf %142, %138 : vector<2x256xf32>
    %c7_i32_42 = arith.constant 7 : i32
    %144 = arith.subi %c7_i32_42, %c3_i32 : i32
    %145 = arith.index_cast %144 : i32 to index
    %c0_43 = arith.constant 0 : index
    %c0_44 = arith.constant 0 : index
    %146 = vector.load %arg2[%145, %c0_43, %c0_44] : memref<8x2x256xf32, #tpu.memory_space<vmem>>, vector<1x2x256xf32>
    %147 = vector.shape_cast %146 : vector<1x2x256xf32> to vector<2x256xf32>
    %148 = arith.addf %147, %139 : vector<2x256xf32>
    %149 = vector.extract_strided_slice %143 {offsets = [0, 0], sizes = [2, 192], strides = [1, 1]} : vector<2x256xf32> to vector<2x192xf32>
    %150 = arith.negf %149 : vector<2x192xf32>
    %151 = math.exp %150 : vector<2x192xf32>
    %cst_45 = arith.constant 1.000000e+00 : f32
    %152 = vector.broadcast %cst_45 : f32 to vector<2x192xf32>
    %153 = arith.addf %152, %151 : vector<2x192xf32>
    %154 = arith.divf %152, %153 : vector<2x192xf32>
    %155 = vector.extract_strided_slice %148 {offsets = [0, 0], sizes = [2, 192], strides = [1, 1]} : vector<2x256xf32> to vector<2x192xf32>
    %156 = arith.negf %155 : vector<2x192xf32>
    %157 = math.exp %156 : vector<2x192xf32>
    %cst_46 = arith.constant 1.000000e+00 : f32
    %158 = vector.broadcast %cst_46 : f32 to vector<2x192xf32>
    %159 = arith.addf %158, %157 : vector<2x192xf32>
    %160 = arith.divf %158, %159 : vector<2x192xf32>
    %161 = vector.extract_strided_slice %143 {offsets = [0, 192], sizes = [2, 64], strides = [1, 1]} : vector<2x256xf32> to vector<2x64xf32>
    %162 = math.tanh %161 : vector<2x64xf32>
    %163 = vector.extract_strided_slice %148 {offsets = [0, 192], sizes = [2, 64], strides = [1, 1]} : vector<2x256xf32> to vector<2x64xf32>
    %164 = math.tanh %163 : vector<2x64xf32>
    %165 = vector.extract_strided_slice %154 {offsets = [0, 64], sizes = [2, 64], strides = [1, 1]} : vector<2x192xf32> to vector<2x64xf32>
    %166 = arith.mulf %165, %126 : vector<2x64xf32>
    %167 = vector.extract_strided_slice %154 {offsets = [0, 0], sizes = [2, 64], strides = [1, 1]} : vector<2x192xf32> to vector<2x64xf32>
    %168 = arith.mulf %167, %162 : vector<2x64xf32>
    %169 = arith.addf %166, %168 : vector<2x64xf32>
    %170 = vector.extract_strided_slice %160 {offsets = [0, 64], sizes = [2, 64], strides = [1, 1]} : vector<2x192xf32> to vector<2x64xf32>
    %171 = arith.mulf %170, %131 : vector<2x64xf32>
    %172 = vector.extract_strided_slice %160 {offsets = [0, 0], sizes = [2, 64], strides = [1, 1]} : vector<2x192xf32> to vector<2x64xf32>
    %173 = arith.mulf %172, %164 : vector<2x64xf32>
    %174 = arith.addf %171, %173 : vector<2x64xf32>
    %175 = vector.extract_strided_slice %154 {offsets = [0, 128], sizes = [2, 64], strides = [1, 1]} : vector<2x192xf32> to vector<2x64xf32>
    %176 = math.tanh %169 : vector<2x64xf32>
    %177 = arith.mulf %175, %176 : vector<2x64xf32>
    %178 = vector.extract_strided_slice %160 {offsets = [0, 128], sizes = [2, 64], strides = [1, 1]} : vector<2x192xf32> to vector<2x64xf32>
    %179 = math.tanh %174 : vector<2x64xf32>
    %180 = arith.mulf %178, %179 : vector<2x64xf32>
    %c4_i32 = arith.constant 4 : i32
    %cst_47 = arith.constant dense<0.000000e+00> : vector<2x256xf32>
    %181 = tpu.matmul %177, %3, %cst_47 {dimension_numbers = #tpu.dot_dimension_numbers<[1], [0], [0], [1], [0, 0, 1, 1], [], []>} : vector<2x64xf32>, vector<64x256xf32>, vector<2x256xf32> -> vector<2x256xf32>
    %cst_48 = arith.constant dense<0.000000e+00> : vector<2x256xf32>
    %182 = tpu.matmul %180, %4, %cst_48 {dimension_numbers = #tpu.dot_dimension_numbers<[1], [0], [0], [1], [0, 0, 1, 1], [], []>} : vector<2x64xf32>, vector<64x256xf32>, vector<2x256xf32> -> vector<2x256xf32>
    %183 = arith.index_cast %c4_i32 : i32 to index
    %c0_49 = arith.constant 0 : index
    %c0_50 = arith.constant 0 : index
    %184 = vector.load %arg1[%183, %c0_49, %c0_50] : memref<8x2x256xf32, #tpu.memory_space<vmem>>, vector<1x2x256xf32>
    %185 = vector.shape_cast %184 : vector<1x2x256xf32> to vector<2x256xf32>
    %186 = arith.addf %185, %181 : vector<2x256xf32>
    %c7_i32_51 = arith.constant 7 : i32
    %187 = arith.subi %c7_i32_51, %c4_i32 : i32
    %188 = arith.index_cast %187 : i32 to index
    %c0_52 = arith.constant 0 : index
    %c0_53 = arith.constant 0 : index
    %189 = vector.load %arg2[%188, %c0_52, %c0_53] : memref<8x2x256xf32, #tpu.memory_space<vmem>>, vector<1x2x256xf32>
    %190 = vector.shape_cast %189 : vector<1x2x256xf32> to vector<2x256xf32>
    %191 = arith.addf %190, %182 : vector<2x256xf32>
    %192 = vector.extract_strided_slice %186 {offsets = [0, 0], sizes = [2, 192], strides = [1, 1]} : vector<2x256xf32> to vector<2x192xf32>
    %193 = arith.negf %192 : vector<2x192xf32>
    %194 = math.exp %193 : vector<2x192xf32>
    %cst_54 = arith.constant 1.000000e+00 : f32
    %195 = vector.broadcast %cst_54 : f32 to vector<2x192xf32>
    %196 = arith.addf %195, %194 : vector<2x192xf32>
    %197 = arith.divf %195, %196 : vector<2x192xf32>
    %198 = vector.extract_strided_slice %191 {offsets = [0, 0], sizes = [2, 192], strides = [1, 1]} : vector<2x256xf32> to vector<2x192xf32>
    %199 = arith.negf %198 : vector<2x192xf32>
    %200 = math.exp %199 : vector<2x192xf32>
    %cst_55 = arith.constant 1.000000e+00 : f32
    %201 = vector.broadcast %cst_55 : f32 to vector<2x192xf32>
    %202 = arith.addf %201, %200 : vector<2x192xf32>
    %203 = arith.divf %201, %202 : vector<2x192xf32>
    %204 = vector.extract_strided_slice %186 {offsets = [0, 192], sizes = [2, 64], strides = [1, 1]} : vector<2x256xf32> to vector<2x64xf32>
    %205 = math.tanh %204 : vector<2x64xf32>
    %206 = vector.extract_strided_slice %191 {offsets = [0, 192], sizes = [2, 64], strides = [1, 1]} : vector<2x256xf32> to vector<2x64xf32>
    %207 = math.tanh %206 : vector<2x64xf32>
    %208 = vector.extract_strided_slice %197 {offsets = [0, 64], sizes = [2, 64], strides = [1, 1]} : vector<2x192xf32> to vector<2x64xf32>
    %209 = arith.mulf %208, %169 : vector<2x64xf32>
    %210 = vector.extract_strided_slice %197 {offsets = [0, 0], sizes = [2, 64], strides = [1, 1]} : vector<2x192xf32> to vector<2x64xf32>
    %211 = arith.mulf %210, %205 : vector<2x64xf32>
    %212 = arith.addf %209, %211 : vector<2x64xf32>
    %213 = vector.extract_strided_slice %203 {offsets = [0, 64], sizes = [2, 64], strides = [1, 1]} : vector<2x192xf32> to vector<2x64xf32>
    %214 = arith.mulf %213, %174 : vector<2x64xf32>
    %215 = vector.extract_strided_slice %203 {offsets = [0, 0], sizes = [2, 64], strides = [1, 1]} : vector<2x192xf32> to vector<2x64xf32>
    %216 = arith.mulf %215, %207 : vector<2x64xf32>
    %217 = arith.addf %214, %216 : vector<2x64xf32>
    %218 = vector.extract_strided_slice %197 {offsets = [0, 128], sizes = [2, 64], strides = [1, 1]} : vector<2x192xf32> to vector<2x64xf32>
    %219 = math.tanh %212 : vector<2x64xf32>
    %220 = arith.mulf %218, %219 : vector<2x64xf32>
    %221 = vector.extract_strided_slice %203 {offsets = [0, 128], sizes = [2, 64], strides = [1, 1]} : vector<2x192xf32> to vector<2x64xf32>
    %222 = math.tanh %217 : vector<2x64xf32>
    %223 = arith.mulf %221, %222 : vector<2x64xf32>
    %c5_i32 = arith.constant 5 : i32
    %cst_56 = arith.constant dense<0.000000e+00> : vector<2x256xf32>
    %224 = tpu.matmul %220, %3, %cst_56 {dimension_numbers = #tpu.dot_dimension_numbers<[1], [0], [0], [1], [0, 0, 1, 1], [], []>} : vector<2x64xf32>, vector<64x256xf32>, vector<2x256xf32> -> vector<2x256xf32>
    %cst_57 = arith.constant dense<0.000000e+00> : vector<2x256xf32>
    %225 = tpu.matmul %223, %4, %cst_57 {dimension_numbers = #tpu.dot_dimension_numbers<[1], [0], [0], [1], [0, 0, 1, 1], [], []>} : vector<2x64xf32>, vector<64x256xf32>, vector<2x256xf32> -> vector<2x256xf32>
    %226 = arith.index_cast %c5_i32 : i32 to index
    %c0_58 = arith.constant 0 : index
    %c0_59 = arith.constant 0 : index
    %227 = vector.load %arg1[%226, %c0_58, %c0_59] : memref<8x2x256xf32, #tpu.memory_space<vmem>>, vector<1x2x256xf32>
    %228 = vector.shape_cast %227 : vector<1x2x256xf32> to vector<2x256xf32>
    %229 = arith.addf %228, %224 : vector<2x256xf32>
    %c7_i32_60 = arith.constant 7 : i32
    %230 = arith.subi %c7_i32_60, %c5_i32 : i32
    %231 = arith.index_cast %230 : i32 to index
    %c0_61 = arith.constant 0 : index
    %c0_62 = arith.constant 0 : index
    %232 = vector.load %arg2[%231, %c0_61, %c0_62] : memref<8x2x256xf32, #tpu.memory_space<vmem>>, vector<1x2x256xf32>
    %233 = vector.shape_cast %232 : vector<1x2x256xf32> to vector<2x256xf32>
    %234 = arith.addf %233, %225 : vector<2x256xf32>
    %235 = vector.extract_strided_slice %229 {offsets = [0, 0], sizes = [2, 192], strides = [1, 1]} : vector<2x256xf32> to vector<2x192xf32>
    %236 = arith.negf %235 : vector<2x192xf32>
    %237 = math.exp %236 : vector<2x192xf32>
    %cst_63 = arith.constant 1.000000e+00 : f32
    %238 = vector.broadcast %cst_63 : f32 to vector<2x192xf32>
    %239 = arith.addf %238, %237 : vector<2x192xf32>
    %240 = arith.divf %238, %239 : vector<2x192xf32>
    %241 = vector.extract_strided_slice %234 {offsets = [0, 0], sizes = [2, 192], strides = [1, 1]} : vector<2x256xf32> to vector<2x192xf32>
    %242 = arith.negf %241 : vector<2x192xf32>
    %243 = math.exp %242 : vector<2x192xf32>
    %cst_64 = arith.constant 1.000000e+00 : f32
    %244 = vector.broadcast %cst_64 : f32 to vector<2x192xf32>
    %245 = arith.addf %244, %243 : vector<2x192xf32>
    %246 = arith.divf %244, %245 : vector<2x192xf32>
    %247 = vector.extract_strided_slice %229 {offsets = [0, 192], sizes = [2, 64], strides = [1, 1]} : vector<2x256xf32> to vector<2x64xf32>
    %248 = math.tanh %247 : vector<2x64xf32>
    %249 = vector.extract_strided_slice %234 {offsets = [0, 192], sizes = [2, 64], strides = [1, 1]} : vector<2x256xf32> to vector<2x64xf32>
    %250 = math.tanh %249 : vector<2x64xf32>
    %251 = vector.extract_strided_slice %240 {offsets = [0, 64], sizes = [2, 64], strides = [1, 1]} : vector<2x192xf32> to vector<2x64xf32>
    %252 = arith.mulf %251, %212 : vector<2x64xf32>
    %253 = vector.extract_strided_slice %240 {offsets = [0, 0], sizes = [2, 64], strides = [1, 1]} : vector<2x192xf32> to vector<2x64xf32>
    %254 = arith.mulf %253, %248 : vector<2x64xf32>
    %255 = arith.addf %252, %254 : vector<2x64xf32>
    %256 = vector.extract_strided_slice %246 {offsets = [0, 64], sizes = [2, 64], strides = [1, 1]} : vector<2x192xf32> to vector<2x64xf32>
    %257 = arith.mulf %256, %217 : vector<2x64xf32>
    %258 = vector.extract_strided_slice %246 {offsets = [0, 0], sizes = [2, 64], strides = [1, 1]} : vector<2x192xf32> to vector<2x64xf32>
    %259 = arith.mulf %258, %250 : vector<2x64xf32>
    %260 = arith.addf %257, %259 : vector<2x64xf32>
    %261 = vector.extract_strided_slice %240 {offsets = [0, 128], sizes = [2, 64], strides = [1, 1]} : vector<2x192xf32> to vector<2x64xf32>
    %262 = math.tanh %255 : vector<2x64xf32>
    %263 = arith.mulf %261, %262 : vector<2x64xf32>
    %264 = vector.extract_strided_slice %246 {offsets = [0, 128], sizes = [2, 64], strides = [1, 1]} : vector<2x192xf32> to vector<2x64xf32>
    %265 = math.tanh %260 : vector<2x64xf32>
    %266 = arith.mulf %264, %265 : vector<2x64xf32>
    %c6_i32 = arith.constant 6 : i32
    %cst_65 = arith.constant dense<0.000000e+00> : vector<2x256xf32>
    %267 = tpu.matmul %263, %3, %cst_65 {dimension_numbers = #tpu.dot_dimension_numbers<[1], [0], [0], [1], [0, 0, 1, 1], [], []>} : vector<2x64xf32>, vector<64x256xf32>, vector<2x256xf32> -> vector<2x256xf32>
    %cst_66 = arith.constant dense<0.000000e+00> : vector<2x256xf32>
    %268 = tpu.matmul %266, %4, %cst_66 {dimension_numbers = #tpu.dot_dimension_numbers<[1], [0], [0], [1], [0, 0, 1, 1], [], []>} : vector<2x64xf32>, vector<64x256xf32>, vector<2x256xf32> -> vector<2x256xf32>
    %269 = arith.index_cast %c6_i32 : i32 to index
    %c0_67 = arith.constant 0 : index
    %c0_68 = arith.constant 0 : index
    %270 = vector.load %arg1[%269, %c0_67, %c0_68] : memref<8x2x256xf32, #tpu.memory_space<vmem>>, vector<1x2x256xf32>
    %271 = vector.shape_cast %270 : vector<1x2x256xf32> to vector<2x256xf32>
    %272 = arith.addf %271, %267 : vector<2x256xf32>
    %c7_i32_69 = arith.constant 7 : i32
    %273 = arith.subi %c7_i32_69, %c6_i32 : i32
    %274 = arith.index_cast %273 : i32 to index
    %c0_70 = arith.constant 0 : index
    %c0_71 = arith.constant 0 : index
    %275 = vector.load %arg2[%274, %c0_70, %c0_71] : memref<8x2x256xf32, #tpu.memory_space<vmem>>, vector<1x2x256xf32>
    %276 = vector.shape_cast %275 : vector<1x2x256xf32> to vector<2x256xf32>
    %277 = arith.addf %276, %268 : vector<2x256xf32>
    %278 = vector.extract_strided_slice %272 {offsets = [0, 0], sizes = [2, 192], strides = [1, 1]} : vector<2x256xf32> to vector<2x192xf32>
    %279 = arith.negf %278 : vector<2x192xf32>
    %280 = math.exp %279 : vector<2x192xf32>
    %cst_72 = arith.constant 1.000000e+00 : f32
    %281 = vector.broadcast %cst_72 : f32 to vector<2x192xf32>
    %282 = arith.addf %281, %280 : vector<2x192xf32>
    %283 = arith.divf %281, %282 : vector<2x192xf32>
    %284 = vector.extract_strided_slice %277 {offsets = [0, 0], sizes = [2, 192], strides = [1, 1]} : vector<2x256xf32> to vector<2x192xf32>
    %285 = arith.negf %284 : vector<2x192xf32>
    %286 = math.exp %285 : vector<2x192xf32>
    %cst_73 = arith.constant 1.000000e+00 : f32
    %287 = vector.broadcast %cst_73 : f32 to vector<2x192xf32>
    %288 = arith.addf %287, %286 : vector<2x192xf32>
    %289 = arith.divf %287, %288 : vector<2x192xf32>
    %290 = vector.extract_strided_slice %272 {offsets = [0, 192], sizes = [2, 64], strides = [1, 1]} : vector<2x256xf32> to vector<2x64xf32>
    %291 = math.tanh %290 : vector<2x64xf32>
    %292 = vector.extract_strided_slice %277 {offsets = [0, 192], sizes = [2, 64], strides = [1, 1]} : vector<2x256xf32> to vector<2x64xf32>
    %293 = math.tanh %292 : vector<2x64xf32>
    %294 = vector.extract_strided_slice %283 {offsets = [0, 64], sizes = [2, 64], strides = [1, 1]} : vector<2x192xf32> to vector<2x64xf32>
    %295 = arith.mulf %294, %255 : vector<2x64xf32>
    %296 = vector.extract_strided_slice %283 {offsets = [0, 0], sizes = [2, 64], strides = [1, 1]} : vector<2x192xf32> to vector<2x64xf32>
    %297 = arith.mulf %296, %291 : vector<2x64xf32>
    %298 = arith.addf %295, %297 : vector<2x64xf32>
    %299 = vector.extract_strided_slice %289 {offsets = [0, 64], sizes = [2, 64], strides = [1, 1]} : vector<2x192xf32> to vector<2x64xf32>
    %300 = arith.mulf %299, %260 : vector<2x64xf32>
    %301 = vector.extract_strided_slice %289 {offsets = [0, 0], sizes = [2, 64], strides = [1, 1]} : vector<2x192xf32> to vector<2x64xf32>
    %302 = arith.mulf %301, %293 : vector<2x64xf32>
    %303 = arith.addf %300, %302 : vector<2x64xf32>
    %304 = vector.extract_strided_slice %283 {offsets = [0, 128], sizes = [2, 64], strides = [1, 1]} : vector<2x192xf32> to vector<2x64xf32>
    %305 = math.tanh %298 : vector<2x64xf32>
    %306 = arith.mulf %304, %305 : vector<2x64xf32>
    %307 = vector.extract_strided_slice %289 {offsets = [0, 128], sizes = [2, 64], strides = [1, 1]} : vector<2x192xf32> to vector<2x64xf32>
    %308 = math.tanh %303 : vector<2x64xf32>
    %309 = arith.mulf %307, %308 : vector<2x64xf32>
    %c7_i32_74 = arith.constant 7 : i32
    %cst_75 = arith.constant dense<0.000000e+00> : vector<2x256xf32>
    %310 = tpu.matmul %306, %3, %cst_75 {dimension_numbers = #tpu.dot_dimension_numbers<[1], [0], [0], [1], [0, 0, 1, 1], [], []>} : vector<2x64xf32>, vector<64x256xf32>, vector<2x256xf32> -> vector<2x256xf32>
    %cst_76 = arith.constant dense<0.000000e+00> : vector<2x256xf32>
    %311 = tpu.matmul %309, %4, %cst_76 {dimension_numbers = #tpu.dot_dimension_numbers<[1], [0], [0], [1], [0, 0, 1, 1], [], []>} : vector<2x64xf32>, vector<64x256xf32>, vector<2x256xf32> -> vector<2x256xf32>
    %312 = arith.index_cast %c7_i32_74 : i32 to index
    %c0_77 = arith.constant 0 : index
    %c0_78 = arith.constant 0 : index
    %313 = vector.load %arg1[%312, %c0_77, %c0_78] : memref<8x2x256xf32, #tpu.memory_space<vmem>>, vector<1x2x256xf32>
    %314 = vector.shape_cast %313 : vector<1x2x256xf32> to vector<2x256xf32>
    %315 = arith.addf %314, %310 : vector<2x256xf32>
    %c7_i32_79 = arith.constant 7 : i32
    %316 = arith.subi %c7_i32_79, %c7_i32_74 : i32
    %317 = arith.index_cast %316 : i32 to index
    %c0_80 = arith.constant 0 : index
    %c0_81 = arith.constant 0 : index
    %318 = vector.load %arg2[%317, %c0_80, %c0_81] : memref<8x2x256xf32, #tpu.memory_space<vmem>>, vector<1x2x256xf32>
    %319 = vector.shape_cast %318 : vector<1x2x256xf32> to vector<2x256xf32>
    %320 = arith.addf %319, %311 : vector<2x256xf32>
    %321 = vector.extract_strided_slice %315 {offsets = [0, 0], sizes = [2, 192], strides = [1, 1]} : vector<2x256xf32> to vector<2x192xf32>
    %322 = arith.negf %321 : vector<2x192xf32>
    %323 = math.exp %322 : vector<2x192xf32>
    %cst_82 = arith.constant 1.000000e+00 : f32
    %324 = vector.broadcast %cst_82 : f32 to vector<2x192xf32>
    %325 = arith.addf %324, %323 : vector<2x192xf32>
    %326 = arith.divf %324, %325 : vector<2x192xf32>
    %327 = vector.extract_strided_slice %320 {offsets = [0, 0], sizes = [2, 192], strides = [1, 1]} : vector<2x256xf32> to vector<2x192xf32>
    %328 = arith.negf %327 : vector<2x192xf32>
    %329 = math.exp %328 : vector<2x192xf32>
    %cst_83 = arith.constant 1.000000e+00 : f32
    %330 = vector.broadcast %cst_83 : f32 to vector<2x192xf32>
    %331 = arith.addf %330, %329 : vector<2x192xf32>
    %332 = arith.divf %330, %331 : vector<2x192xf32>
    %333 = vector.extract_strided_slice %315 {offsets = [0, 192], sizes = [2, 64], strides = [1, 1]} : vector<2x256xf32> to vector<2x64xf32>
    %334 = math.tanh %333 : vector<2x64xf32>
    %335 = vector.extract_strided_slice %320 {offsets = [0, 192], sizes = [2, 64], strides = [1, 1]} : vector<2x256xf32> to vector<2x64xf32>
    %336 = math.tanh %335 : vector<2x64xf32>
    %337 = vector.extract_strided_slice %326 {offsets = [0, 64], sizes = [2, 64], strides = [1, 1]} : vector<2x192xf32> to vector<2x64xf32>
    %338 = arith.mulf %337, %298 : vector<2x64xf32>
    %339 = vector.extract_strided_slice %326 {offsets = [0, 0], sizes = [2, 64], strides = [1, 1]} : vector<2x192xf32> to vector<2x64xf32>
    %340 = arith.mulf %339, %334 : vector<2x64xf32>
    %341 = arith.addf %338, %340 : vector<2x64xf32>
    %342 = vector.extract_strided_slice %332 {offsets = [0, 64], sizes = [2, 64], strides = [1, 1]} : vector<2x192xf32> to vector<2x64xf32>
    %343 = arith.mulf %342, %303 : vector<2x64xf32>
    %344 = vector.extract_strided_slice %332 {offsets = [0, 0], sizes = [2, 64], strides = [1, 1]} : vector<2x192xf32> to vector<2x64xf32>
    %345 = arith.mulf %344, %336 : vector<2x64xf32>
    %346 = arith.addf %343, %345 : vector<2x64xf32>
    %347 = vector.extract_strided_slice %326 {offsets = [0, 128], sizes = [2, 64], strides = [1, 1]} : vector<2x192xf32> to vector<2x64xf32>
    %348 = math.tanh %341 : vector<2x64xf32>
    %349 = arith.mulf %347, %348 : vector<2x64xf32>
    %350 = vector.extract_strided_slice %332 {offsets = [0, 128], sizes = [2, 64], strides = [1, 1]} : vector<2x192xf32> to vector<2x64xf32>
    %351 = math.tanh %346 : vector<2x64xf32>
    %352 = arith.mulf %350, %351 : vector<2x64xf32>
    %c8_i32 = arith.constant 8 : i32
    %c0_84 = arith.constant 0 : index
    %c0_85 = arith.constant 0 : index
    %353 = vector.load %arg8[%c0_84, %c0_85] : memref<2x64xf32, #tpu.memory_space<vmem>>, vector<2x64xf32>
    tpu.vector_store %arg8[%c0_84, %c0_85], %349 {strides = array<i32>} : memref<2x64xf32, #tpu.memory_space<vmem>>, vector<2x64xf32>,
    %c0_86 = arith.constant 0 : index
    %c0_87 = arith.constant 0 : index
    %354 = vector.load %arg9[%c0_86, %c0_87] : memref<2x64xf32, #tpu.memory_space<vmem>>, vector<2x64xf32>
    tpu.vector_store %arg9[%c0_86, %c0_87], %352 {strides = array<i32>} : memref<2x64xf32, #tpu.memory_space<vmem>>, vector<2x64xf32>,
    %c0_88 = arith.constant 0 : index
    %c0_89 = arith.constant 0 : index
    %355 = vector.load %arg10[%c0_88, %c0_89] : memref<2x64xf32, #tpu.memory_space<vmem>>, vector<2x64xf32>
    tpu.vector_store %arg10[%c0_88, %c0_89], %341 {strides = array<i32>} : memref<2x64xf32, #tpu.memory_space<vmem>>, vector<2x64xf32>,
    %c0_90 = arith.constant 0 : index
    %c0_91 = arith.constant 0 : index
    %356 = vector.load %arg11[%c0_90, %c0_91] : memref<2x64xf32, #tpu.memory_space<vmem>>, vector<2x64xf32>
    tpu.vector_store %arg11[%c0_90, %c0_91], %346 {strides = array<i32>} : memref<2x64xf32, #tpu.memory_space<vmem>>, vector<2x64xf32>,
    %c0_i32_92 = arith.constant 0 : i32
    %357 = arith.cmpi eq, %arg0, %c0_i32_92 : i32
    %358 = arith.extui %357 : i1 to i32
    %c0_i32_93 = arith.constant 0 : i32
    %359 = arith.cmpi ne, %358, %c0_i32_93 : i32
    scf.if %359 {
      %360 = arith.addf %349, %352 : vector<2x64xf32>
      %c0_94 = arith.constant 0 : index
      %c0_95 = arith.constant 0 : index
      %361 = vector.load %arg5[%c0_94, %c0_95] : memref<64x2xf32, #tpu.memory_space<vmem>>, vector<64x2xf32>
      %cst_96 = arith.constant dense<0.000000e+00> : vector<2x2xf32>
      %362 = tpu.matmul %360, %361, %cst_96 {dimension_numbers = #tpu.dot_dimension_numbers<[1], [0], [0], [1], [0, 0, 1, 1], [], []>} : vector<2x64xf32>, vector<64x2xf32>, vector<2x2xf32> -> vector<2x2xf32>
      %c0_97 = arith.constant 0 : index
      %c0_98 = arith.constant 0 : index
      %363 = vector.load %arg6[%c0_97, %c0_98] : memref<1x2xf32, #tpu.memory_space<vmem>>, vector<1x2xf32>
      %364 = vector.broadcast %363 : vector<1x2xf32> to vector<2x2xf32>
      %365 = arith.addf %362, %364 : vector<2x2xf32>
      %cst_99 = arith.constant dense<0xFF800000> : vector<2xf32>
      %366 = vector.multi_reduction <maximumf>, %365, %cst_99 [1] : vector<2x2xf32> to vector<2xf32>
      %367 = vector.shape_cast %366 : vector<2xf32> to vector<2x1xf32>
      %368 = vector.broadcast %367 : vector<2x1xf32> to vector<2x2xf32>
      %369 = arith.subf %365, %368 : vector<2x2xf32>
      %370 = math.exp %369 : vector<2x2xf32>
      %cst_100 = arith.constant dense<0.000000e+00> : vector<2xf32>
      %371 = vector.multi_reduction <add>, %370, %cst_100 [1] : vector<2x2xf32> to vector<2xf32>
      %372 = vector.shape_cast %371 : vector<2xf32> to vector<2x1xf32>
      %373 = vector.broadcast %372 : vector<2x1xf32> to vector<2x2xf32>
      %374 = arith.divf %370, %373 : vector<2x2xf32>
      %c0_101 = arith.constant 0 : index
      %c0_102 = arith.constant 0 : index
      %375 = vector.load %arg7[%c0_101, %c0_102] : memref<2x2xf32, #tpu.memory_space<vmem>>, vector<2x2xf32>
      tpu.vector_store %arg7[%c0_101, %c0_102], %374 {strides = array<i32>} : memref<2x2xf32, #tpu.memory_space<vmem>>, vector<2x2xf32>,
    } else {
    }
    return
  }
  func.func @transform_0(%arg0: i32) -> (i32, i32, i32) {
    %c0_i32 = arith.constant 0 : i32
    %c0_i32_0 = arith.constant 0 : i32
    %c0_i32_1 = arith.constant 0 : i32
    return %arg0, %c0_i32, %c0_i32_0 : i32, i32, i32
  }
  func.func @transform_1(%arg0: i32) -> (i32, i32, i32) {
    %c0_i32 = arith.constant 0 : i32
    %0 = arith.subi %c0_i32, %arg0 : i32
    %c0_i32_0 = arith.constant 0 : i32
    %c1_i32 = arith.constant 1 : i32
    %c0_i32_1 = arith.constant 0 : i32
    return %0, %c0_i32_0, %c1_i32 : i32, i32, i32
  }
  func.func @transform_2(%arg0: i32) -> (i32, i32) {
    %c0_i32 = arith.constant 0 : i32
    %c0_i32_0 = arith.constant 0 : i32
    %c0_i32_1 = arith.constant 0 : i32
    return %c0_i32, %c0_i32_0 : i32, i32
  }
  func.func @transform_3(%arg0: i32) -> (i32, i32) {
    %c0_i32 = arith.constant 0 : i32
    %c0_i32_0 = arith.constant 0 : i32
    %c0_i32_1 = arith.constant 0 : i32
    return %c0_i32, %c0_i32_0 : i32, i32
  }
  func.func @transform_4(%arg0: i32) -> (i32, i32) {
    %c0_i32 = arith.constant 0 : i32
    %c0_i32_0 = arith.constant 0 : i32
    %c0_i32_1 = arith.constant 0 : i32
    return %c0_i32, %c0_i32_0 : i32, i32
  }
  func.func @transform_5(%arg0: i32) -> (i32, i32) {
    %c0_i32 = arith.constant 0 : i32
    %c0_i32_0 = arith.constant 0 : i32
    %c0_i32_1 = arith.constant 0 : i32
    return %c0_i32, %c0_i32_0 : i32, i32
  }
  func.func @transform_6(%arg0: i32) -> (i32, i32) {
    %c0_i32 = arith.constant 0 : i32
    %c0_i32_0 = arith.constant 0 : i32
    %c0_i32_1 = arith.constant 0 : i32
    return %c0_i32, %c0_i32_0 : i32, i32
  }
}

</mosaic_0001>

<llo_original>
// kernel: anomaly_clip_lstm3_forward.2
$region0: #{anomaly_clip_lstm3_forward.2}
  #allocation0 [shape = 'u32[]', space=smem, size = 0x4, offset = 0x4, fixed_abs, tag = 'smem constant byte address 0x4 - core index']
  #allocation1 [shape = 'u32[144,128]{1,0:T(1,128)}', space=vmem, size = 0x12000, scoped, tag = 'internal scratch']
  %s0 = inlined_call_operand.hbm [shape: f32[2,8,512], index: 0, kind: input, shape index: {}]
  %s1 = inlined_call_operand.hbm [shape: f32[512,512], index: 1, kind: input, shape index: {}]
  %s2 = inlined_call_operand.vmem [shape: f32[1,512], index: 2, kind: input, shape index: {}]
  %s3 = inlined_call_operand.vmem [shape: f32[8,2,512], index: 3, kind: output, shape index: {}]
  %s4 = sld [smem:[#allocation0]]
  $region90: #{anomaly_clip_lstm3_forward.2} parent=0
    _
  %s6 = ssub.s32 1, %s4
  %s7 = scalar_select 0, %s6, %s4
  $region1: #{anomaly_clip_lstm3_forward.2} parent=0
    #allocation2 [shape = 'u8[32768]{0}', space=vmem, size = 0x8000, scoped, tag = 'input window, operand 0, single buffered']
    #allocation3 [shape = 's32[2]{0}', space=sflag, size = 0x8, scoped, tag = 'scoped memory for anomaly_clip_lstm3_forward.2']
    #allocation4 [shape = 'u8[1048576]{0}', space=vmem, size = 0x100000, scoped, tag = 'input window, operand 1']
    #allocation5 [shape = 's32[2]{0}', space=sflag, size = 0x8, scoped, tag = 'scoped memory for anomaly_clip_lstm3_forward.2']
    #allocation6 [shape = 'u8[32768]{0}', space=vmem, size = 0x8000, scoped, tag = 'output window, operand 0']
    %8 = vsyncpa [#allocation3], 0
    %9 = vsyncpa [#allocation5], 0
    %s10 = scalar_lea.sflag [#allocation5], 1
    %11 = vsyncpa %s10, 0
    loop: start=0, step=1, limit=4
    $region2: #{anomaly_clip_lstm3_forward.2} parent=1 // loop_pre_header
      _
    $region3: #{anomaly_clip_lstm3_forward.2} parent=1 // loop_header
      %s13 = sphi 0, %s17
      %p14 = scmp.ge.s32.totalorder %s13, 4
      %s20 = sphi 0, %s32
      %s21 = sphi 0, %s28
      %s22 = sphi 0, %s20
      %s23 = sphi 0, %s21
      %s24 = sphi 0, %s22
      %s25 = sphi 0, %s23
      %s35 = sphi 0, %s37
      %s38 = sphi 0, %s35
      %s39 = sphi 0, %s38
      %s55 = sphi 0, %s39
      %s61 = sphi 0, %s63
      %s64 = sphi 0, %s61
      %s65 = sphi 0, %s64
      %s81 = sphi 0, %s65
      %s87 = sphi 0, %s89
      %s90 = sphi 0, %s87
      %s91 = sphi 0, %s90
      %s107 = sphi 0, %s91
      %s115 = sphi 0, %s117
      %s118 = sphi 0, %s115
      %s119 = sphi 0, %s118
      %s135 = sphi 0, %s119
    $region4: #{anomaly_clip_lstm3_forward.2} parent=1 // loop_header_branch
      %16 = sbr.rel (%p14) target = $region8
    $region5: #{anomaly_clip_lstm3_forward.2} parent=1 // loop_body
      %s18 = ssub.s32 %s13, 1
      %s19 = ssub.s32 %s13, 2
      %s26 = sadd.s32 1, %s21
      %p27 = scmp.ge.s32.totalorder %s26, 2
      %s28 = scalar_select %p27, 0, %s26
      %s29 = sadd.s32 1, %s20
      %s30 = scalar_select %p27, %s29, %s20
      %p31 = scmp.ge.s32.totalorder %s30, 1
      %s32 = scalar_select %p31, 0, %s30
      %s33 = ssub.s32 %s20, %s32
      %p34 = scmp.eq.s32.totalorder %s33, 0
      %s36 = sadd.s32 %s35, 1
      %s37 = scalar_select %p34, %s35, %s36
      %p40 = pneg %p34
      %p41 = scmp.eq.s32.totalorder %s13, 1
      %p42 = por %p40, %p41
      %p43 = scmp.ne.s32.totalorder %s35, %s38
      %p44 = scmp.eq.s32.totalorder %s13, 0
      %p45 = por %p43, %p44
      %p46 = scmp.ne.s32.totalorder %s35, %s38
      %p47 = scmp.eq.s32.totalorder %s18, 1
      %p48 = por %p46, %p47
      %p49 = scmp.ne.s32.totalorder %s38, %s39
      %p50 = scmp.eq.s32.totalorder %s18, 0
      %p51 = por %p49, %p50
      %p52 = scmp.ne.s32.totalorder %s38, %s39
      %p53 = scmp.eq.s32.totalorder %s19, 1
      %p54 = por %p52, %p53
      %p56 = scmp.ne.s32.totalorder %s39, %s55
      %p57 = scmp.eq.s32.totalorder %s19, 0
      %p58 = por %p56, %p57
      %s59 = ssub.s32 %s21, %s28
      %p60 = scmp.eq.s32.totalorder %s59, 0
      %s62 = sadd.s32 %s61, 1
      %s63 = scalar_select %p60, %s61, %s62
      %p66 = pneg %p60
      %p67 = scmp.eq.s32.totalorder %s13, 1
      %p68 = por %p66, %p67
      %p69 = scmp.ne.s32.totalorder %s61, %s64
      %p70 = scmp.eq.s32.totalorder %s13, 0
      %p71 = por %p69, %p70
      %p72 = scmp.ne.s32.totalorder %s61, %s64
      %p73 = scmp.eq.s32.totalorder %s18, 1
      %p74 = por %p72, %p73
      %p75 = scmp.ne.s32.totalorder %s64, %s65
      %p76 = scmp.eq.s32.totalorder %s18, 0
      %p77 = por %p75, %p76
      %p78 = scmp.ne.s32.totalorder %s64, %s65
      %p79 = scmp.eq.s32.totalorder %s19, 1
      %p80 = por %p78, %p79
      %p82 = scmp.ne.s32.totalorder %s65, %s81
      %p83 = scmp.eq.s32.totalorder %s19, 0
      %p84 = por %p82, %p83
      %s85 = ssub.s32 %s21, %s28
      %p86 = scmp.eq.s32.totalorder %s85, 0
      %s88 = sadd.s32 %s87, 1
      %s89 = scalar_select %p86, %s87, %s88
      %p92 = pneg %p86
      %p93 = scmp.eq.s32.totalorder %s13, 1
      %p94 = por %p92, %p93
      %p95 = scmp.ne.s32.totalorder %s87, %s90
      %p96 = scmp.eq.s32.totalorder %s13, 0
      %p97 = por %p95, %p96
      %p98 = scmp.ne.s32.totalorder %s87, %s90
      %p99 = scmp.eq.s32.totalorder %s18, 1
      %p100 = por %p98, %p99
      %p101 = scmp.ne.s32.totalorder %s90, %s91
      %p102 = scmp.eq.s32.totalorder %s18, 0
      %p103 = por %p101, %p102
      %p104 = scmp.ne.s32.totalorder %s90, %s91
      %p105 = scmp.eq.s32.totalorder %s19, 1
      %p106 = por %p104, %p105
      %p108 = scmp.ne.s32.totalorder %s91, %s107
      %p109 = scmp.eq.s32.totalorder %s19, 0
      %p110 = por %p108, %p109
      %s111 = ssub.s32 %s20, %s32
      %s112 = ssub.s32 %s21, %s28
      %s113 = sor.u32 %s111, %s112
      %p114 = scmp.eq.s32.totalorder %s113, 0
      %s116 = sadd.s32 %s115, 1
      %s117 = scalar_select %p114, %s115, %s116
      %p120 = pneg %p114
      %p121 = scmp.eq.s32.totalorder %s13, 1
      %p122 = por %p120, %p121
      %p123 = scmp.ne.s32.totalorder %s115, %s118
      %p124 = scmp.eq.s32.totalorder %s13, 0
      %p125 = por %p123, %p124
      %p126 = scmp.ne.s32.totalorder %s115, %s118
      %p127 = scmp.eq.s32.totalorder %s18, 1
      %p128 = por %p126, %p127
      %p129 = scmp.ne.s32.totalorder %s118, %s119
      %p130 = scmp.eq.s32.totalorder %s18, 0
      %p131 = por %p129, %p130
      %p132 = scmp.ne.s32.totalorder %s118, %s119
      %p133 = scmp.eq.s32.totalorder %s19, 1
      %p134 = por %p132, %p133
      %p136 = scmp.ne.s32.totalorder %s119, %s135
      %p137 = scmp.eq.s32.totalorder %s19, 0
      %p138 = por %p136, %p137
      %p139 = scmp.le.s32.totalorder 1, %s13
      %p140 = scmp.lt.s32.totalorder %s13, 3
      %p141 = pnand %p139, %p140
      %p142 = pneg %p141
      // Predicated region
      $region9: #{anomaly_clip_lstm3_forward.2} parent=5 // pred_check
        _
      $region10: #{anomaly_clip_lstm3_forward.2} parent=5 // pred_check_branch
        %144 = sbr.rel (%p141) target = $region12
      $region11: #{anomaly_clip_lstm3_forward.2} parent=5 // pred_region
        %s145 = ssub.s32 %s13, 1
        // Predicated region
        $region13: #{anomaly_clip_lstm3_forward.2} parent=11 // pred_check
          %p146 = pneg %p51
        $region14: #{anomaly_clip_lstm3_forward.2} parent=11 // pred_check_branch
          %148 = sbr.rel (%p146) target = $region16
        $region15: #{anomaly_clip_lstm3_forward.2} parent=11 // pred_region
          %s150 = ssub.s32 1024, 1024
          %151 = vsyncadd [#allocation3], %s150
          %s152 = smul.addr %s22, 4
          %s153 = smul.addr %s152, 128
          %s154 = scalar_lea.hbm %s0, %s153
          %s155 = sshll.u32 [#allocation2], 4
          %s156 = int_to_ptr.vmem [resolvable:$true] %s155
          %161 = dma.hbm_to_vmem [thread:$0]  %s154, 1024, %s156, [#allocation3], 512, 512, 32
        $region16: #{anomaly_clip_lstm3_forward.2} parent=11 // pred_fallthru
          _
      $region12: #{anomaly_clip_lstm3_forward.2} parent=5 // pred_fallthru
        _
      %p162 = scmp.lt.s32.totalorder %s13, 2
      // Predicated region
      $region17: #{anomaly_clip_lstm3_forward.2} parent=5 // pred_check
        %p163 = pneg %p162
      $region18: #{anomaly_clip_lstm3_forward.2} parent=5 // pred_check_branch
        %165 = sbr.rel (%p163) target = $region20
      $region19: #{anomaly_clip_lstm3_forward.2} parent=5 // pred_region
        // Predicated region
        $region21: #{anomaly_clip_lstm3_forward.2} parent=19 // pred_check
          %p166 = pneg %p71
        $region22: #{anomaly_clip_lstm3_forward.2} parent=19 // pred_check_branch
          %168 = sbr.rel (%p166) target = $region24
        $region23: #{anomaly_clip_lstm3_forward.2} parent=19 // pred_region
          %s169 = sand.u32 %s61, 1
          %s170 = scalar_lea.sflag [#allocation5], %s169
          %s171 = sand.u32 %s61, 1
          %s172 = smul.addr %s171, 1024
          %s173 = scalar_lea.vmem [#allocation4], %s172
          %s174 = smul.u32 2, %s21
          %s176 = ssub.s32 16384, 16384
          %177 = vsyncadd %s170, %s176
          %s178 = smul.addr %s174, 128
          %s179 = scalar_lea.hbm %s1, %s178
          %s180 = sshll.u32 %s173, 4
          %s181 = int_to_ptr.vmem [resolvable:$true] %s180
          %186 = dma.hbm_to_vmem [thread:$0]  %s179, 16384, %s181, %s170, 512, 256, 16
        $region24: #{anomaly_clip_lstm3_forward.2} parent=19 // pred_fallthru
          _
        // Predicated region
        $region25: #{anomaly_clip_lstm3_forward.2} parent=19 // pred_check
          %p187 = pneg %p97
        $region26: #{anomaly_clip_lstm3_forward.2} parent=19 // pred_check_branch
          %189 = sbr.rel (%p187) target = $region28
        $region27: #{anomaly_clip_lstm3_forward.2} parent=19 // pred_region
          %s190 = smul.u32 2, %s21
          %p191 = scmp.lt.s32.totalorder %s190, 3
          %s192 = scalar_select %p191, %s190, 3
          %s193 = scalar_lea.vmem %s2, %s192
          %s194 = smul.u32 2, %s21
        $region28: #{anomaly_clip_lstm3_forward.2} parent=19 // pred_fallthru
          _
      $region20: #{anomaly_clip_lstm3_forward.2} parent=5 // pred_fallthru
        _
      %p195 = scmp.le.s32.totalorder 1, %s13
      %p196 = scmp.lt.s32.totalorder %s13, 3
      %p197 = pnand %p195, %p196
      %p198 = pneg %p197
      // Predicated region
      $region29: #{anomaly_clip_lstm3_forward.2} parent=5 // pred_check
        _
      $region30: #{anomaly_clip_lstm3_forward.2} parent=5 // pred_check_branch
        %200 = sbr.rel (%p197) target = $region32
      $region31: #{anomaly_clip_lstm3_forward.2} parent=5 // pred_region
        %s201 = ssub.s32 %s13, 1
        // Predicated region
        $region33: #{anomaly_clip_lstm3_forward.2} parent=31 // pred_check
          %p202 = pneg %p51
        $region34: #{anomaly_clip_lstm3_forward.2} parent=31 // pred_check_branch
          %204 = sbr.rel (%p202) target = $region36
        $region35: #{anomaly_clip_lstm3_forward.2} parent=31 // pred_region
          %205 = dma.done [#allocation3], 1024
        $region36: #{anomaly_clip_lstm3_forward.2} parent=31 // pred_fallthru
          _
        %s206 = sand.u32 %s64, 1
        %s207 = scalar_lea.sflag [#allocation5], %s206
        %s208 = sand.u32 %s64, 1
        %s209 = smul.addr %s208, 1024
        %s210 = scalar_lea.vmem [#allocation4], %s209
        // Predicated region
        $region37: #{anomaly_clip_lstm3_forward.2} parent=31 // pred_check
          %p211 = pneg %p77
        $region38: #{anomaly_clip_lstm3_forward.2} parent=31 // pred_check_branch
          %213 = sbr.rel (%p211) target = $region40
        $region39: #{anomaly_clip_lstm3_forward.2} parent=31 // pred_region
          %214 = dma.done %s207, 16384
        $region40: #{anomaly_clip_lstm3_forward.2} parent=31 // pred_fallthru
          _
        %p215 = pneg %p51
        %p216 = pneg %p48
        %s217 = sand.u32 %s64, 1
        %s218 = scalar_lea.sflag [#allocation5], %s217
        %s219 = sand.u32 %s64, 1
        %s220 = smul.addr %s219, 1024
        %s221 = scalar_lea.vmem [#allocation4], %s220
        %p222 = pneg %p77
        %p223 = pneg %p74
        %s224 = smul.u32 2, %s23
        %p225 = scmp.lt.s32.totalorder %s224, 3
        %s226 = scalar_select %p225, %s224, 3
        %s227 = scalar_lea.vmem %s2, %s226
        %p228 = pneg %p103
        %p229 = pneg %p100
        %p230 = pneg %p131
        %p231 = pneg %p128
        %s232 = sand.u32 %s118, 1
        %s233 = sand.u32 %s118, 1
        %s234 = smul.addr %s233, 32
        %s235 = scalar_lea.vmem [#allocation6], %s234
        %s236 = smul.u32 2, %s23
        %s237 = smul.u32 2, %s23
        %p238 = scmp.lt.s32.totalorder %s237, 3
        %s239 = scalar_select %p238, %s237, 3
        %s240 = scalar_lea.vmem %s2, %s239
        %s241 = smul.u32 2, %s23
        %s242 = smul.u32 8, %s22
        %s243 = smul.u32 2, %s23
        %v244 = vld [vmem:[#allocation2] sm:$0xff]
        %v245 = vld [vmem:[#allocation2 + $0x8] sm:$0xff]
        %v246 = vld [vmem:[#allocation2 + $0x10] sm:$0xff]
        %v247 = vld [vmem:[#allocation2 + $0x18] sm:$0xff]
        %v248 = vld [vmem:[#allocation2 + $0x20] sm:$0xff]
        %v249 = vld [vmem:[#allocation2 + $0x28] sm:$0xff]
        %v250 = vld [vmem:[#allocation2 + $0x30] sm:$0xff]
        %v251 = vld [vmem:[#allocation2 + $0x38] sm:$0xff]
        %v252 = vld [vmem:[%s210] sm:$0xff]
        %v253 = vld [vmem:[%s210 + $0x8] sm:$0xff]
        %v254 = vld [vmem:[%s210 + $0x10] sm:$0xff]
        %v255 = vld [vmem:[%s210 + $0x18] sm:$0xff]
        %v256 = vld [vmem:[%s210 + $0x20] sm:$0xff]
        %v257 = vld [vmem:[%s210 + $0x28] sm:$0xff]
        %v258 = vld [vmem:[%s210 + $0x30] sm:$0xff]
        %v259 = vld [vmem:[%s210 + $0x38] sm:$0xff]
        %v260 = vld [vmem:[%s210 + $0x40] sm:$0xff]
        %v261 = vld [vmem:[%s210 + $0x48] sm:$0xff]
        %v262 = vld [vmem:[%s210 + $0x50] sm:$0xff]
        %v263 = vld [vmem:[%s210 + $0x58] sm:$0xff]
        %v264 = vld [vmem:[%s210 + $0x60] sm:$0xff]
        %v265 = vld [vmem:[%s210 + $0x68] sm:$0xff]
        %v266 = vld [vmem:[%s210 + $0x70] sm:$0xff]
        %v267 = vld [vmem:[%s210 + $0x78] sm:$0xff]
        %v268 = vld [vmem:[%s210 + $0x80] sm:$0xff]
        %v269 = vld [vmem:[%s210 + $0x88] sm:$0xff]
        %v270 = vld [vmem:[%s210 + $0x90] sm:$0xff]
        %v271 = vld [vmem:[%s210 + $0x98] sm:$0xff]
        %v272 = vld [vmem:[%s210 + $0xa0] sm:$0xff]
        %v273 = vld [vmem:[%s210 + $0xa8] sm:$0xff]
        %v274 = vld [vmem:[%s210 + $0xb0] sm:$0xff]
        %v275 = vld [vmem:[%s210 + $0xb8] sm:$0xff]
        %v276 = vld [vmem:[%s210 + $0xc0] sm:$0xff]
        %v277 = vld [vmem:[%s210 + $0xc8] sm:$0xff]
        %v278 = vld [vmem:[%s210 + $0xd0] sm:$0xff]
        %v279 = vld [vmem:[%s210 + $0xd8] sm:$0xff]
        %v280 = vld [vmem:[%s210 + $0xe0] sm:$0xff]
        %v281 = vld [vmem:[%s210 + $0xe8] sm:$0xff]
        %v282 = vld [vmem:[%s210 + $0xf0] sm:$0xff]
        %v283 = vld [vmem:[%s210 + $0xf8] sm:$0xff]
        %v284 = vld [vmem:[%s210 + $0x100] sm:$0xff]
        %v285 = vld [vmem:[%s210 + $0x108] sm:$0xff]
        %v286 = vld [vmem:[%s210 + $0x110] sm:$0xff]
        %v287 = vld [vmem:[%s210 + $0x118] sm:$0xff]
        %v288 = vld [vmem:[%s210 + $0x120] sm:$0xff]
        %v289 = vld [vmem:[%s210 + $0x128] sm:$0xff]
        %v290 = vld [vmem:[%s210 + $0x130] sm:$0xff]
        %v291 = vld [vmem:[%s210 + $0x138] sm:$0xff]
        %v292 = vld [vmem:[%s210 + $0x140] sm:$0xff]
        %v293 = vld [vmem:[%s210 + $0x148] sm:$0xff]
        %v294 = vld [vmem:[%s210 + $0x150] sm:$0xff]
        %v295 = vld [vmem:[%s210 + $0x158] sm:$0xff]
        %v296 = vld [vmem:[%s210 + $0x160] sm:$0xff]
        %v297 = vld [vmem:[%s210 + $0x168] sm:$0xff]
        %v298 = vld [vmem:[%s210 + $0x170] sm:$0xff]
        %v299 = vld [vmem:[%s210 + $0x178] sm:$0xff]
        %v300 = vld [vmem:[%s210 + $0x180] sm:$0xff]
        %v301 = vld [vmem:[%s210 + $0x188] sm:$0xff]
        %v302 = vld [vmem:[%s210 + $0x190] sm:$0xff]
        %v303 = vld [vmem:[%s210 + $0x198] sm:$0xff]
        %v304 = vld [vmem:[%s210 + $0x1a0] sm:$0xff]
        %v305 = vld [vmem:[%s210 + $0x1a8] sm:$0xff]
        %v306 = vld [vmem:[%s210 + $0x1b0] sm:$0xff]
        %v307 = vld [vmem:[%s210 + $0x1b8] sm:$0xff]
        %v308 = vld [vmem:[%s210 + $0x1c0] sm:$0xff]
        %v309 = vld [vmem:[%s210 + $0x1c8] sm:$0xff]
        %v310 = vld [vmem:[%s210 + $0x1d0] sm:$0xff]
        %v311 = vld [vmem:[%s210 + $0x1d8] sm:$0xff]
        %v312 = vld [vmem:[%s210 + $0x1e0] sm:$0xff]
        %v313 = vld [vmem:[%s210 + $0x1e8] sm:$0xff]
        %v314 = vld [vmem:[%s210 + $0x1f0] sm:$0xff]
        %v315 = vld [vmem:[%s210 + $0x1f8] sm:$0xff]
        %v316 = vld [vmem:[%s210 + $0x200] sm:$0xff]
        %v317 = vld [vmem:[%s210 + $0x208] sm:$0xff]
        %v318 = vld [vmem:[%s210 + $0x210] sm:$0xff]
        %v319 = vld [vmem:[%s210 + $0x218] sm:$0xff]
        %v320 = vld [vmem:[%s210 + $0x220] sm:$0xff]
        %v321 = vld [vmem:[%s210 + $0x228] sm:$0xff]
        %v322 = vld [vmem:[%s210 + $0x230] sm:$0xff]
        %v323 = vld [vmem:[%s210 + $0x238] sm:$0xff]
        %v324 = vld [vmem:[%s210 + $0x240] sm:$0xff]
        %v325 = vld [vmem:[%s210 + $0x248] sm:$0xff]
        %v326 = vld [vmem:[%s210 + $0x250] sm:$0xff]
        %v327 = vld [vmem:[%s210 + $0x258] sm:$0xff]
        %v328 = vld [vmem:[%s210 + $0x260] sm:$0xff]
        %v329 = vld [vmem:[%s210 + $0x268] sm:$0xff]
        %v330 = vld [vmem:[%s210 + $0x270] sm:$0xff]
        %v331 = vld [vmem:[%s210 + $0x278] sm:$0xff]
        %v332 = vld [vmem:[%s210 + $0x280] sm:$0xff]
        %v333 = vld [vmem:[%s210 + $0x288] sm:$0xff]
        %v334 = vld [vmem:[%s210 + $0x290] sm:$0xff]
        %v335 = vld [vmem:[%s210 + $0x298] sm:$0xff]
        %v336 = vld [vmem:[%s210 + $0x2a0] sm:$0xff]
        %v337 = vld [vmem:[%s210 + $0x2a8] sm:$0xff]
        %v338 = vld [vmem:[%s210 + $0x2b0] sm:$0xff]
        %v339 = vld [vmem:[%s210 + $0x2b8] sm:$0xff]
        %v340 = vld [vmem:[%s210 + $0x2c0] sm:$0xff]
        %v341 = vld [vmem:[%s210 + $0x2c8] sm:$0xff]
        %v342 = vld [vmem:[%s210 + $0x2d0] sm:$0xff]
        %v343 = vld [vmem:[%s210 + $0x2d8] sm:$0xff]
        %v344 = vld [vmem:[%s210 + $0x2e0] sm:$0xff]
        %v345 = vld [vmem:[%s210 + $0x2e8] sm:$0xff]
        %v346 = vld [vmem:[%s210 + $0x2f0] sm:$0xff]
        %v347 = vld [vmem:[%s210 + $0x2f8] sm:$0xff]
        %v348 = vld [vmem:[%s210 + $0x300] sm:$0xff]
        %v349 = vld [vmem:[%s210 + $0x308] sm:$0xff]
        %v350 = vld [vmem:[%s210 + $0x310] sm:$0xff]
        %v351 = vld [vmem:[%s210 + $0x318] sm:$0xff]
        %v352 = vld [vmem:[%s210 + $0x320] sm:$0xff]
        %v353 = vld [vmem:[%s210 + $0x328] sm:$0xff]
        %v354 = vld [vmem:[%s210 + $0x330] sm:$0xff]
        %v355 = vld [vmem:[%s210 + $0x338] sm:$0xff]
        %v356 = vld [vmem:[%s210 + $0x340] sm:$0xff]
        %v357 = vld [vmem:[%s210 + $0x348] sm:$0xff]
        %v358 = vld [vmem:[%s210 + $0x350] sm:$0xff]
        %v359 = vld [vmem:[%s210 + $0x358] sm:$0xff]
        %v360 = vld [vmem:[%s210 + $0x360] sm:$0xff]
        %v361 = vld [vmem:[%s210 + $0x368] sm:$0xff]
        %v362 = vld [vmem:[%s210 + $0x370] sm:$0xff]
        %v363 = vld [vmem:[%s210 + $0x378] sm:$0xff]
        %v364 = vld [vmem:[%s210 + $0x380] sm:$0xff]
        %v365 = vld [vmem:[%s210 + $0x388] sm:$0xff]
        %v366 = vld [vmem:[%s210 + $0x390] sm:$0xff]
        %v367 = vld [vmem:[%s210 + $0x398] sm:$0xff]
        %v368 = vld [vmem:[%s210 + $0x3a0] sm:$0xff]
        %v369 = vld [vmem:[%s210 + $0x3a8] sm:$0xff]
        %v370 = vld [vmem:[%s210 + $0x3b0] sm:$0xff]
        %v371 = vld [vmem:[%s210 + $0x3b8] sm:$0xff]
        %v372 = vld [vmem:[%s210 + $0x3c0] sm:$0xff]
        %v373 = vld [vmem:[%s210 + $0x3c8] sm:$0xff]
        %v374 = vld [vmem:[%s210 + $0x3d0] sm:$0xff]
        %v375 = vld [vmem:[%s210 + $0x3d8] sm:$0xff]
        %v376 = vld [vmem:[%s210 + $0x3e0] sm:$0xff]
        %v377 = vld [vmem:[%s210 + $0x3e8] sm:$0xff]
        %v378 = vld [vmem:[%s210 + $0x3f0] sm:$0xff]
        %v379 = vld [vmem:[%s210 + $0x3f8] sm:$0xff]
        %v380 = vld [vmem:[%s240] sm:$0x3]
        %v382 = vlaneseq
        %v383 = vshrl.u32 %v382, 7
        %v384 = vsub.s32 0, %v383
        %v385 = vrot.slane %v380, %v384
        %v386 = vlaneseq
        %v387 = vshrl.u32 %v386, 7
        %v388 = vsub.s32 1, %v387
        %v389 = vrot.slane %v380, %v388
        %392 = vmatprep.subr.mxu0 %v253
        %393 = vmatpush1.msra.mxu0 %v252
        %394 = vmatprep.subr.mxu0 %v255
        %395 = vmatpush1.msra.mxu0 %v254
        %396 = vmatprep.subr.mxu0 %v257
        %397 = vmatpush1.msra.mxu0 %v256
        %398 = vmatprep.subr.mxu0 %v259
        %399 = vmatpush1.msra.mxu0 %v258
        %400 = vmatprep.subr.mxu0 %v261
        %401 = vmatpush1.msra.mxu0 %v260
        %402 = vmatprep.subr.mxu0 %v263
        %403 = vmatpush1.msra.mxu0 %v262
        %404 = vmatprep.subr.mxu0 %v265
        %405 = vmatpush1.msra.mxu0 %v264
        %406 = vmatprep.subr.mxu0 %v267
        %407 = vmatpush1.msra.mxu0 %v266
        %408 = vmatprep.subr.mxu0 %v269
        %409 = vmatpush1.msra.mxu0 %v268
        %410 = vmatprep.subr.mxu0 %v271
        %411 = vmatpush1.msra.mxu0 %v270
        %412 = vmatprep.subr.mxu0 %v273
        %413 = vmatpush1.msra.mxu0 %v272
        %414 = vmatprep.subr.mxu0 %v275
        %415 = vmatpush1.msra.mxu0 %v274
        %416 = vmatprep.subr.mxu0 %v277
        %417 = vmatpush1.msra.mxu0 %v276
        %418 = vmatprep.subr.mxu0 %v279
        %419 = vmatpush1.msra.mxu0 %v278
        %420 = vmatprep.subr.mxu0 %v281
        %421 = vmatpush1.msra.mxu0 %v280
        %422 = vmatprep.subr.mxu0 %v283
        %423 = vmatpush1.msra.mxu0 %v282
        %424 = vmatprep.subr.mxu0 %v285
        %425 = vmatpush1.msra.mxu0 %v284
        %426 = vmatprep.subr.mxu0 %v287
        %427 = vmatpush1.msra.mxu0 %v286
        %428 = vmatprep.subr.mxu0 %v289
        %429 = vmatpush1.msra.mxu0 %v288
        %430 = vmatprep.subr.mxu0 %v291
        %431 = vmatpush1.msra.mxu0 %v290
        %432 = vmatprep.subr.mxu0 %v293
        %433 = vmatpush1.msra.mxu0 %v292
        %434 = vmatprep.subr.mxu0 %v295
        %435 = vmatpush1.msra.mxu0 %v294
        %436 = vmatprep.subr.mxu0 %v297
        %437 = vmatpush1.msra.mxu0 %v296
        %438 = vmatprep.subr.mxu0 %v299
        %439 = vmatpush1.msra.mxu0 %v298
        %440 = vmatprep.subr.mxu0 %v301
        %441 = vmatpush1.msra.mxu0 %v300
        %442 = vmatprep.subr.mxu0 %v303
        %443 = vmatpush1.msra.mxu0 %v302
        %444 = vmatprep.subr.mxu0 %v305
        %445 = vmatpush1.msra.mxu0 %v304
        %446 = vmatprep.subr.mxu0 %v307
        %447 = vmatpush1.msra.mxu0 %v306
        %448 = vmatprep.subr.mxu0 %v309
        %449 = vmatpush1.msra.mxu0 %v308
        %450 = vmatprep.subr.mxu0 %v311
        %451 = vmatpush1.msra.mxu0 %v310
        %452 = vmatprep.subr.mxu0 %v313
        %453 = vmatpush1.msra.mxu0 %v312
        %454 = vmatprep.subr.mxu0 %v315
        %455 = vmatpush1.msra.mxu0 %v314
        %456 = vmatprep.mubr.f32.mxu0 %v245
        %457 = vmatmul.mubr.f32.gmra.mrb[0].mxu0 %v244
        %v458 = vpop.f32.mrb[0].mxu0
        %v459 = vadd.f32 %v385, %v458
        %v460 = vpop.f32.mrb[0].mxu0
        %v461 = vadd.f32 %v389, %v460
        %462 = vmatprep.mubr.f32.mxu0 %v249
        %463 = vmatmul.mubr.f32.gmra.mrb[0].mxu0 %v248
        %v464 = vpop.f32.mrb[0].mxu0
        %v465 = vadd.f32 %v385, %v464
        %v466 = vpop.f32.mrb[0].mxu0
        %v467 = vadd.f32 %v389, %v466
        %468 = vdwg.mxu0
        %469 = vmatprep.subr.mxu0 %v317
        %470 = vmatpush1.msra.mxu0 %v316
        %471 = vmatprep.subr.mxu0 %v319
        %472 = vmatpush1.msra.mxu0 %v318
        %473 = vmatprep.subr.mxu0 %v321
        %474 = vmatpush1.msra.mxu0 %v320
        %475 = vmatprep.subr.mxu0 %v323
        %476 = vmatpush1.msra.mxu0 %v322
        %477 = vmatprep.subr.mxu0 %v325
        %478 = vmatpush1.msra.mxu0 %v324
        %479 = vmatprep.subr.mxu0 %v327
        %480 = vmatpush1.msra.mxu0 %v326
        %481 = vmatprep.subr.mxu0 %v329
        %482 = vmatpush1.msra.mxu0 %v328
        %483 = vmatprep.subr.mxu0 %v331
        %484 = vmatpush1.msra.mxu0 %v330
        %485 = vmatprep.subr.mxu0 %v333
        %486 = vmatpush1.msra.mxu0 %v332
        %487 = vmatprep.subr.mxu0 %v335
        %488 = vmatpush1.msra.mxu0 %v334
        %489 = vmatprep.subr.mxu0 %v337
        %490 = vmatpush1.msra.mxu0 %v336
        %491 = vmatprep.subr.mxu0 %v339
        %492 = vmatpush1.msra.mxu0 %v338
        %493 = vmatprep.subr.mxu0 %v341
        %494 = vmatpush1.msra.mxu0 %v340
        %495 = vmatprep.subr.mxu0 %v343
        %496 = vmatpush1.msra.mxu0 %v342
        %497 = vmatprep.subr.mxu0 %v345
        %498 = vmatpush1.msra.mxu0 %v344
        %499 = vmatprep.subr.mxu0 %v347
        %500 = vmatpush1.msra.mxu0 %v346
        %501 = vmatprep.subr.mxu0 %v349
        %502 = vmatpush1.msra.mxu0 %v348
        %503 = vmatprep.subr.mxu0 %v351
        %504 = vmatpush1.msra.mxu0 %v350
        %505 = vmatprep.subr.mxu0 %v353
        %506 = vmatpush1.msra.mxu0 %v352
        %507 = vmatprep.subr.mxu0 %v355
        %508 = vmatpush1.msra.mxu0 %v354
        %509 = vmatprep.subr.mxu0 %v357
        %510 = vmatpush1.msra.mxu0 %v356
        %511 = vmatprep.subr.mxu0 %v359
        %512 = vmatpush1.msra.mxu0 %v358
        %513 = vmatprep.subr.mxu0 %v361
        %514 = vmatpush1.msra.mxu0 %v360
        %515 = vmatprep.subr.mxu0 %v363
        %516 = vmatpush1.msra.mxu0 %v362
        %517 = vmatprep.subr.mxu0 %v365
        %518 = vmatpush1.msra.mxu0 %v364
        %519 = vmatprep.subr.mxu0 %v367
        %520 = vmatpush1.msra.mxu0 %v366
        %521 = vmatprep.subr.mxu0 %v369
        %522 = vmatpush1.msra.mxu0 %v368
        %523 = vmatprep.subr.mxu0 %v371
        %524 = vmatpush1.msra.mxu0 %v370
        %525 = vmatprep.subr.mxu0 %v373
        %526 = vmatpush1.msra.mxu0 %v372
        %527 = vmatprep.subr.mxu0 %v375
        %528 = vmatpush1.msra.mxu0 %v374
        %529 = vmatprep.subr.mxu0 %v377
        %530 = vmatpush1.msra.mxu0 %v376
        %531 = vmatprep.subr.mxu0 %v379
        %532 = vmatpush1.msra.mxu0 %v378
        %533 = vmatprep.mubr.f32.mxu0 %v247
        %534 = vmatmul.mubr.f32.gmra.mrb[0].mxu0 %v246
        %v535 = vpop.f32.mrb[0].mxu0
        %v536 = vadd.f32 %v459, %v535
        %v537 = vpop.f32.mrb[0].mxu0
        %v538 = vadd.f32 %v461, %v537
        %539 = vmatprep.mubr.f32.mxu0 %v251
        %540 = vmatmul.mubr.f32.gmra.mrb[0].mxu0 %v250
        %v541 = vpop.f32.mrb[0].mxu0
        %v542 = vadd.f32 %v465, %v541
        %v543 = vpop.f32.mrb[0].mxu0
        %v544 = vadd.f32 %v467, %v543
        %545 = vdwg.mxu0
        %v546 = vcombine.high %v536, 0.0
        %v548 = vunpack.c.l.s4 1983009808
        %v549 = vunpack.c.0.s8 %v548
        %v550 = vlaneseq
        %v551 = vshrl.u32 %v550, 7
        %v552 = vsub.s32 %v549, %v551
        %v553 = vrot.slane %v536, %v552
        %v555 = vunpack.c.l.s4 1983009808
        %v556 = vunpack.c.0.s8 %v555
        %v557 = vlaneseq
        %v558 = vshrl.u32 %v557, 7
        %v559 = vsub.s32 %v556, %v558
        %v560 = vrot.slane %v546, %v559
        %v561 = vcombine.high %v542, 0.0
        %v563 = vunpack.c.l.s4 1983009808
        %v564 = vunpack.c.0.s8 %v563
        %v565 = vlaneseq
        %v566 = vshrl.u32 %v565, 7
        %v567 = vsub.s32 %v564, %v566
        %v568 = vrot.slane %v542, %v567
        %v570 = vunpack.c.l.s4 1983009808
        %v571 = vunpack.c.0.s8 %v570
        %v572 = vlaneseq
        %v573 = vshrl.u32 %v572, 7
        %v574 = vsub.s32 %v571, %v573
        %v575 = vrot.slane %v561, %v574
        %v576 = vcombine.low %v553, %v568
        %v577 = vcombine.high %v553, %v568
        %v579 = vunpack.c.l.s4 1934713408
        %v580 = vunpack.c.0.s8 %v579
        %v581 = vlaneseq
        %v582 = vshrl.u32 %v581, 7
        %v583 = vsub.s32 %v580, %v582
        %v584 = vrot.slane %v576, %v583
        %v586 = vunpack.c.l.s4 1934713408
        %v587 = vunpack.c.0.s8 %v586
        %v588 = vlaneseq
        %v589 = vshrl.u32 %v588, 7
        %v590 = vsub.s32 %v587, %v589
        %v591 = vrot.slane %v577, %v590
        %v592 = vcombine.low %v560, %v575
        %v593 = vcombine.high %v560, %v575
        %v595 = vunpack.c.l.s4 1934713408
        %v596 = vunpack.c.0.s8 %v595
        %v597 = vlaneseq
        %v598 = vshrl.u32 %v597, 7
        %v599 = vsub.s32 %v596, %v598
        %v600 = vrot.slane %v592, %v599
        %v602 = vunpack.c.l.s4 1934713408
        %v603 = vunpack.c.0.s8 %v602
        %v604 = vlaneseq
        %v605 = vshrl.u32 %v604, 7
        %v606 = vsub.s32 %v603, %v605
        %v607 = vrot.slane %v593, %v606
        %v608 = vcombine.high %v584, 0.0
        %v609 = vcombine.high %v591, 0.0
        %v610 = vcombine.high %v600, 0.0
        %v611 = vcombine.high %v607, 0.0
        %v612 = vcombine.high %v538, 0.0
        %v614 = vunpack.c.l.s4 1983009808
        %v615 = vunpack.c.0.s8 %v614
        %v616 = vlaneseq
        %v617 = vshrl.u32 %v616, 7
        %v618 = vsub.s32 %v615, %v617
        %v619 = vrot.slane %v538, %v618
        %v621 = vunpack.c.l.s4 1983009808
        %v622 = vunpack.c.0.s8 %v621
        %v623 = vlaneseq
        %v624 = vshrl.u32 %v623, 7
        %v625 = vsub.s32 %v622, %v624
        %v626 = vrot.slane %v612, %v625
        %v627 = vcombine.high %v544, 0.0
        %v629 = vunpack.c.l.s4 1983009808
        %v630 = vunpack.c.0.s8 %v629
        %v631 = vlaneseq
        %v632 = vshrl.u32 %v631, 7
        %v633 = vsub.s32 %v630, %v632
        %v634 = vrot.slane %v544, %v633
        %v636 = vunpack.c.l.s4 1983009808
        %v637 = vunpack.c.0.s8 %v636
        %v638 = vlaneseq
        %v639 = vshrl.u32 %v638, 7
        %v640 = vsub.s32 %v637, %v639
        %v641 = vrot.slane %v627, %v640
        %v642 = vcombine.low %v619, %v634
        %v643 = vcombine.high %v619, %v634
        %v645 = vunpack.c.l.s4 1934713408
        %v646 = vunpack.c.0.s8 %v645
        %v647 = vlaneseq
        %v648 = vshrl.u32 %v647, 7
        %v649 = vsub.s32 %v646, %v648
        %v650 = vrot.slane %v642, %v649
        %v652 = vunpack.c.l.s4 1934713408
        %v653 = vunpack.c.0.s8 %v652
        %v654 = vlaneseq
        %v655 = vshrl.u32 %v654, 7
        %v656 = vsub.s32 %v653, %v655
        %v657 = vrot.slane %v643, %v656
        %v658 = vcombine.low %v626, %v641
        %v659 = vcombine.high %v626, %v641
        %v661 = vunpack.c.l.s4 1934713408
        %v662 = vunpack.c.0.s8 %v661
        %v663 = vlaneseq
        %v664 = vshrl.u32 %v663, 7
        %v665 = vsub.s32 %v662, %v664
        %v666 = vrot.slane %v658, %v665
        %v668 = vunpack.c.l.s4 1934713408
        %v669 = vunpack.c.0.s8 %v668
        %v670 = vlaneseq
        %v671 = vshrl.u32 %v670, 7
        %v672 = vsub.s32 %v669, %v671
        %v673 = vrot.slane %v659, %v672
        %v674 = vcombine.high %v650, 0.0
        %v675 = vcombine.high %v657, 0.0
        %v676 = vcombine.high %v666, 0.0
        %v677 = vcombine.high %v673, 0.0
        %v694 = vcombine.low %v584, %v650
        %v696 = vunpack.c.l.s4 1983009808
        %v697 = vunpack.c.0.s8 %v696
        %v698 = vlaneseq
        %v699 = vshrl.u32 %v698, 7
        %v700 = vsub.s32 %v697, %v699
        %v701 = vrot.slane %v694, %v700
        %v702 = vcombine.low %v608, %v674
        %v704 = vunpack.c.l.s4 1983009808
        %v705 = vunpack.c.0.s8 %v704
        %v706 = vlaneseq
        %v707 = vshrl.u32 %v706, 7
        %v708 = vsub.s32 %v705, %v707
        %v709 = vrot.slane %v702, %v708
        %v710 = vcombine.low %v591, %v657
        %v712 = vunpack.c.l.s4 1983009808
        %v713 = vunpack.c.0.s8 %v712
        %v714 = vlaneseq
        %v715 = vshrl.u32 %v714, 7
        %v716 = vsub.s32 %v713, %v715
        %v717 = vrot.slane %v710, %v716
        %v718 = vcombine.low %v609, %v675
        %v720 = vunpack.c.l.s4 1983009808
        %v721 = vunpack.c.0.s8 %v720
        %v722 = vlaneseq
        %v723 = vshrl.u32 %v722, 7
        %v724 = vsub.s32 %v721, %v723
        %v725 = vrot.slane %v718, %v724
        %v726 = vcombine.low %v600, %v666
        %v728 = vunpack.c.l.s4 1983009808
        %v729 = vunpack.c.0.s8 %v728
        %v730 = vlaneseq
        %v731 = vshrl.u32 %v730, 7
        %v732 = vsub.s32 %v729, %v731
        %v733 = vrot.slane %v726, %v732
        %v734 = vcombine.low %v610, %v676
        %v736 = vunpack.c.l.s4 1983009808
        %v737 = vunpack.c.0.s8 %v736
        %v738 = vlaneseq
        %v739 = vshrl.u32 %v738, 7
        %v740 = vsub.s32 %v737, %v739
        %v741 = vrot.slane %v734, %v740
        %v742 = vcombine.low %v607, %v673
        %v744 = vunpack.c.l.s4 1983009808
        %v745 = vunpack.c.0.s8 %v744
        %v746 = vlaneseq
        %v747 = vshrl.u32 %v746, 7
        %v748 = vsub.s32 %v745, %v747
        %v749 = vrot.slane %v742, %v748
        %v750 = vcombine.low %v611, %v677
        %v752 = vunpack.c.l.s4 1983009808
        %v753 = vunpack.c.0.s8 %v752
        %v754 = vlaneseq
        %v755 = vshrl.u32 %v754, 7
        %v756 = vsub.s32 %v753, %v755
        %v757 = vrot.slane %v750, %v756
        %766 = vst [vmem:[%s235] sm:$0xf] %v701
        %767 = vst [vmem:[%s235 + $0x4] sm:$0xf] %v709
        %768 = vst [vmem:[%s235 + $0x8] sm:$0xf] %v717
        %769 = vst [vmem:[%s235 + $0xc] sm:$0xf] %v725
        %770 = vst [vmem:[%s235 + $0x10] sm:$0xf] %v733
        %771 = vst [vmem:[%s235 + $0x14] sm:$0xf] %v741
        %772 = vst [vmem:[%s235 + $0x18] sm:$0xf] %v749
        %773 = vst [vmem:[%s235 + $0x1c] sm:$0xf] %v757
        %s774 = sand.u32 %s118, 1
        %s775 = sand.u32 %s118, 1
        %s776 = smul.addr %s775, 32
        %s777 = scalar_lea.vmem [#allocation6], %s776
        // Predicated region
        $region41: #{anomaly_clip_lstm3_forward.2} parent=31 // pred_check
          %p778 = pneg %p128
        $region42: #{anomaly_clip_lstm3_forward.2} parent=31 // pred_check_branch
          %780 = sbr.rel (%p778) target = $region44
        $region43: #{anomaly_clip_lstm3_forward.2} parent=31 // pred_region
          %s781 = smul.u32 8, %s22
          %s782 = smul.u32 2, %s23
          %s783 = smul.addr %s781, 4
          %s784 = sadd.s32 %s782, %s783
          %s785 = smul.addr %s784, 2
          %s786 = scalar_lea.vmem %s3, %s785
          // Predicated region
          $region45: #{anomaly_clip_lstm3_forward.2} parent=43 // pred_check
            _
          $region46: #{anomaly_clip_lstm3_forward.2} parent=43 // pred_check_branch
            %788 = sbr.rel (0) target = $region48
          $region47: #{anomaly_clip_lstm3_forward.2} parent=43 // pred_region
            // Predicated region
            $region49: #{anomaly_clip_lstm3_forward.2} parent=47 // pred_check
              _
            $region50: #{anomaly_clip_lstm3_forward.2} parent=47 // pred_check_branch
              %790 = sbr.rel target = $region52
            $region51: #{anomaly_clip_lstm3_forward.2} parent=47 // pred_region
              // Predicated region
              $region64: #{anomaly_clip_lstm3_forward.2} parent=51 // pred_check
                _
              $region65: #{anomaly_clip_lstm3_forward.2} parent=51 // pred_check_branch
                %819 = sbr.rel (0) target = $region67
              $region66: #{anomaly_clip_lstm3_forward.2} parent=51 // pred_region
                loop: start=0, step=1, limit=1
                $region68: #{anomaly_clip_lstm3_forward.2} parent=66 // loop_pre_header
                  _
                $region69: #{anomaly_clip_lstm3_forward.2} parent=66 // loop_header
                  %s821 = sphi 0, %s825
                  %p822 = scmp.ge.s32.totalorder %s821, 1
                  %s826 = sphi %s777, %s777
                  %s827 = sphi %s786, %s786
                $region70: #{anomaly_clip_lstm3_forward.2} parent=66 // loop_header_branch
                  %824 = sbr.rel (%p822) target = $region74
                $region71: #{anomaly_clip_lstm3_forward.2} parent=66 // loop_body
                  _
                $region72: #{anomaly_clip_lstm3_forward.2} parent=66 // loop_footer
                  %s825 = sadd.s32 1, %s821
                $region73: #{anomaly_clip_lstm3_forward.2} parent=66 // loop_footer_branch
                  %820 = sbr.rel target = $region69
                $region74: #{anomaly_clip_lstm3_forward.2} parent=66 // loop_exit
                  _
                loop: start=0, step=1, limit=1
                $region75: #{anomaly_clip_lstm3_forward.2} parent=66 // loop_pre_header
                  _
                $region76: #{anomaly_clip_lstm3_forward.2} parent=66 // loop_header
                  %s830 = sphi 0, %s834
                  %p831 = scmp.ge.s32.totalorder %s830, 1
                  %s835 = sphi %s777, %s777
                  %s836 = sphi %s786, %s786
                $region77: #{anomaly_clip_lstm3_forward.2} parent=66 // loop_header_branch
                  %833 = sbr.rel (%p831) target = $region81
                $region78: #{anomaly_clip_lstm3_forward.2} parent=66 // loop_body
                  %v837 = vld [vmem:[%s835] sm:$0xf]
                  %838 = vst [vmem:[%s836] sm:$0xf] %v837
                  %v839 = vld [vmem:[%s835 + $0x4] sm:$0xf]
                  %840 = vst [vmem:[%s836 + $0x8] sm:$0xf] %v839
                  %v841 = vld [vmem:[%s835 + $0x8] sm:$0xf]
                  %842 = vst [vmem:[%s836 + $0x10] sm:$0xf] %v841
                  %v843 = vld [vmem:[%s835 + $0xc] sm:$0xf]
                  %844 = vst [vmem:[%s836 + $0x18] sm:$0xf] %v843
                  %v845 = vld [vmem:[%s835 + $0x10] sm:$0xf]
                  %846 = vst [vmem:[%s836 + $0x20] sm:$0xf] %v845
                  %v847 = vld [vmem:[%s835 + $0x14] sm:$0xf]
                  %848 = vst [vmem:[%s836 + $0x28] sm:$0xf] %v847
                  %v849 = vld [vmem:[%s835 + $0x18] sm:$0xf]
                  %850 = vst [vmem:[%s836 + $0x30] sm:$0xf] %v849
                  %v851 = vld [vmem:[%s835 + $0x1c] sm:$0xf]
                  %852 = vst [vmem:[%s836 + $0x38] sm:$0xf] %v851
                $region79: #{anomaly_clip_lstm3_forward.2} parent=66 // loop_footer
                  %s834 = sadd.s32 1, %s830
                $region80: #{anomaly_clip_lstm3_forward.2} parent=66 // loop_footer_branch
                  %829 = sbr.rel target = $region76
                $region81: #{anomaly_clip_lstm3_forward.2} parent=66 // loop_exit
                  _
              $region67: #{anomaly_clip_lstm3_forward.2} parent=51 // pred_fallthru
                _
            $region52: #{anomaly_clip_lstm3_forward.2} parent=47 // pred_fallthru
              _
            // Predicated region
            $region53: #{anomaly_clip_lstm3_forward.2} parent=47 // pred_check
              _
            $region54: #{anomaly_clip_lstm3_forward.2} parent=47 // pred_check_branch
              %792 = sbr.rel (0) target = $region56
            $region55: #{anomaly_clip_lstm3_forward.2} parent=47 // pred_region
              loop: start=0, step=1, limit=1
              $region57: #{anomaly_clip_lstm3_forward.2} parent=55 // loop_pre_header
                _
              $region58: #{anomaly_clip_lstm3_forward.2} parent=55 // loop_header
                %s795 = sphi 0, %s799
                %p796 = scmp.ge.s32.totalorder %s795, 1
                %s800 = sphi %s777, %s777
                %s801 = sphi %s786, %s786
              $region59: #{anomaly_clip_lstm3_forward.2} parent=55 // loop_header_branch
                %798 = sbr.rel (%p796) target = $region63
              $region60: #{anomaly_clip_lstm3_forward.2} parent=55 // loop_body
                %v802 = vld [vmem:[%s800] sm:$0xf]
                %803 = vst [vmem:[%s801] sm:$0xf] %v802
                %v804 = vld [vmem:[%s800 + $0x4] sm:$0xf]
                %805 = vst [vmem:[%s801 + $0x8] sm:$0xf] %v804
                %v806 = vld [vmem:[%s800 + $0x8] sm:$0xf]
                %807 = vst [vmem:[%s801 + $0x10] sm:$0xf] %v806
                %v808 = vld [vmem:[%s800 + $0xc] sm:$0xf]
                %809 = vst [vmem:[%s801 + $0x18] sm:$0xf] %v808
                %v810 = vld [vmem:[%s800 + $0x10] sm:$0xf]
                %811 = vst [vmem:[%s801 + $0x20] sm:$0xf] %v810
                %v812 = vld [vmem:[%s800 + $0x14] sm:$0xf]
                %813 = vst [vmem:[%s801 + $0x28] sm:$0xf] %v812
                %v814 = vld [vmem:[%s800 + $0x18] sm:$0xf]
                %815 = vst [vmem:[%s801 + $0x30] sm:$0xf] %v814
                %v816 = vld [vmem:[%s800 + $0x1c] sm:$0xf]
                %817 = vst [vmem:[%s801 + $0x38] sm:$0xf] %v816
              $region61: #{anomaly_clip_lstm3_forward.2} parent=55 // loop_footer
                %s799 = sadd.s32 1, %s795
              $region62: #{anomaly_clip_lstm3_forward.2} parent=55 // loop_footer_branch
                %794 = sbr.rel target = $region58
              $region63: #{anomaly_clip_lstm3_forward.2} parent=55 // loop_exit
                _
            $region56: #{anomaly_clip_lstm3_forward.2} parent=47 // pred_fallthru
              _
          $region48: #{anomaly_clip_lstm3_forward.2} parent=43 // pred_fallthru
            _
          %853 = vnop
        $region44: #{anomaly_clip_lstm3_forward.2} parent=31 // pred_fallthru
          _
      $region32: #{anomaly_clip_lstm3_forward.2} parent=5 // pred_fallthru
        _
      %p854 = scmp.le.s32.totalorder 2, %s13
      // Predicated region
      $region82: #{anomaly_clip_lstm3_forward.2} parent=5 // pred_check
        %p855 = pneg %p854
      $region83: #{anomaly_clip_lstm3_forward.2} parent=5 // pred_check_branch
        %857 = sbr.rel (%p855) target = $region85
      $region84: #{anomaly_clip_lstm3_forward.2} parent=5 // pred_region
        %s858 = ssub.s32 %s13, 2
        // Predicated region
        $region86: #{anomaly_clip_lstm3_forward.2} parent=84 // pred_check
          %p859 = pneg %p134
        $region87: #{anomaly_clip_lstm3_forward.2} parent=84 // pred_check_branch
          %861 = sbr.rel (%p859) target = $region89
        $region88: #{anomaly_clip_lstm3_forward.2} parent=84 // pred_region
          %s862 = sand.u32 %s119, 1
          %s863 = sand.u32 %s119, 1
          %s864 = smul.addr %s863, 32
          %s865 = scalar_lea.vmem [#allocation6], %s864
        $region89: #{anomaly_clip_lstm3_forward.2} parent=84 // pred_fallthru
          _
      $region85: #{anomaly_clip_lstm3_forward.2} parent=5 // pred_fallthru
        _
    $region6: #{anomaly_clip_lstm3_forward.2} parent=1 // loop_footer
      %s17 = sadd.s32 1, %s13
    $region7: #{anomaly_clip_lstm3_forward.2} parent=1 // loop_footer_branch
      %12 = sbr.rel target = $region3
    $region8: #{anomaly_clip_lstm3_forward.2} parent=1 // loop_exit
      _
    %866 = vsyncpa [#allocation3], 1
    %s867 = scalar_lea.sflag [#allocation3], 1
    %868 = vsyncpa %s867, 1
    %869 = vsyncpa [#allocation5], 1
    %s870 = scalar_lea.sflag [#allocation5], 1
    %871 = vsyncpa %s870, 1

// kernel: anomaly_clip_lstm3_forward.3
$region0: #{anomaly_clip_lstm3_forward.3}
  #allocation0 [shape = 'u32[]', space=smem, size = 0x4, offset = 0x4, fixed_abs, tag = 'smem constant byte address 0x4 - core index']
  #allocation1 [shape = 'u32[144,128]{1,0:T(1,128)}', space=vmem, size = 0x12000, scoped, tag = 'internal scratch']
  #allocation2 [shape = 'f32[2,64]{1,0:T(2,128)}', space=vmem, size = 0x400, scoped, tag = 'scratch operand']
  #allocation3 [shape = 'f32[2,64]{1,0:T(2,128)}', space=vmem, size = 0x400, scoped, tag = 'scratch operand']
  #allocation4 [shape = 'f32[2,64]{1,0:T(2,128)}', space=vmem, size = 0x400, scoped, tag = 'scratch operand']
  #allocation5 [shape = 'f32[2,64]{1,0:T(2,128)}', space=vmem, size = 0x400, scoped, tag = 'scratch operand']
  %s0 = inlined_call_operand.vmem [shape: f32[8,2,512], index: 0, kind: input, shape index: {}, may-alias: {0,1}]
  %s1 = inlined_call_operand.vmem [shape: f32[8,2,512], index: 1, kind: input, shape index: {}, may-alias: {0,1}]
  %s2 = inlined_call_operand.vmem [shape: f32[64,256], index: 2, kind: input, shape index: {}]
  %s3 = inlined_call_operand.vmem [shape: f32[64,256], index: 3, kind: input, shape index: {}]
  %s4 = inlined_call_operand.vmem [shape: f32[64,2], index: 4, kind: input, shape index: {}]
  %s5 = inlined_call_operand.vmem [shape: f32[1,2], index: 5, kind: input, shape index: {}]
  %s6 = inlined_call_operand.hbm [shape: f32[2,2], index: 6, kind: output, shape index: {}]
  %s7 = sld [smem:[#allocation0]]
  $region124: #{anomaly_clip_lstm3_forward.3} parent=0
    _
  %s9 = ssub.s32 1, %s7
  %s10 = scalar_select 0, %s9, %s7
  $region1: #{anomaly_clip_lstm3_forward.3} parent=0
    #allocation6 [shape = 'u8[16384]{0}', space=vmem, size = 0x4000, scoped, tag = 'input window, operand 0, single buffered']
    #allocation7 [shape = 'u8[16384]{0}', space=vmem, size = 0x4000, scoped, tag = 'input window, operand 1, single buffered']
    #allocation8 [shape = 'u8[1024]{0}', space=vmem, size = 0x400, scoped, tag = 'output window, operand 0, single buffered']
    #allocation9 [shape = 's32[1]{0}', space=sflag, size = 0x4, scoped, tag = 'scoped memory for anomaly_clip_lstm3_forward.3']
    %11 = vsyncpa [#allocation9], 0
    // Predicated region
    $region2: #{anomaly_clip_lstm3_forward.3} parent=1 // pred_check
      _
    $region3: #{anomaly_clip_lstm3_forward.3} parent=1 // pred_check_branch
      %13 = sbr.rel (0) target = $region5
    $region4: #{anomaly_clip_lstm3_forward.3} parent=1 // pred_region
      // Predicated region
      $region6: #{anomaly_clip_lstm3_forward.3} parent=4 // pred_check
        _
      $region7: #{anomaly_clip_lstm3_forward.3} parent=4 // pred_check_branch
        %15 = sbr.rel (0) target = $region9
      $region8: #{anomaly_clip_lstm3_forward.3} parent=4 // pred_region
        // Predicated region
        $region10: #{anomaly_clip_lstm3_forward.3} parent=8 // pred_check
          _
        $region11: #{anomaly_clip_lstm3_forward.3} parent=8 // pred_check_branch
          %17 = sbr.rel target = $region13
        $region12: #{anomaly_clip_lstm3_forward.3} parent=8 // pred_region
          // Predicated region
          $region25: #{anomaly_clip_lstm3_forward.3} parent=12 // pred_check
            _
          $region26: #{anomaly_clip_lstm3_forward.3} parent=12 // pred_check_branch
            %46 = sbr.rel (0) target = $region28
          $region27: #{anomaly_clip_lstm3_forward.3} parent=12 // pred_region
            loop: start=0, step=1, limit=1
            $region29: #{anomaly_clip_lstm3_forward.3} parent=27 // loop_pre_header
              _
            $region30: #{anomaly_clip_lstm3_forward.3} parent=27 // loop_header
              %s48 = sphi 0, %s52
              %p49 = scmp.ge.s32.totalorder %s48, 1
              %s53 = sphi %s0, %s0
              %s54 = sphi [#allocation6], [#allocation6]
            $region31: #{anomaly_clip_lstm3_forward.3} parent=27 // loop_header_branch
              %51 = sbr.rel (%p49) target = $region35
            $region32: #{anomaly_clip_lstm3_forward.3} parent=27 // loop_body
              _
            $region33: #{anomaly_clip_lstm3_forward.3} parent=27 // loop_footer
              %s52 = sadd.s32 1, %s48
            $region34: #{anomaly_clip_lstm3_forward.3} parent=27 // loop_footer_branch
              %47 = sbr.rel target = $region30
            $region35: #{anomaly_clip_lstm3_forward.3} parent=27 // loop_exit
              _
            loop: start=0, step=1, limit=1
            $region36: #{anomaly_clip_lstm3_forward.3} parent=27 // loop_pre_header
              _
            $region37: #{anomaly_clip_lstm3_forward.3} parent=27 // loop_header
              %s57 = sphi 0, %s61
              %p58 = scmp.ge.s32.totalorder %s57, 1
              %s62 = sphi %s0, %s0
              %s63 = sphi [#allocation6], [#allocation6]
            $region38: #{anomaly_clip_lstm3_forward.3} parent=27 // loop_header_branch
              %60 = sbr.rel (%p58) target = $region42
            $region39: #{anomaly_clip_lstm3_forward.3} parent=27 // loop_body
              %v64 = vld [vmem:[%s62] sm:$0xf]
              %65 = vst [vmem:[%s63] sm:$0xf] %v64
              %v66 = vld [vmem:[%s62 + $0x8] sm:$0xf]
              %67 = vst [vmem:[%s63 + $0x4] sm:$0xf] %v66
              %v68 = vld [vmem:[%s62 + $0x10] sm:$0xf]
              %69 = vst [vmem:[%s63 + $0x8] sm:$0xf] %v68
              %v70 = vld [vmem:[%s62 + $0x18] sm:$0xf]
              %71 = vst [vmem:[%s63 + $0xc] sm:$0xf] %v70
              %v72 = vld [vmem:[%s62 + $0x20] sm:$0xf]
              %73 = vst [vmem:[%s63 + $0x10] sm:$0xf] %v72
              %v74 = vld [vmem:[%s62 + $0x28] sm:$0xf]
              %75 = vst [vmem:[%s63 + $0x14] sm:$0xf] %v74
              %v76 = vld [vmem:[%s62 + $0x30] sm:$0xf]
              %77 = vst [vmem:[%s63 + $0x18] sm:$0xf] %v76
              %v78 = vld [vmem:[%s62 + $0x38] sm:$0xf]
              %79 = vst [vmem:[%s63 + $0x1c] sm:$0xf] %v78
            $region40: #{anomaly_clip_lstm3_forward.3} parent=27 // loop_footer
              %s61 = sadd.s32 1, %s57
            $region41: #{anomaly_clip_lstm3_forward.3} parent=27 // loop_footer_branch
              %56 = sbr.rel target = $region37
            $region42: #{anomaly_clip_lstm3_forward.3} parent=27 // loop_exit
              _
          $region28: #{anomaly_clip_lstm3_forward.3} parent=12 // pred_fallthru
            _
        $region13: #{anomaly_clip_lstm3_forward.3} parent=8 // pred_fallthru
          _
        // Predicated region
        $region14: #{anomaly_clip_lstm3_forward.3} parent=8 // pred_check
          _
        $region15: #{anomaly_clip_lstm3_forward.3} parent=8 // pred_check_branch
          %19 = sbr.rel (0) target = $region17
        $region16: #{anomaly_clip_lstm3_forward.3} parent=8 // pred_region
          loop: start=0, step=1, limit=1
          $region18: #{anomaly_clip_lstm3_forward.3} parent=16 // loop_pre_header
            _
          $region19: #{anomaly_clip_lstm3_forward.3} parent=16 // loop_header
            %s22 = sphi 0, %s26
            %p23 = scmp.ge.s32.totalorder %s22, 1
            %s27 = sphi %s0, %s0
            %s28 = sphi [#allocation6], [#allocation6]
          $region20: #{anomaly_clip_lstm3_forward.3} parent=16 // loop_header_branch
            %25 = sbr.rel (%p23) target = $region24
          $region21: #{anomaly_clip_lstm3_forward.3} parent=16 // loop_body
            %v29 = vld [vmem:[%s27] sm:$0xf]
            %30 = vst [vmem:[%s28] sm:$0xf] %v29
            %v31 = vld [vmem:[%s27 + $0x8] sm:$0xf]
            %32 = vst [vmem:[%s28 + $0x4] sm:$0xf] %v31
            %v33 = vld [vmem:[%s27 + $0x10] sm:$0xf]
            %34 = vst [vmem:[%s28 + $0x8] sm:$0xf] %v33
            %v35 = vld [vmem:[%s27 + $0x18] sm:$0xf]
            %36 = vst [vmem:[%s28 + $0xc] sm:$0xf] %v35
            %v37 = vld [vmem:[%s27 + $0x20] sm:$0xf]
            %38 = vst [vmem:[%s28 + $0x10] sm:$0xf] %v37
            %v39 = vld [vmem:[%s27 + $0x28] sm:$0xf]
            %40 = vst [vmem:[%s28 + $0x14] sm:$0xf] %v39
            %v41 = vld [vmem:[%s27 + $0x30] sm:$0xf]
            %42 = vst [vmem:[%s28 + $0x18] sm:$0xf] %v41
            %v43 = vld [vmem:[%s27 + $0x38] sm:$0xf]
            %44 = vst [vmem:[%s28 + $0x1c] sm:$0xf] %v43
          $region22: #{anomaly_clip_lstm3_forward.3} parent=16 // loop_footer
            %s26 = sadd.s32 1, %s22
          $region23: #{anomaly_clip_lstm3_forward.3} parent=16 // loop_footer_branch
            %21 = sbr.rel target = $region19
          $region24: #{anomaly_clip_lstm3_forward.3} parent=16 // loop_exit
            _
        $region17: #{anomaly_clip_lstm3_forward.3} parent=8 // pred_fallthru
          _
      $region9: #{anomaly_clip_lstm3_forward.3} parent=4 // pred_fallthru
        _
      %80 = vnop
    $region5: #{anomaly_clip_lstm3_forward.3} parent=1 // pred_fallthru
      _
    // Predicated region
    $region43: #{anomaly_clip_lstm3_forward.3} parent=1 // pred_check
      _
    $region44: #{anomaly_clip_lstm3_forward.3} parent=1 // pred_check_branch
      %82 = sbr.rel (0) target = $region46
    $region45: #{anomaly_clip_lstm3_forward.3} parent=1 // pred_region
      %s83 = ssub.s32 0, 0
      %s84 = smul.u32 8, %s83
      %s85 = smul.addr %s84, 4
      %s86 = sadd.s32 2, %s85
      %s87 = smul.addr %s86, 2
      %s88 = scalar_lea.vmem %s1, %s87
      // Predicated region
      $region47: #{anomaly_clip_lstm3_forward.3} parent=45 // pred_check
        _
      $region48: #{anomaly_clip_lstm3_forward.3} parent=45 // pred_check_branch
        %90 = sbr.rel (0) target = $region50
      $region49: #{anomaly_clip_lstm3_forward.3} parent=45 // pred_region
        // Predicated region
        $region51: #{anomaly_clip_lstm3_forward.3} parent=49 // pred_check
          _
        $region52: #{anomaly_clip_lstm3_forward.3} parent=49 // pred_check_branch
          %92 = sbr.rel target = $region54
        $region53: #{anomaly_clip_lstm3_forward.3} parent=49 // pred_region
          // Predicated region
          $region66: #{anomaly_clip_lstm3_forward.3} parent=53 // pred_check
            _
          $region67: #{anomaly_clip_lstm3_forward.3} parent=53 // pred_check_branch
            %121 = sbr.rel (0) target = $region69
          $region68: #{anomaly_clip_lstm3_forward.3} parent=53 // pred_region
            loop: start=0, step=1, limit=1
            $region70: #{anomaly_clip_lstm3_forward.3} parent=68 // loop_pre_header
              _
            $region71: #{anomaly_clip_lstm3_forward.3} parent=68 // loop_header
              %s123 = sphi 0, %s127
              %p124 = scmp.ge.s32.totalorder %s123, 1
              %s128 = sphi %s88, %s88
              %s129 = sphi [#allocation7], [#allocation7]
            $region72: #{anomaly_clip_lstm3_forward.3} parent=68 // loop_header_branch
              %126 = sbr.rel (%p124) target = $region76
            $region73: #{anomaly_clip_lstm3_forward.3} parent=68 // loop_body
              _
            $region74: #{anomaly_clip_lstm3_forward.3} parent=68 // loop_footer
              %s127 = sadd.s32 1, %s123
            $region75: #{anomaly_clip_lstm3_forward.3} parent=68 // loop_footer_branch
              %122 = sbr.rel target = $region71
            $region76: #{anomaly_clip_lstm3_forward.3} parent=68 // loop_exit
              _
            loop: start=0, step=1, limit=1
            $region77: #{anomaly_clip_lstm3_forward.3} parent=68 // loop_pre_header
              _
            $region78: #{anomaly_clip_lstm3_forward.3} parent=68 // loop_header
              %s132 = sphi 0, %s136
              %p133 = scmp.ge.s32.totalorder %s132, 1
              %s137 = sphi %s88, %s88
              %s138 = sphi [#allocation7], [#allocation7]
            $region79: #{anomaly_clip_lstm3_forward.3} parent=68 // loop_header_branch
              %135 = sbr.rel (%p133) target = $region83
            $region80: #{anomaly_clip_lstm3_forward.3} parent=68 // loop_body
              %v139 = vld [vmem:[%s137] sm:$0xf]
              %140 = vst [vmem:[%s138] sm:$0xf] %v139
              %v141 = vld [vmem:[%s137 + $0x8] sm:$0xf]
              %142 = vst [vmem:[%s138 + $0x4] sm:$0xf] %v141
              %v143 = vld [vmem:[%s137 + $0x10] sm:$0xf]
              %144 = vst [vmem:[%s138 + $0x8] sm:$0xf] %v143
              %v145 = vld [vmem:[%s137 + $0x18] sm:$0xf]
              %146 = vst [vmem:[%s138 + $0xc] sm:$0xf] %v145
              %v147 = vld [vmem:[%s137 + $0x20] sm:$0xf]
              %148 = vst [vmem:[%s138 + $0x10] sm:$0xf] %v147
              %v149 = vld [vmem:[%s137 + $0x28] sm:$0xf]
              %150 = vst [vmem:[%s138 + $0x14] sm:$0xf] %v149
              %v151 = vld [vmem:[%s137 + $0x30] sm:$0xf]
              %152 = vst [vmem:[%s138 + $0x18] sm:$0xf] %v151
              %v153 = vld [vmem:[%s137 + $0x38] sm:$0xf]
              %154 = vst [vmem:[%s138 + $0x1c] sm:$0xf] %v153
            $region81: #{anomaly_clip_lstm3_forward.3} parent=68 // loop_footer
              %s136 = sadd.s32 1, %s132
            $region82: #{anomaly_clip_lstm3_forward.3} parent=68 // loop_footer_branch
              %131 = sbr.rel target = $region78
            $region83: #{anomaly_clip_lstm3_forward.3} parent=68 // loop_exit
              _
          $region69: #{anomaly_clip_lstm3_forward.3} parent=53 // pred_fallthru
            _
        $region54: #{anomaly_clip_lstm3_forward.3} parent=49 // pred_fallthru
          _
        // Predicated region
        $region55: #{anomaly_clip_lstm3_forward.3} parent=49 // pred_check
          _
        $region56: #{anomaly_clip_lstm3_forward.3} parent=49 // pred_check_branch
          %94 = sbr.rel (0) target = $region58
        $region57: #{anomaly_clip_lstm3_forward.3} parent=49 // pred_region
          loop: start=0, step=1, limit=1
          $region59: #{anomaly_clip_lstm3_forward.3} parent=57 // loop_pre_header
            _
          $region60: #{anomaly_clip_lstm3_forward.3} parent=57 // loop_header
            %s97 = sphi 0, %s101
            %p98 = scmp.ge.s32.totalorder %s97, 1
            %s102 = sphi %s88, %s88
            %s103 = sphi [#allocation7], [#allocation7]
          $region61: #{anomaly_clip_lstm3_forward.3} parent=57 // loop_header_branch
            %100 = sbr.rel (%p98) target = $region65
          $region62: #{anomaly_clip_lstm3_forward.3} parent=57 // loop_body
            %v104 = vld [vmem:[%s102] sm:$0xf]
            %105 = vst [vmem:[%s103] sm:$0xf] %v104
            %v106 = vld [vmem:[%s102 + $0x8] sm:$0xf]
            %107 = vst [vmem:[%s103 + $0x4] sm:$0xf] %v106
            %v108 = vld [vmem:[%s102 + $0x10] sm:$0xf]
            %109 = vst [vmem:[%s103 + $0x8] sm:$0xf] %v108
            %v110 = vld [vmem:[%s102 + $0x18] sm:$0xf]
            %111 = vst [vmem:[%s103 + $0xc] sm:$0xf] %v110
            %v112 = vld [vmem:[%s102 + $0x20] sm:$0xf]
            %113 = vst [vmem:[%s103 + $0x10] sm:$0xf] %v112
            %v114 = vld [vmem:[%s102 + $0x28] sm:$0xf]
            %115 = vst [vmem:[%s103 + $0x14] sm:$0xf] %v114
            %v116 = vld [vmem:[%s102 + $0x30] sm:$0xf]
            %117 = vst [vmem:[%s103 + $0x18] sm:$0xf] %v116
            %v118 = vld [vmem:[%s102 + $0x38] sm:$0xf]
            %119 = vst [vmem:[%s103 + $0x1c] sm:$0xf] %v118
          $region63: #{anomaly_clip_lstm3_forward.3} parent=57 // loop_footer
            %s101 = sadd.s32 1, %s97
          $region64: #{anomaly_clip_lstm3_forward.3} parent=57 // loop_footer_branch
            %96 = sbr.rel target = $region60
          $region65: #{anomaly_clip_lstm3_forward.3} parent=57 // loop_exit
            _
        $region58: #{anomaly_clip_lstm3_forward.3} parent=49 // pred_fallthru
          _
      $region50: #{anomaly_clip_lstm3_forward.3} parent=45 // pred_fallthru
        _
      %155 = vnop
    $region46: #{anomaly_clip_lstm3_forward.3} parent=1 // pred_fallthru
      _
    // Predicated region
    $region84: #{anomaly_clip_lstm3_forward.3} parent=1 // pred_check
      _
    $region85: #{anomaly_clip_lstm3_forward.3} parent=1 // pred_check_branch
      %157 = sbr.rel (0) target = $region87
    $region86: #{anomaly_clip_lstm3_forward.3} parent=1 // pred_region
      _
    $region87: #{anomaly_clip_lstm3_forward.3} parent=1 // pred_fallthru
      _
    // Predicated region
    $region88: #{anomaly_clip_lstm3_forward.3} parent=1 // pred_check
      _
    $region89: #{anomaly_clip_lstm3_forward.3} parent=1 // pred_check_branch
      %159 = sbr.rel (0) target = $region91
    $region90: #{anomaly_clip_lstm3_forward.3} parent=1 // pred_region
      _
    $region91: #{anomaly_clip_lstm3_forward.3} parent=1 // pred_fallthru
      _
    // Predicated region
    $region92: #{anomaly_clip_lstm3_forward.3} parent=1 // pred_check
      _
    $region93: #{anomaly_clip_lstm3_forward.3} parent=1 // pred_check_branch
      %161 = sbr.rel (0) target = $region95
    $region94: #{anomaly_clip_lstm3_forward.3} parent=1 // pred_region
      _
    $region95: #{anomaly_clip_lstm3_forward.3} parent=1 // pred_fallthru
      _
    // Predicated region
    $region96: #{anomaly_clip_lstm3_forward.3} parent=1 // pred_check
      _
    $region97: #{anomaly_clip_lstm3_forward.3} parent=1 // pred_check_branch
      %163 = sbr.rel (0) target = $region99
    $region98: #{anomaly_clip_lstm3_forward.3} parent=1 // pred_region
      _
    $region99: #{anomaly_clip_lstm3_forward.3} parent=1 // pred_fallthru
      _
    // Predicated region
    $region100: #{anomaly_clip_lstm3_forward.3} parent=1 // pred_check
      _
    $region101: #{anomaly_clip_lstm3_forward.3} parent=1 // pred_check_branch
      %165 = sbr.rel (0) target = $region103
    $region102: #{anomaly_clip_lstm3_forward.3} parent=1 // pred_region
      _
    $region103: #{anomaly_clip_lstm3_forward.3} parent=1 // pred_fallthru
      _
    // Predicated region
    $region104: #{anomaly_clip_lstm3_forward.3} parent=1 // pred_check
      _
    $region105: #{anomaly_clip_lstm3_forward.3} parent=1 // pred_check_branch
      %167 = sbr.rel (0) target = $region107
    $region106: #{anomaly_clip_lstm3_forward.3} parent=1 // pred_region
      _
    $region107: #{anomaly_clip_lstm3_forward.3} parent=1 // pred_fallthru
      _
    %s168 = ssub.s32 0, 0
    %s169 = smul.u32 8, %s168
    %p170 = scmp.eq.s32.totalorder 0, 0
    // Predicated region
    $region108: #{anomaly_clip_lstm3_forward.3} parent=1 // pred_check
      %p171 = pneg %p170
    $region109: #{anomaly_clip_lstm3_forward.3} parent=1 // pred_check_branch
      %173 = sbr.rel (%p171) target = $region111
    $region110: #{anomaly_clip_lstm3_forward.3} parent=1 // pred_region
      %vm174 = vcmask 517120
      %175 = vst.msk [vmem:[#allocation2] sm:$0x3] %vm174, 0.0
      %176 = vst.msk [vmem:[#allocation3] sm:$0x3] %vm174, 0.0
      %177 = vst.msk [vmem:[#allocation4] sm:$0x3] %vm174, 0.0
      %178 = vst.msk [vmem:[#allocation5] sm:$0x3] %vm174, 0.0
    $region111: #{anomaly_clip_lstm3_forward.3} parent=1 // pred_fallthru
      _
    %v179 = vld [vmem:[%s2] sm:$0xff]
    %v180 = vld [vmem:[%s2 + $0x8] sm:$0xff]
    %v181 = vld [vmem:[%s2 + $0x10] sm:$0xff]
    %v182 = vld [vmem:[%s2 + $0x18] sm:$0xff]
    %v183 = vld [vmem:[%s2 + $0x20] sm:$0xff]
    %v184 = vld [vmem:[%s2 + $0x28] sm:$0xff]
    %v185 = vld [vmem:[%s2 + $0x30] sm:$0xff]
    %v186 = vld [vmem:[%s2 + $0x38] sm:$0xff]
    %v187 = vld [vmem:[%s2 + $0x40] sm:$0xff]
    %v188 = vld [vmem:[%s2 + $0x48] sm:$0xff]
    %v189 = vld [vmem:[%s2 + $0x50] sm:$0xff]
    %v190 = vld [vmem:[%s2 + $0x58] sm:$0xff]
    %v191 = vld [vmem:[%s2 + $0x60] sm:$0xff]
    %v192 = vld [vmem:[%s2 + $0x68] sm:$0xff]
    %v193 = vld [vmem:[%s2 + $0x70] sm:$0xff]
    %v194 = vld [vmem:[%s2 + $0x78] sm:$0xff]
    %v195 = vld [vmem:[%s3] sm:$0xff]
    %v196 = vld [vmem:[%s3 + $0x8] sm:$0xff]
    %v197 = vld [vmem:[%s3 + $0x10] sm:$0xff]
    %v198 = vld [vmem:[%s3 + $0x18] sm:$0xff]
    %v199 = vld [vmem:[%s3 + $0x20] sm:$0xff]
    %v200 = vld [vmem:[%s3 + $0x28] sm:$0xff]
    %v201 = vld [vmem:[%s3 + $0x30] sm:$0xff]
    %v202 = vld [vmem:[%s3 + $0x38] sm:$0xff]
    %v203 = vld [vmem:[%s3 + $0x40] sm:$0xff]
    %v204 = vld [vmem:[%s3 + $0x48] sm:$0xff]
    %v205 = vld [vmem:[%s3 + $0x50] sm:$0xff]
    %v206 = vld [vmem:[%s3 + $0x58] sm:$0xff]
    %v207 = vld [vmem:[%s3 + $0x60] sm:$0xff]
    %v208 = vld [vmem:[%s3 + $0x68] sm:$0xff]
    %v209 = vld [vmem:[%s3 + $0x70] sm:$0xff]
    %v210 = vld [vmem:[%s3 + $0x78] sm:$0xff]
    %v211 = vld [vmem:[#allocation2] sm:$0x3]
    %v212 = vld [vmem:[#allocation3] sm:$0x3]
    %v213 = vld [vmem:[#allocation4] sm:$0x3]
    %v214 = vld [vmem:[#allocation5] sm:$0x3]
    %vm215 = vcmask 523264
    %v217 = vsel %vm215, %v211, 0
    %219 = vmatprep.subr.mxu0 %v180
    %220 = vmatpush1.msra.mxu0 %v179
    %221 = vmatprep.subr.mxu0 %v182
    %222 = vmatpush1.msra.mxu0 %v181
    %223 = vmatprep.subr.mxu0 %v184
    %224 = vmatpush1.msra.mxu0 %v183
    %225 = vmatprep.subr.mxu0 %v186
    %226 = vmatpush1.msra.mxu0 %v185
    %227 = vmatprep.subr.mxu0 %v188
    %228 = vmatpush1.msra.mxu0 %v187
    %229 = vmatprep.subr.mxu0 %v190
    %230 = vmatpush1.msra.mxu0 %v189
    %231 = vmatprep.subr.mxu0 %v192
    %232 = vmatpush1.msra.mxu0 %v191
    %233 = vmatprep.subr.mxu0 %v194
    %234 = vmatpush1.msra.mxu0 %v193
    %235 = vmatprep.subr.mxu0 0.0
    %236 = vmatpush1.msra.mxu0 0.0
    %237 = vmatprep.subr.mxu0 0.0
    %238 = vmatpush1.msra.mxu0 0.0
    %239 = vmatprep.subr.mxu0 0.0
    %240 = vmatpush1.msra.mxu0 0.0
    %241 = vmatprep.subr.mxu0 0.0
    %242 = vmatpush1.msra.mxu0 0.0
    %243 = vmatprep.subr.mxu0 0.0
    %244 = vmatpush1.msra.mxu0 0.0
    %245 = vmatprep.subr.mxu0 0.0
    %246 = vmatpush1.msra.mxu0 0.0
    %247 = vmatprep.subr.mxu0 0.0
    %248 = vmatpush1.msra.mxu0 0.0
    %249 = vmatprep.subr.mxu0 0.0
    %250 = vmatpush1.msra.mxu0 0.0
    %251 = vmatprep.subr.mxu0 0.0
    %252 = vmatpush1.msra.mxu0 0.0
    %253 = vmatprep.subr.mxu0 0.0
    %254 = vmatpush1.msra.mxu0 0.0
    %255 = vmatprep.subr.mxu0 0.0
    %256 = vmatpush1.msra.mxu0 0.0
    %257 = vmatprep.subr.mxu0 0.0
    %258 = vmatpush1.msra.mxu0 0.0
    %259 = vmatprep.subr.mxu0 0.0
    %260 = vmatpush1.msra.mxu0 0.0
    %261 = vmatprep.subr.mxu0 0.0
    %262 = vmatpush1.msra.mxu0 0.0
    %263 = vmatprep.subr.mxu0 0.0
    %264 = vmatpush1.msra.mxu0 0.0
    %265 = vmatprep.subr.mxu0 0.0
    %266 = vmatpush1.msra.mxu0 0.0
    %267 = vmatprep.subr.mxu0 0.0
    %268 = vmatpush1.msra.mxu0 0.0
    %269 = vmatprep.subr.mxu0 0.0
    %270 = vmatpush1.msra.mxu0 0.0
    %271 = vmatprep.subr.mxu0 0.0
    %272 = vmatpush1.msra.mxu0 0.0
    %273 = vmatprep.subr.mxu0 0.0
    %274 = vmatpush1.msra.mxu0 0.0
    %275 = vmatprep.subr.mxu0 0.0
    %276 = vmatpush1.msra.mxu0 0.0
    %277 = vmatprep.subr.mxu0 0.0
    %278 = vmatpush1.msra.mxu0 0.0
    %279 = vmatprep.subr.mxu0 0.0
    %280 = vmatpush1.msra.mxu0 0.0
    %281 = vmatprep.subr.mxu0 0.0
    %282 = vmatpush1.msra.mxu0 0.0
    %283 = vmatprep.mubr.f32.mxu0 0.0
    %284 = vmatmul.mubr.f32.gmra.mrb[0].mxu0 %v217
    %v285 = vpop.f32.mrb[0].mxu0
    %v286 = vadd.f32 0.0, %v285
    %v287 = vpop.f32.mrb[0].mxu0
    %v288 = vadd.f32 0.0, %v287
    %289 = vdwg.mxu0
    %v291 = vsel %vm215, %v212, 0
    %293 = vmatprep.subr.mxu0 %v196
    %294 = vmatpush1.msra.mxu0 %v195
    %295 = vmatprep.subr.mxu0 %v198
    %296 = vmatpush1.msra.mxu0 %v197
    %297 = vmatprep.subr.mxu0 %v200
    %298 = vmatpush1.msra.mxu0 %v199
    %299 = vmatprep.subr.mxu0 %v202
    %300 = vmatpush1.msra.mxu0 %v201
    %301 = vmatprep.subr.mxu0 %v204
    %302 = vmatpush1.msra.mxu0 %v203
    %303 = vmatprep.subr.mxu0 %v206
    %304 = vmatpush1.msra.mxu0 %v205
    %305 = vmatprep.subr.mxu0 %v208
    %306 = vmatpush1.msra.mxu0 %v207
    %307 = vmatprep.subr.mxu0 %v210
    %308 = vmatpush1.msra.mxu0 %v209
    %309 = vmatprep.subr.mxu0 0.0
    %310 = vmatpush1.msra.mxu0 0.0
    %311 = vmatprep.subr.mxu0 0.0
    %312 = vmatpush1.msra.mxu0 0.0
    %313 = vmatprep.subr.mxu0 0.0
    %314 = vmatpush1.msra.mxu0 0.0
    %315 = vmatprep.subr.mxu0 0.0
    %316 = vmatpush1.msra.mxu0 0.0
    %317 = vmatprep.subr.mxu0 0.0
    %318 = vmatpush1.msra.mxu0 0.0
    %319 = vmatprep.subr.mxu0 0.0
    %320 = vmatpush1.msra.mxu0 0.0
    %321 = vmatprep.subr.mxu0 0.0
    %322 = vmatpush1.msra.mxu0 0.0
    %323 = vmatprep.subr.mxu0 0.0
    %324 = vmatpush1.msra.mxu0 0.0
    %325 = vmatprep.subr.mxu0 0.0
    %326 = vmatpush1.msra.mxu0 0.0
    %327 = vmatprep.subr.mxu0 0.0
    %328 = vmatpush1.msra.mxu0 0.0
    %329 = vmatprep.subr.mxu0 0.0
    %330 = vmatpush1.msra.mxu0 0.0
    %331 = vmatprep.subr.mxu0 0.0
    %332 = vmatpush1.msra.mxu0 0.0
    %333 = vmatprep.subr.mxu0 0.0
    %334 = vmatpush1.msra.mxu0 0.0
    %335 = vmatprep.subr.mxu0 0.0
    %336 = vmatpush1.msra.mxu0 0.0
    %337 = vmatprep.subr.mxu0 0.0
    %338 = vmatpush1.msra.mxu0 0.0
    %339 = vmatprep.subr.mxu0 0.0
    %340 = vmatpush1.msra.mxu0 0.0
    %341 = vmatprep.subr.mxu0 0.0
    %342 = vmatpush1.msra.mxu0 0.0
    %343 = vmatprep.subr.mxu0 0.0
    %344 = vmatpush1.msra.mxu0 0.0
    %345 = vmatprep.subr.mxu0 0.0
    %346 = vmatpush1.msra.mxu0 0.0
    %347 = vmatprep.subr.mxu0 0.0
    %348 = vmatpush1.msra.mxu0 0.0
    %349 = vmatprep.subr.mxu0 0.0
    %350 = vmatpush1.msra.mxu0 0.0
    %351 = vmatprep.subr.mxu0 0.0
    %352 = vmatpush1.msra.mxu0 0.0
    %353 = vmatprep.subr.mxu0 0.0
    %354 = vmatpush1.msra.mxu0 0.0
    %355 = vmatprep.subr.mxu0 0.0
    %356 = vmatpush1.msra.mxu0 0.0
    %357 = vmatprep.mubr.f32.mxu0 0.0
    %358 = vmatmul.mubr.f32.gmra.mrb[0].mxu0 %v291
    %v359 = vpop.f32.mrb[0].mxu0
    %v360 = vadd.f32 0.0, %v359
    %v361 = vpop.f32.mrb[0].mxu0
    %v362 = vadd.f32 0.0, %v361
    %363 = vdwg.mxu0
    %v364 = vld [vmem:[#allocation6] sm:$0xf]
    %v367 = vcombine.low %v286, %v288
    %v369 = vunpack.c.l.s4 1983009808
    %v370 = vunpack.c.0.s8 %v369
    %v371 = vlaneseq
    %v372 = vshrl.u32 %v371, 7
    %v373 = vsub.s32 %v370, %v372
    %v374 = vrot.slane %v367, %v373
    %v376 = vadd.f32 %v364, %v374
    %s377 = scalar_lea.vmem [#allocation7], 28
    %v378 = vld [vmem:[%s377] sm:$0xf]
    %v381 = vcombine.low %v360, %v362
    %v383 = vunpack.c.l.s4 1983009808
    %v384 = vunpack.c.0.s8 %v383
    %v385 = vlaneseq
    %v386 = vshrl.u32 %v385, 7
    %v387 = vsub.s32 %v384, %v386
    %v388 = vrot.slane %v381, %v387
    %v390 = vadd.f32 %v378, %v388
    %v391 = vxor.u32 %v376, 2147483648
    %v392 = vmul.f32 %v391, 1.442695
    %v393 = vpow.pop %v392
    %v394 = vadd.f32 %v393, 1.0
    %v395 = vrcp.pop %v394
    %v396 = vmul.f32 1.0, %v395
    %v397 = vxor.u32 %v390, 2147483648
    %v398 = vmul.f32 %v397, 1.442695
    %v399 = vpow.pop %v398
    %v400 = vadd.f32 %v399, 1.0
    %v401 = vrcp.pop %v400
    %v402 = vmul.f32 1.0, %v401
    %404 = vrot.lane.b32.xlu0 %v376, 64
    %v405 = vpop.permute.xlu0 %404
    %v406 = vrot.slane %v405, 2
    %v408 = vtanh.pop %v406
    %410 = vrot.lane.b32.xlu0 %v390, 64
    %v411 = vpop.permute.xlu0 %410
    %v412 = vrot.slane %v411, 2
    %v414 = vtanh.pop %v412
    %v417 = vunpack.c.l.s4 1983009808
    %v418 = vunpack.c.0.s8 %v417
    %v419 = vlaneseq
    %v420 = vshrl.u32 %v419, 7
    %v421 = vsub.s32 %v418, %v420
    %v422 = vrot.slane %v213, %v421
    %423 = vrot.lane.b32.xlu0 %v422, 64
    %v424 = vpop.permute.xlu0 %423
    %v426 = vmul.f32 %v396, %v424
    %v427 = vmul.f32 %v396, %v408
    %429 = vrot.lane.b32.xlu0 %v427, 64
    %v430 = vpop.permute.xlu0 %429
    %v432 = vadd.f32 %v426, %v430
    %v435 = vunpack.c.l.s4 1983009808
    %v436 = vunpack.c.0.s8 %v435
    %v437 = vlaneseq
    %v438 = vshrl.u32 %v437, 7
    %v439 = vsub.s32 %v436, %v438
    %v440 = vrot.slane %v214, %v439
    %441 = vrot.lane.b32.xlu0 %v440, 64
    %v442 = vpop.permute.xlu0 %441
    %v444 = vmul.f32 %v402, %v442
    %v445 = vmul.f32 %v402, %v414
    %447 = vrot.lane.b32.xlu0 %v445, 64
    %v448 = vpop.permute.xlu0 %447
    %v450 = vadd.f32 %v444, %v448
    %v451 = vtanh.pop %v432
    %v453 = vrot.slane %v396, 2
    %456 = vrot.lane.b32.xlu0 %v451, 64
    %v457 = vpop.permute.xlu0 %456
    %v459 = vmul.f32 %v453, %v457
    %v460 = vtanh.pop %v450
    %v462 = vrot.slane %v402, 2
    %465 = vrot.lane.b32.xlu0 %v460, 64
    %v466 = vpop.permute.xlu0 %465
    %v468 = vmul.f32 %v462, %v466
    %v470 = vsel %vm215, %v459, 0
    %472 = vmatprep.subr.mxu0 %v180
    %473 = vmatpush1.msra.mxu0 %v179
    %474 = vmatprep.subr.mxu0 %v182
    %475 = vmatpush1.msra.mxu0 %v181
    %476 = vmatprep.subr.mxu0 %v184
    %477 = vmatpush1.msra.mxu0 %v183
    %478 = vmatprep.subr.mxu0 %v186
    %479 = vmatpush1.msra.mxu0 %v185
    %480 = vmatprep.subr.mxu0 %v188
    %481 = vmatpush1.msra.mxu0 %v187
    %482 = vmatprep.subr.mxu0 %v190
    %483 = vmatpush1.msra.mxu0 %v189
    %484 = vmatprep.subr.mxu0 %v192
    %485 = vmatpush1.msra.mxu0 %v191
    %486 = vmatprep.subr.mxu0 %v194
    %487 = vmatpush1.msra.mxu0 %v193
    %488 = vmatprep.subr.mxu0 0.0
    %489 = vmatpush1.msra.mxu0 0.0
    %490 = vmatprep.subr.mxu0 0.0
    %491 = vmatpush1.msra.mxu0 0.0
    %492 = vmatprep.subr.mxu0 0.0
    %493 = vmatpush1.msra.mxu0 0.0
    %494 = vmatprep.subr.mxu0 0.0
    %495 = vmatpush1.msra.mxu0 0.0
    %496 = vmatprep.subr.mxu0 0.0
    %497 = vmatpush1.msra.mxu0 0.0
    %498 = vmatprep.subr.mxu0 0.0
    %499 = vmatpush1.msra.mxu0 0.0
    %500 = vmatprep.subr.mxu0 0.0
    %501 = vmatpush1.msra.mxu0 0.0
    %502 = vmatprep.subr.mxu0 0.0
    %503 = vmatpush1.msra.mxu0 0.0
    %504 = vmatprep.subr.mxu0 0.0
    %505 = vmatpush1.msra.mxu0 0.0
    %506 = vmatprep.subr.mxu0 0.0
    %507 = vmatpush1.msra.mxu0 0.0
    %508 = vmatprep.subr.mxu0 0.0
    %509 = vmatpush1.msra.mxu0 0.0
    %510 = vmatprep.subr.mxu0 0.0
    %511 = vmatpush1.msra.mxu0 0.0
    %512 = vmatprep.subr.mxu0 0.0
    %513 = vmatpush1.msra.mxu0 0.0
    %514 = vmatprep.subr.mxu0 0.0
    %515 = vmatpush1.msra.mxu0 0.0
    %516 = vmatprep.subr.mxu0 0.0
    %517 = vmatpush1.msra.mxu0 0.0
    %518 = vmatprep.subr.mxu0 0.0
    %519 = vmatpush1.msra.mxu0 0.0
    %520 = vmatprep.subr.mxu0 0.0
    %521 = vmatpush1.msra.mxu0 0.0
    %522 = vmatprep.subr.mxu0 0.0
    %523 = vmatpush1.msra.mxu0 0.0
    %524 = vmatprep.subr.mxu0 0.0
    %525 = vmatpush1.msra.mxu0 0.0
    %526 = vmatprep.subr.mxu0 0.0
    %527 = vmatpush1.msra.mxu0 0.0
    %528 = vmatprep.subr.mxu0 0.0
    %529 = vmatpush1.msra.mxu0 0.0
    %530 = vmatprep.subr.mxu0 0.0
    %531 = vmatpush1.msra.mxu0 0.0
    %532 = vmatprep.subr.mxu0 0.0
    %533 = vmatpush1.msra.mxu0 0.0
    %534 = vmatprep.subr.mxu0 0.0
    %535 = vmatpush1.msra.mxu0 0.0
    %536 = vmatprep.mubr.f32.mxu0 0.0
    %537 = vmatmul.mubr.f32.gmra.mrb[0].mxu0 %v470
    %v538 = vpop.f32.mrb[0].mxu0
    %v539 = vadd.f32 0.0, %v538
    %v540 = vpop.f32.mrb[0].mxu0
    %v541 = vadd.f32 0.0, %v540
    %542 = vdwg.mxu0
    %v544 = vsel %vm215, %v468, 0
    %546 = vmatprep.subr.mxu0 %v196
    %547 = vmatpush1.msra.mxu0 %v195
    %548 = vmatprep.subr.mxu0 %v198
    %549 = vmatpush1.msra.mxu0 %v197
    %550 = vmatprep.subr.mxu0 %v200
    %551 = vmatpush1.msra.mxu0 %v199
    %552 = vmatprep.subr.mxu0 %v202
    %553 = vmatpush1.msra.mxu0 %v201
    %554 = vmatprep.subr.mxu0 %v204
    %555 = vmatpush1.msra.mxu0 %v203
    %556 = vmatprep.subr.mxu0 %v206
    %557 = vmatpush1.msra.mxu0 %v205
    %558 = vmatprep.subr.mxu0 %v208
    %559 = vmatpush1.msra.mxu0 %v207
    %560 = vmatprep.subr.mxu0 %v210
    %561 = vmatpush1.msra.mxu0 %v209
    %562 = vmatprep.subr.mxu0 0.0
    %563 = vmatpush1.msra.mxu0 0.0
    %564 = vmatprep.subr.mxu0 0.0
    %565 = vmatpush1.msra.mxu0 0.0
    %566 = vmatprep.subr.mxu0 0.0
    %567 = vmatpush1.msra.mxu0 0.0
    %568 = vmatprep.subr.mxu0 0.0
    %569 = vmatpush1.msra.mxu0 0.0
    %570 = vmatprep.subr.mxu0 0.0
    %571 = vmatpush1.msra.mxu0 0.0
    %572 = vmatprep.subr.mxu0 0.0
    %573 = vmatpush1.msra.mxu0 0.0
    %574 = vmatprep.subr.mxu0 0.0
    %575 = vmatpush1.msra.mxu0 0.0
    %576 = vmatprep.subr.mxu0 0.0
    %577 = vmatpush1.msra.mxu0 0.0
    %578 = vmatprep.subr.mxu0 0.0
    %579 = vmatpush1.msra.mxu0 0.0
    %580 = vmatprep.subr.mxu0 0.0
    %581 = vmatpush1.msra.mxu0 0.0
    %582 = vmatprep.subr.mxu0 0.0
    %583 = vmatpush1.msra.mxu0 0.0
    %584 = vmatprep.subr.mxu0 0.0
    %585 = vmatpush1.msra.mxu0 0.0
    %586 = vmatprep.subr.mxu0 0.0
    %587 = vmatpush1.msra.mxu0 0.0
    %588 = vmatprep.subr.mxu0 0.0
    %589 = vmatpush1.msra.mxu0 0.0
    %590 = vmatprep.subr.mxu0 0.0
    %591 = vmatpush1.msra.mxu0 0.0
    %592 = vmatprep.subr.mxu0 0.0
    %593 = vmatpush1.msra.mxu0 0.0
    %594 = vmatprep.subr.mxu0 0.0
    %595 = vmatpush1.msra.mxu0 0.0
    %596 = vmatprep.subr.mxu0 0.0
    %597 = vmatpush1.msra.mxu0 0.0
    %598 = vmatprep.subr.mxu0 0.0
    %599 = vmatpush1.msra.mxu0 0.0
    %600 = vmatprep.subr.mxu0 0.0
    %601 = vmatpush1.msra.mxu0 0.0
    %602 = vmatprep.subr.mxu0 0.0
    %603 = vmatpush1.msra.mxu0 0.0
    %604 = vmatprep.subr.mxu0 0.0
    %605 = vmatpush1.msra.mxu0 0.0
    %606 = vmatprep.subr.mxu0 0.0
    %607 = vmatpush1.msra.mxu0 0.0
    %608 = vmatprep.subr.mxu0 0.0
    %609 = vmatpush1.msra.mxu0 0.0
    %610 = vmatprep.mubr.f32.mxu0 0.0
    %611 = vmatmul.mubr.f32.gmra.mrb[0].mxu0 %v544
    %v612 = vpop.f32.mrb[0].mxu0
    %v613 = vadd.f32 0.0, %v612
    %v614 = vpop.f32.mrb[0].mxu0
    %v615 = vadd.f32 0.0, %v614
    %616 = vdwg.mxu0
    %s617 = scalar_lea.vmem [#allocation6], 4
    %v618 = vld [vmem:[%s617] sm:$0xf]
    %v621 = vcombine.low %v539, %v541
    %v623 = vunpack.c.l.s4 1983009808
    %v624 = vunpack.c.0.s8 %v623
    %v625 = vlaneseq
    %v626 = vshrl.u32 %v625, 7
    %v627 = vsub.s32 %v624, %v626
    %v628 = vrot.slane %v621, %v627
    %v630 = vadd.f32 %v618, %v628
    %s631 = scalar_lea.vmem [#allocation7], 24
    %v632 = vld [vmem:[%s631] sm:$0xf]
    %v635 = vcombine.low %v613, %v615
    %v637 = vunpack.c.l.s4 1983009808
    %v638 = vunpack.c.0.s8 %v637
    %v639 = vlaneseq
    %v640 = vshrl.u32 %v639, 7
    %v641 = vsub.s32 %v638, %v640
    %v642 = vrot.slane %v635, %v641
    %v644 = vadd.f32 %v632, %v642
    %v645 = vxor.u32 %v630, 2147483648
    %v646 = vmul.f32 %v645, 1.442695
    %v647 = vpow.pop %v646
    %v648 = vadd.f32 %v647, 1.0
    %v649 = vrcp.pop %v648
    %v650 = vmul.f32 1.0, %v649
    %v651 = vxor.u32 %v644, 2147483648
    %v652 = vmul.f32 %v651, 1.442695
    %v653 = vpow.pop %v652
    %v654 = vadd.f32 %v653, 1.0
    %v655 = vrcp.pop %v654
    %v656 = vmul.f32 1.0, %v655
    %658 = vrot.lane.b32.xlu0 %v630, 64
    %v659 = vpop.permute.xlu0 %658
    %v660 = vrot.slane %v659, 2
    %v662 = vtanh.pop %v660
    %664 = vrot.lane.b32.xlu0 %v644, 64
    %v665 = vpop.permute.xlu0 %664
    %v666 = vrot.slane %v665, 2
    %v668 = vtanh.pop %v666
    %v669 = vmul.f32 %v650, %v432
    %v670 = vmul.f32 %v650, %v662
    %672 = vrot.lane.b32.xlu0 %v670, 64
    %v673 = vpop.permute.xlu0 %672
    %v675 = vadd.f32 %v669, %v673
    %v676 = vmul.f32 %v656, %v450
    %v677 = vmul.f32 %v656, %v668
    %679 = vrot.lane.b32.xlu0 %v677, 64
    %v680 = vpop.permute.xlu0 %679
    %v682 = vadd.f32 %v676, %v680
    %v683 = vtanh.pop %v675
    %v685 = vrot.slane %v650, 2
    %688 = vrot.lane.b32.xlu0 %v683, 64
    %v689 = vpop.permute.xlu0 %688
    %v691 = vmul.f32 %v685, %v689
    %v692 = vtanh.pop %v682
    %v694 = vrot.slane %v656, 2
    %697 = vrot.lane.b32.xlu0 %v692, 64
    %v698 = vpop.permute.xlu0 %697
    %v700 = vmul.f32 %v694, %v698
    %v702 = vsel %vm215, %v691, 0
    %704 = vmatprep.subr.mxu0 %v180
    %705 = vmatpush1.msra.mxu0 %v179
    %706 = vmatprep.subr.mxu0 %v182
    %707 = vmatpush1.msra.mxu0 %v181
    %708 = vmatprep.subr.mxu0 %v184
    %709 = vmatpush1.msra.mxu0 %v183
    %710 = vmatprep.subr.mxu0 %v186
    %711 = vmatpush1.msra.mxu0 %v185
    %712 = vmatprep.subr.mxu0 %v188
    %713 = vmatpush1.msra.mxu0 %v187
    %714 = vmatprep.subr.mxu0 %v190
    %715 = vmatpush1.msra.mxu0 %v189
    %716 = vmatprep.subr.mxu0 %v192
    %717 = vmatpush1.msra.mxu0 %v191
    %718 = vmatprep.subr.mxu0 %v194
    %719 = vmatpush1.msra.mxu0 %v193
    %720 = vmatprep.subr.mxu0 0.0
    %721 = vmatpush1.msra.mxu0 0.0
    %722 = vmatprep.subr.mxu0 0.0
    %723 = vmatpush1.msra.mxu0 0.0
    %724 = vmatprep.subr.mxu0 0.0
    %725 = vmatpush1.msra.mxu0 0.0
    %726 = vmatprep.subr.mxu0 0.0
    %727 = vmatpush1.msra.mxu0 0.0
    %728 = vmatprep.subr.mxu0 0.0
    %729 = vmatpush1.msra.mxu0 0.0
    %730 = vmatprep.subr.mxu0 0.0
    %731 = vmatpush1.msra.mxu0 0.0
    %732 = vmatprep.subr.mxu0 0.0
    %733 = vmatpush1.msra.mxu0 0.0
    %734 = vmatprep.subr.mxu0 0.0
    %735 = vmatpush1.msra.mxu0 0.0
    %736 = vmatprep.subr.mxu0 0.0
    %737 = vmatpush1.msra.mxu0 0.0
    %738 = vmatprep.subr.mxu0 0.0
    %739 = vmatpush1.msra.mxu0 0.0
    %740 = vmatprep.subr.mxu0 0.0
    %741 = vmatpush1.msra.mxu0 0.0
    %742 = vmatprep.subr.mxu0 0.0
    %743 = vmatpush1.msra.mxu0 0.0
    %744 = vmatprep.subr.mxu0 0.0
    %745 = vmatpush1.msra.mxu0 0.0
    %746 = vmatprep.subr.mxu0 0.0
    %747 = vmatpush1.msra.mxu0 0.0
    %748 = vmatprep.subr.mxu0 0.0
    %749 = vmatpush1.msra.mxu0 0.0
    %750 = vmatprep.subr.mxu0 0.0
    %751 = vmatpush1.msra.mxu0 0.0
    %752 = vmatprep.subr.mxu0 0.0
    %753 = vmatpush1.msra.mxu0 0.0
    %754 = vmatprep.subr.mxu0 0.0
    %755 = vmatpush1.msra.mxu0 0.0
    %756 = vmatprep.subr.mxu0 0.0
    %757 = vmatpush1.msra.mxu0 0.0
    %758 = vmatprep.subr.mxu0 0.0
    %759 = vmatpush1.msra.mxu0 0.0
    %760 = vmatprep.subr.mxu0 0.0
    %761 = vmatpush1.msra.mxu0 0.0
    %762 = vmatprep.subr.mxu0 0.0
    %763 = vmatpush1.msra.mxu0 0.0
    %764 = vmatprep.subr.mxu0 0.0
    %765 = vmatpush1.msra.mxu0 0.0
    %766 = vmatprep.subr.mxu0 0.0
    %767 = vmatpush1.msra.mxu0 0.0
    %768 = vmatprep.mubr.f32.mxu0 0.0
    %769 = vmatmul.mubr.f32.gmra.mrb[0].mxu0 %v702
    %v770 = vpop.f32.mrb[0].mxu0
    %v771 = vadd.f32 0.0, %v770
    %v772 = vpop.f32.mrb[0].mxu0
    %v773 = vadd.f32 0.0, %v772
    %774 = vdwg.mxu0
    %v776 = vsel %vm215, %v700, 0
    %778 = vmatprep.subr.mxu0 %v196
    %779 = vmatpush1.msra.mxu0 %v195
    %780 = vmatprep.subr.mxu0 %v198
    %781 = vmatpush1.msra.mxu0 %v197
    %782 = vmatprep.subr.mxu0 %v200
    %783 = vmatpush1.msra.mxu0 %v199
    %784 = vmatprep.subr.mxu0 %v202
    %785 = vmatpush1.msra.mxu0 %v201
    %786 = vmatprep.subr.mxu0 %v204
    %787 = vmatpush1.msra.mxu0 %v203
    %788 = vmatprep.subr.mxu0 %v206
    %789 = vmatpush1.msra.mxu0 %v205
    %790 = vmatprep.subr.mxu0 %v208
    %791 = vmatpush1.msra.mxu0 %v207
    %792 = vmatprep.subr.mxu0 %v210
    %793 = vmatpush1.msra.mxu0 %v209
    %794 = vmatprep.subr.mxu0 0.0
    %795 = vmatpush1.msra.mxu0 0.0
    %796 = vmatprep.subr.mxu0 0.0
    %797 = vmatpush1.msra.mxu0 0.0
    %798 = vmatprep.subr.mxu0 0.0
    %799 = vmatpush1.msra.mxu0 0.0
    %800 = vmatprep.subr.mxu0 0.0
    %801 = vmatpush1.msra.mxu0 0.0
    %802 = vmatprep.subr.mxu0 0.0
    %803 = vmatpush1.msra.mxu0 0.0
    %804 = vmatprep.subr.mxu0 0.0
    %805 = vmatpush1.msra.mxu0 0.0
    %806 = vmatprep.subr.mxu0 0.0
    %807 = vmatpush1.msra.mxu0 0.0
    %808 = vmatprep.subr.mxu0 0.0
    %809 = vmatpush1.msra.mxu0 0.0
    %810 = vmatprep.subr.mxu0 0.0
    %811 = vmatpush1.msra.mxu0 0.0
    %812 = vmatprep.subr.mxu0 0.0
    %813 = vmatpush1.msra.mxu0 0.0
    %814 = vmatprep.subr.mxu0 0.0
    %815 = vmatpush1.msra.mxu0 0.0
    %816 = vmatprep.subr.mxu0 0.0
    %817 = vmatpush1.msra.mxu0 0.0
    %818 = vmatprep.subr.mxu0 0.0
    %819 = vmatpush1.msra.mxu0 0.0
    %820 = vmatprep.subr.mxu0 0.0
    %821 = vmatpush1.msra.mxu0 0.0
    %822 = vmatprep.subr.mxu0 0.0
    %823 = vmatpush1.msra.mxu0 0.0
    %824 = vmatprep.subr.mxu0 0.0
    %825 = vmatpush1.msra.mxu0 0.0
    %826 = vmatprep.subr.mxu0 0.0
    %827 = vmatpush1.msra.mxu0 0.0
    %828 = vmatprep.subr.mxu0 0.0
    %829 = vmatpush1.msra.mxu0 0.0
    %830 = vmatprep.subr.mxu0 0.0
    %831 = vmatpush1.msra.mxu0 0.0
    %832 = vmatprep.subr.mxu0 0.0
    %833 = vmatpush1.msra.mxu0 0.0
    %834 = vmatprep.subr.mxu0 0.0
    %835 = vmatpush1.msra.mxu0 0.0
    %836 = vmatprep.subr.mxu0 0.0
    %837 = vmatpush1.msra.mxu0 0.0
    %838 = vmatprep.subr.mxu0 0.0
    %839 = vmatpush1.msra.mxu0 0.0
    %840 = vmatprep.subr.mxu0 0.0
    %841 = vmatpush1.msra.mxu0 0.0
    %842 = vmatprep.mubr.f32.mxu0 0.0
    %843 = vmatmul.mubr.f32.gmra.mrb[0].mxu0 %v776
    %v844 = vpop.f32.mrb[0].mxu0
    %v845 = vadd.f32 0.0, %v844
    %v846 = vpop.f32.mrb[0].mxu0
    %v847 = vadd.f32 0.0, %v846
    %848 = vdwg.mxu0
    %s849 = scalar_lea.vmem [#allocation6], 8
    %v850 = vld [vmem:[%s849] sm:$0xf]
    %v853 = vcombine.low %v771, %v773
    %v855 = vunpack.c.l.s4 1983009808
    %v856 = vunpack.c.0.s8 %v855
    %v857 = vlaneseq
    %v858 = vshrl.u32 %v857, 7
    %v859 = vsub.s32 %v856, %v858
    %v860 = vrot.slane %v853, %v859
    %v862 = vadd.f32 %v850, %v860
    %s863 = scalar_lea.vmem [#allocation7], 20
    %v864 = vld [vmem:[%s863] sm:$0xf]
    %v867 = vcombine.low %v845, %v847
    %v869 = vunpack.c.l.s4 1983009808
    %v870 = vunpack.c.0.s8 %v869
    %v871 = vlaneseq
    %v872 = vshrl.u32 %v871, 7
    %v873 = vsub.s32 %v870, %v872
    %v874 = vrot.slane %v867, %v873
    %v876 = vadd.f32 %v864, %v874
    %v877 = vxor.u32 %v862, 2147483648
    %v878 = vmul.f32 %v877, 1.442695
    %v879 = vpow.pop %v878
    %v880 = vadd.f32 %v879, 1.0
    %v881 = vrcp.pop %v880
    %v882 = vmul.f32 1.0, %v881
    %v883 = vxor.u32 %v876, 2147483648
    %v884 = vmul.f32 %v883, 1.442695
    %v885 = vpow.pop %v884
    %v886 = vadd.f32 %v885, 1.0
    %v887 = vrcp.pop %v886
    %v888 = vmul.f32 1.0, %v887
    %890 = vrot.lane.b32.xlu0 %v862, 64
    %v891 = vpop.permute.xlu0 %890
    %v892 = vrot.slane %v891, 2
    %v894 = vtanh.pop %v892
    %896 = vrot.lane.b32.xlu0 %v876, 64
    %v897 = vpop.permute.xlu0 %896
    %v898 = vrot.slane %v897, 2
    %v900 = vtanh.pop %v898
    %v901 = vmul.f32 %v882, %v675
    %v902 = vmul.f32 %v882, %v894
    %904 = vrot.lane.b32.xlu0 %v902, 64
    %v905 = vpop.permute.xlu0 %904
    %v907 = vadd.f32 %v901, %v905
    %v908 = vmul.f32 %v888, %v682
    %v909 = vmul.f32 %v888, %v900
    %911 = vrot.lane.b32.xlu0 %v909, 64
    %v912 = vpop.permute.xlu0 %911
    %v914 = vadd.f32 %v908, %v912
    %v915 = vtanh.pop %v907
    %v917 = vrot.slane %v882, 2
    %920 = vrot.lane.b32.xlu0 %v915, 64
    %v921 = vpop.permute.xlu0 %920
    %v923 = vmul.f32 %v917, %v921
    %v924 = vtanh.pop %v914
    %v926 = vrot.slane %v888, 2
    %929 = vrot.lane.b32.xlu0 %v924, 64
    %v930 = vpop.permute.xlu0 %929
    %v932 = vmul.f32 %v926, %v930
    %v934 = vsel %vm215, %v923, 0
    %936 = vmatprep.subr.mxu0 %v180
    %937 = vmatpush1.msra.mxu0 %v179
    %938 = vmatprep.subr.mxu0 %v182
    %939 = vmatpush1.msra.mxu0 %v181
    %940 = vmatprep.subr.mxu0 %v184
    %941 = vmatpush1.msra.mxu0 %v183
    %942 = vmatprep.subr.mxu0 %v186
    %943 = vmatpush1.msra.mxu0 %v185
    %944 = vmatprep.subr.mxu0 %v188
    %945 = vmatpush1.msra.mxu0 %v187
    %946 = vmatprep.subr.mxu0 %v190
    %947 = vmatpush1.msra.mxu0 %v189
    %948 = vmatprep.subr.mxu0 %v192
    %949 = vmatpush1.msra.mxu0 %v191
    %950 = vmatprep.subr.mxu0 %v194
    %951 = vmatpush1.msra.mxu0 %v193
    %952 = vmatprep.subr.mxu0 0.0
    %953 = vmatpush1.msra.mxu0 0.0
    %954 = vmatprep.subr.mxu0 0.0
    %955 = vmatpush1.msra.mxu0 0.0
    %956 = vmatprep.subr.mxu0 0.0
    %957 = vmatpush1.msra.mxu0 0.0
    %958 = vmatprep.subr.mxu0 0.0
    %959 = vmatpush1.msra.mxu0 0.0
    %960 = vmatprep.subr.mxu0 0.0
    %961 = vmatpush1.msra.mxu0 0.0
    %962 = vmatprep.subr.mxu0 0.0
    %963 = vmatpush1.msra.mxu0 0.0
    %964 = vmatprep.subr.mxu0 0.0
    %965 = vmatpush1.msra.mxu0 0.0
    %966 = vmatprep.subr.mxu0 0.0
    %967 = vmatpush1.msra.mxu0 0.0
    %968 = vmatprep.subr.mxu0 0.0
    %969 = vmatpush1.msra.mxu0 0.0
    %970 = vmatprep.subr.mxu0 0.0
    %971 = vmatpush1.msra.mxu0 0.0
    %972 = vmatprep.subr.mxu0 0.0
    %973 = vmatpush1.msra.mxu0 0.0
    %974 = vmatprep.subr.mxu0 0.0
    %975 = vmatpush1.msra.mxu0 0.0
    %976 = vmatprep.subr.mxu0 0.0
    %977 = vmatpush1.msra.mxu0 0.0
    %978 = vmatprep.subr.mxu0 0.0
    %979 = vmatpush1.msra.mxu0 0.0
    %980 = vmatprep.subr.mxu0 0.0
    %981 = vmatpush1.msra.mxu0 0.0
    %982 = vmatprep.subr.mxu0 0.0
    %983 = vmatpush1.msra.mxu0 0.0
    %984 = vmatprep.subr.mxu0 0.0
    %985 = vmatpush1.msra.mxu0 0.0
    %986 = vmatprep.subr.mxu0 0.0
    %987 = vmatpush1.msra.mxu0 0.0
    %988 = vmatprep.subr.mxu0 0.0
    %989 = vmatpush1.msra.mxu0 0.0
    %990 = vmatprep.subr.mxu0 0.0
    %991 = vmatpush1.msra.mxu0 0.0
    %992 = vmatprep.subr.mxu0 0.0
    %993 = vmatpush1.msra.mxu0 0.0
    %994 = vmatprep.subr.mxu0 0.0
    %995 = vmatpush1.msra.mxu0 0.0
    %996 = vmatprep.subr.mxu0 0.0
    %997 = vmatpush1.msra.mxu0 0.0
    %998 = vmatprep.subr.mxu0 0.0
    %999 = vmatpush1.msra.mxu0 0.0
    %1000 = vmatprep.mubr.f32.mxu0 0.0
    %1001 = vmatmul.mubr.f32.gmra.mrb[0].mxu0 %v934
    %v1002 = vpop.f32.mrb[0].mxu0
    %v1003 = vadd.f32 0.0, %v1002
    %v1004 = vpop.f32.mrb[0].mxu0
    %v1005 = vadd.f32 0.0, %v1004
    %1006 = vdwg.mxu0
    %v1008 = vsel %vm215, %v932, 0
    %1010 = vmatprep.subr.mxu0 %v196
    %1011 = vmatpush1.msra.mxu0 %v195
    %1012 = vmatprep.subr.mxu0 %v198
    %1013 = vmatpush1.msra.mxu0 %v197
    %1014 = vmatprep.subr.mxu0 %v200
    %1015 = vmatpush1.msra.mxu0 %v199
    %1016 = vmatprep.subr.mxu0 %v202
    %1017 = vmatpush1.msra.mxu0 %v201
    %1018 = vmatprep.subr.mxu0 %v204
    %1019 = vmatpush1.msra.mxu0 %v203
    %1020 = vmatprep.subr.mxu0 %v206
    %1021 = vmatpush1.msra.mxu0 %v205
    %1022 = vmatprep.subr.mxu0 %v208
    %1023 = vmatpush1.msra.mxu0 %v207
    %1024 = vmatprep.subr.mxu0 %v210
    %1025 = vmatpush1.msra.mxu0 %v209
    %1026 = vmatprep.subr.mxu0 0.0
    %1027 = vmatpush1.msra.mxu0 0.0
    %1028 = vmatprep.subr.mxu0 0.0
    %1029 = vmatpush1.msra.mxu0 0.0
    %1030 = vmatprep.subr.mxu0 0.0
    %1031 = vmatpush1.msra.mxu0 0.0
    %1032 = vmatprep.subr.mxu0 0.0
    %1033 = vmatpush1.msra.mxu0 0.0
    %1034 = vmatprep.subr.mxu0 0.0
    %1035 = vmatpush1.msra.mxu0 0.0
    %1036 = vmatprep.subr.mxu0 0.0
    %1037 = vmatpush1.msra.mxu0 0.0
    %1038 = vmatprep.subr.mxu0 0.0
    %1039 = vmatpush1.msra.mxu0 0.0
    %1040 = vmatprep.subr.mxu0 0.0
    %1041 = vmatpush1.msra.mxu0 0.0
    %1042 = vmatprep.subr.mxu0 0.0
    %1043 = vmatpush1.msra.mxu0 0.0
    %1044 = vmatprep.subr.mxu0 0.0
    %1045 = vmatpush1.msra.mxu0 0.0
    %1046 = vmatprep.subr.mxu0 0.0
    %1047 = vmatpush1.msra.mxu0 0.0
    %1048 = vmatprep.subr.mxu0 0.0
    %1049 = vmatpush1.msra.mxu0 0.0
    %1050 = vmatprep.subr.mxu0 0.0
    %1051 = vmatpush1.msra.mxu0 0.0
    %1052 = vmatprep.subr.mxu0 0.0
    %1053 = vmatpush1.msra.mxu0 0.0
    %1054 = vmatprep.subr.mxu0 0.0
    %1055 = vmatpush1.msra.mxu0 0.0
    %1056 = vmatprep.subr.mxu0 0.0
    %1057 = vmatpush1.msra.mxu0 0.0
    %1058 = vmatprep.subr.mxu0 0.0
    %1059 = vmatpush1.msra.mxu0 0.0
    %1060 = vmatprep.subr.mxu0 0.0
    %1061 = vmatpush1.msra.mxu0 0.0
    %1062 = vmatprep.subr.mxu0 0.0
    %1063 = vmatpush1.msra.mxu0 0.0
    %1064 = vmatprep.subr.mxu0 0.0
    %1065 = vmatpush1.msra.mxu0 0.0
    %1066 = vmatprep.subr.mxu0 0.0
    %1067 = vmatpush1.msra.mxu0 0.0
    %1068 = vmatprep.subr.mxu0 0.0
    %1069 = vmatpush1.msra.mxu0 0.0
    %1070 = vmatprep.subr.mxu0 0.0
    %1071 = vmatpush1.msra.mxu0 0.0
    %1072 = vmatprep.subr.mxu0 0.0
    %1073 = vmatpush1.msra.mxu0 0.0
    %1074 = vmatprep.mubr.f32.mxu0 0.0
    %1075 = vmatmul.mubr.f32.gmra.mrb[0].mxu0 %v1008
    %v1076 = vpop.f32.mrb[0].mxu0
    %v1077 = vadd.f32 0.0, %v1076
    %v1078 = vpop.f32.mrb[0].mxu0
    %v1079 = vadd.f32 0.0, %v1078
    %1080 = vdwg.mxu0
    %s1081 = scalar_lea.vmem [#allocation6], 12
    %v1082 = vld [vmem:[%s1081] sm:$0xf]
    %v1085 = vcombine.low %v1003, %v1005
    %v1087 = vunpack.c.l.s4 1983009808
    %v1088 = vunpack.c.0.s8 %v1087
    %v1089 = vlaneseq
    %v1090 = vshrl.u32 %v1089, 7
    %v1091 = vsub.s32 %v1088, %v1090
    %v1092 = vrot.slane %v1085, %v1091
    %v1094 = vadd.f32 %v1082, %v1092
    %s1095 = scalar_lea.vmem [#allocation7], 16
    %v1096 = vld [vmem:[%s1095] sm:$0xf]
    %v1099 = vcombine.low %v1077, %v1079
    %v1101 = vunpack.c.l.s4 1983009808
    %v1102 = vunpack.c.0.s8 %v1101
    %v1103 = vlaneseq
    %v1104 = vshrl.u32 %v1103, 7
    %v1105 = vsub.s32 %v1102, %v1104
    %v1106 = vrot.slane %v1099, %v1105
    %v1108 = vadd.f32 %v1096, %v1106
    %v1109 = vxor.u32 %v1094, 2147483648
    %v1110 = vmul.f32 %v1109, 1.442695
    %v1111 = vpow.pop %v1110
    %v1112 = vadd.f32 %v1111, 1.0
    %v1113 = vrcp.pop %v1112
    %v1114 = vmul.f32 1.0, %v1113
    %v1115 = vxor.u32 %v1108, 2147483648
    %v1116 = vmul.f32 %v1115, 1.442695
    %v1117 = vpow.pop %v1116
    %v1118 = vadd.f32 %v1117, 1.0
    %v1119 = vrcp.pop %v1118
    %v1120 = vmul.f32 1.0, %v1119
    %1122 = vrot.lane.b32.xlu0 %v1094, 64
    %v1123 = vpop.permute.xlu0 %1122
    %v1124 = vrot.slane %v1123, 2
    %v1126 = vtanh.pop %v1124
    %1128 = vrot.lane.b32.xlu0 %v1108, 64
    %v1129 = vpop.permute.xlu0 %1128
    %v1130 = vrot.slane %v1129, 2
    %v1132 = vtanh.pop %v1130
    %v1133 = vmul.f32 %v1114, %v907
    %v1134 = vmul.f32 %v1114, %v1126
    %1136 = vrot.lane.b32.xlu0 %v1134, 64
    %v1137 = vpop.permute.xlu0 %1136
    %v1139 = vadd.f32 %v1133, %v1137
    %v1140 = vmul.f32 %v1120, %v914
    %v1141 = vmul.f32 %v1120, %v1132
    %1143 = vrot.lane.b32.xlu0 %v1141, 64
    %v1144 = vpop.permute.xlu0 %1143
    %v1146 = vadd.f32 %v1140, %v1144
    %v1147 = vtanh.pop %v1139
    %v1149 = vrot.slane %v1114, 2
    %1152 = vrot.lane.b32.xlu0 %v1147, 64
    %v1153 = vpop.permute.xlu0 %1152
    %v1155 = vmul.f32 %v1149, %v1153
    %v1156 = vtanh.pop %v1146
    %v1158 = vrot.slane %v1120, 2
    %1161 = vrot.lane.b32.xlu0 %v1156, 64
    %v1162 = vpop.permute.xlu0 %1161
    %v1164 = vmul.f32 %v1158, %v1162
    %v1166 = vsel %vm215, %v1155, 0
    %1168 = vmatprep.subr.mxu0 %v180
    %1169 = vmatpush1.msra.mxu0 %v179
    %1170 = vmatprep.subr.mxu0 %v182
    %1171 = vmatpush1.msra.mxu0 %v181
    %1172 = vmatprep.subr.mxu0 %v184
    %1173 = vmatpush1.msra.mxu0 %v183
    %1174 = vmatprep.subr.mxu0 %v186
    %1175 = vmatpush1.msra.mxu0 %v185
    %1176 = vmatprep.subr.mxu0 %v188
    %1177 = vmatpush1.msra.mxu0 %v187
    %1178 = vmatprep.subr.mxu0 %v190
    %1179 = vmatpush1.msra.mxu0 %v189
    %1180 = vmatprep.subr.mxu0 %v192
    %1181 = vmatpush1.msra.mxu0 %v191
    %1182 = vmatprep.subr.mxu0 %v194
    %1183 = vmatpush1.msra.mxu0 %v193
    %1184 = vmatprep.subr.mxu0 0.0
    %1185 = vmatpush1.msra.mxu0 0.0
    %1186 = vmatprep.subr.mxu0 0.0
    %1187 = vmatpush1.msra.mxu0 0.0
    %1188 = vmatprep.subr.mxu0 0.0
    %1189 = vmatpush1.msra.mxu0 0.0
    %1190 = vmatprep.subr.mxu0 0.0
    %1191 = vmatpush1.msra.mxu0 0.0
    %1192 = vmatprep.subr.mxu0 0.0
    %1193 = vmatpush1.msra.mxu0 0.0
    %1194 = vmatprep.subr.mxu0 0.0
    %1195 = vmatpush1.msra.mxu0 0.0
    %1196 = vmatprep.subr.mxu0 0.0
    %1197 = vmatpush1.msra.mxu0 0.0
    %1198 = vmatprep.subr.mxu0 0.0
    %1199 = vmatpush1.msra.mxu0 0.0
    %1200 = vmatprep.subr.mxu0 0.0
    %1201 = vmatpush1.msra.mxu0 0.0
    %1202 = vmatprep.subr.mxu0 0.0
    %1203 = vmatpush1.msra.mxu0 0.0
    %1204 = vmatprep.subr.mxu0 0.0
    %1205 = vmatpush1.msra.mxu0 0.0
    %1206 = vmatprep.subr.mxu0 0.0
    %1207 = vmatpush1.msra.mxu0 0.0
    %1208 = vmatprep.subr.mxu0 0.0
    %1209 = vmatpush1.msra.mxu0 0.0
    %1210 = vmatprep.subr.mxu0 0.0
    %1211 = vmatpush1.msra.mxu0 0.0
    %1212 = vmatprep.subr.mxu0 0.0
    %1213 = vmatpush1.msra.mxu0 0.0
    %1214 = vmatprep.subr.mxu0 0.0
    %1215 = vmatpush1.msra.mxu0 0.0
    %1216 = vmatprep.subr.mxu0 0.0
    %1217 = vmatpush1.msra.mxu0 0.0
    %1218 = vmatprep.subr.mxu0 0.0
    %1219 = vmatpush1.msra.mxu0 0.0
    %1220 = vmatprep.subr.mxu0 0.0
    %1221 = vmatpush1.msra.mxu0 0.0
    %1222 = vmatprep.subr.mxu0 0.0
    %1223 = vmatpush1.msra.mxu0 0.0
    %1224 = vmatprep.subr.mxu0 0.0
    %1225 = vmatpush1.msra.mxu0 0.0
    %1226 = vmatprep.subr.mxu0 0.0
    %1227 = vmatpush1.msra.mxu0 0.0
    %1228 = vmatprep.subr.mxu0 0.0
    %1229 = vmatpush1.msra.mxu0 0.0
    %1230 = vmatprep.subr.mxu0 0.0
    %1231 = vmatpush1.msra.mxu0 0.0
    %1232 = vmatprep.mubr.f32.mxu0 0.0
    %1233 = vmatmul.mubr.f32.gmra.mrb[0].mxu0 %v1166
    %v1234 = vpop.f32.mrb[0].mxu0
    %v1235 = vadd.f32 0.0, %v1234
    %v1236 = vpop.f32.mrb[0].mxu0
    %v1237 = vadd.f32 0.0, %v1236
    %1238 = vdwg.mxu0
    %v1240 = vsel %vm215, %v1164, 0
    %1242 = vmatprep.subr.mxu0 %v196
    %1243 = vmatpush1.msra.mxu0 %v195
    %1244 = vmatprep.subr.mxu0 %v198
    %1245 = vmatpush1.msra.mxu0 %v197
    %1246 = vmatprep.subr.mxu0 %v200
    %1247 = vmatpush1.msra.mxu0 %v199
    %1248 = vmatprep.subr.mxu0 %v202
    %1249 = vmatpush1.msra.mxu0 %v201
    %1250 = vmatprep.subr.mxu0 %v204
    %1251 = vmatpush1.msra.mxu0 %v203
    %1252 = vmatprep.subr.mxu0 %v206
    %1253 = vmatpush1.msra.mxu0 %v205
    %1254 = vmatprep.subr.mxu0 %v208
    %1255 = vmatpush1.msra.mxu0 %v207
    %1256 = vmatprep.subr.mxu0 %v210
    %1257 = vmatpush1.msra.mxu0 %v209
    %1258 = vmatprep.subr.mxu0 0.0
    %1259 = vmatpush1.msra.mxu0 0.0
    %1260 = vmatprep.subr.mxu0 0.0
    %1261 = vmatpush1.msra.mxu0 0.0
    %1262 = vmatprep.subr.mxu0 0.0
    %1263 = vmatpush1.msra.mxu0 0.0
    %1264 = vmatprep.subr.mxu0 0.0
    %1265 = vmatpush1.msra.mxu0 0.0
    %1266 = vmatprep.subr.mxu0 0.0
    %1267 = vmatpush1.msra.mxu0 0.0
    %1268 = vmatprep.subr.mxu0 0.0
    %1269 = vmatpush1.msra.mxu0 0.0
    %1270 = vmatprep.subr.mxu0 0.0
    %1271 = vmatpush1.msra.mxu0 0.0
    %1272 = vmatprep.subr.mxu0 0.0
    %1273 = vmatpush1.msra.mxu0 0.0
    %1274 = vmatprep.subr.mxu0 0.0
    %1275 = vmatpush1.msra.mxu0 0.0
    %1276 = vmatprep.subr.mxu0 0.0
    %1277 = vmatpush1.msra.mxu0 0.0
    %1278 = vmatprep.subr.mxu0 0.0
    %1279 = vmatpush1.msra.mxu0 0.0
    %1280 = vmatprep.subr.mxu0 0.0
    %1281 = vmatpush1.msra.mxu0 0.0
    %1282 = vmatprep.subr.mxu0 0.0
    %1283 = vmatpush1.msra.mxu0 0.0
    %1284 = vmatprep.subr.mxu0 0.0
    %1285 = vmatpush1.msra.mxu0 0.0
    %1286 = vmatprep.subr.mxu0 0.0
    %1287 = vmatpush1.msra.mxu0 0.0
    %1288 = vmatprep.subr.mxu0 0.0
    %1289 = vmatpush1.msra.mxu0 0.0
    %1290 = vmatprep.subr.mxu0 0.0
    %1291 = vmatpush1.msra.mxu0 0.0
    %1292 = vmatprep.subr.mxu0 0.0
    %1293 = vmatpush1.msra.mxu0 0.0
    %1294 = vmatprep.subr.mxu0 0.0
    %1295 = vmatpush1.msra.mxu0 0.0
    %1296 = vmatprep.subr.mxu0 0.0
    %1297 = vmatpush1.msra.mxu0 0.0
    %1298 = vmatprep.subr.mxu0 0.0
    %1299 = vmatpush1.msra.mxu0 0.0
    %1300 = vmatprep.subr.mxu0 0.0
    %1301 = vmatpush1.msra.mxu0 0.0
    %1302 = vmatprep.subr.mxu0 0.0
    %1303 = vmatpush1.msra.mxu0 0.0
    %1304 = vmatprep.subr.mxu0 0.0
    %1305 = vmatpush1.msra.mxu0 0.0
    %1306 = vmatprep.mubr.f32.mxu0 0.0
    %1307 = vmatmul.mubr.f32.gmra.mrb[0].mxu0 %v1240
    %v1308 = vpop.f32.mrb[0].mxu0
    %v1309 = vadd.f32 0.0, %v1308
    %v1310 = vpop.f32.mrb[0].mxu0
    %v1311 = vadd.f32 0.0, %v1310
    %1312 = vdwg.mxu0
    %s1313 = scalar_lea.vmem [#allocation6], 16
    %v1314 = vld [vmem:[%s1313] sm:$0xf]
    %v1317 = vcombine.low %v1235, %v1237
    %v1319 = vunpack.c.l.s4 1983009808
    %v1320 = vunpack.c.0.s8 %v1319
    %v1321 = vlaneseq
    %v1322 = vshrl.u32 %v1321, 7
    %v1323 = vsub.s32 %v1320, %v1322
    %v1324 = vrot.slane %v1317, %v1323
    %v1326 = vadd.f32 %v1314, %v1324
    %s1327 = scalar_lea.vmem [#allocation7], 12
    %v1328 = vld [vmem:[%s1327] sm:$0xf]
    %v1331 = vcombine.low %v1309, %v1311
    %v1333 = vunpack.c.l.s4 1983009808
    %v1334 = vunpack.c.0.s8 %v1333
    %v1335 = vlaneseq
    %v1336 = vshrl.u32 %v1335, 7
    %v1337 = vsub.s32 %v1334, %v1336
    %v1338 = vrot.slane %v1331, %v1337
    %v1340 = vadd.f32 %v1328, %v1338
    %v1341 = vxor.u32 %v1326, 2147483648
    %v1342 = vmul.f32 %v1341, 1.442695
    %v1343 = vpow.pop %v1342
    %v1344 = vadd.f32 %v1343, 1.0
    %v1345 = vrcp.pop %v1344
    %v1346 = vmul.f32 1.0, %v1345
    %v1347 = vxor.u32 %v1340, 2147483648
    %v1348 = vmul.f32 %v1347, 1.442695
    %v1349 = vpow.pop %v1348
    %v1350 = vadd.f32 %v1349, 1.0
    %v1351 = vrcp.pop %v1350
    %v1352 = vmul.f32 1.0, %v1351
    %1354 = vrot.lane.b32.xlu0 %v1326, 64
    %v1355 = vpop.permute.xlu0 %1354
    %v1356 = vrot.slane %v1355, 2
    %v1358 = vtanh.pop %v1356
    %1360 = vrot.lane.b32.xlu0 %v1340, 64
    %v1361 = vpop.permute.xlu0 %1360
    %v1362 = vrot.slane %v1361, 2
    %v1364 = vtanh.pop %v1362
    %v1365 = vmul.f32 %v1346, %v1139
    %v1366 = vmul.f32 %v1346, %v1358
    %1368 = vrot.lane.b32.xlu0 %v1366, 64
    %v1369 = vpop.permute.xlu0 %1368
    %v1371 = vadd.f32 %v1365, %v1369
    %v1372 = vmul.f32 %v1352, %v1146
    %v1373 = vmul.f32 %v1352, %v1364
    %1375 = vrot.lane.b32.xlu0 %v1373, 64
    %v1376 = vpop.permute.xlu0 %1375
    %v1378 = vadd.f32 %v1372, %v1376
    %v1379 = vtanh.pop %v1371
    %v1381 = vrot.slane %v1346, 2
    %1384 = vrot.lane.b32.xlu0 %v1379, 64
    %v1385 = vpop.permute.xlu0 %1384
    %v1387 = vmul.f32 %v1381, %v1385
    %v1388 = vtanh.pop %v1378
    %v1390 = vrot.slane %v1352, 2
    %1393 = vrot.lane.b32.xlu0 %v1388, 64
    %v1394 = vpop.permute.xlu0 %1393
    %v1396 = vmul.f32 %v1390, %v1394
    %v1398 = vsel %vm215, %v1387, 0
    %1400 = vmatprep.subr.mxu0 %v180
    %1401 = vmatpush1.msra.mxu0 %v179
    %1402 = vmatprep.subr.mxu0 %v182
    %1403 = vmatpush1.msra.mxu0 %v181
    %1404 = vmatprep.subr.mxu0 %v184
    %1405 = vmatpush1.msra.mxu0 %v183
    %1406 = vmatprep.subr.mxu0 %v186
    %1407 = vmatpush1.msra.mxu0 %v185
    %1408 = vmatprep.subr.mxu0 %v188
    %1409 = vmatpush1.msra.mxu0 %v187
    %1410 = vmatprep.subr.mxu0 %v190
    %1411 = vmatpush1.msra.mxu0 %v189
    %1412 = vmatprep.subr.mxu0 %v192
    %1413 = vmatpush1.msra.mxu0 %v191
    %1414 = vmatprep.subr.mxu0 %v194
    %1415 = vmatpush1.msra.mxu0 %v193
    %1416 = vmatprep.subr.mxu0 0.0
    %1417 = vmatpush1.msra.mxu0 0.0
    %1418 = vmatprep.subr.mxu0 0.0
    %1419 = vmatpush1.msra.mxu0 0.0
    %1420 = vmatprep.subr.mxu0 0.0
    %1421 = vmatpush1.msra.mxu0 0.0
    %1422 = vmatprep.subr.mxu0 0.0
    %1423 = vmatpush1.msra.mxu0 0.0
    %1424 = vmatprep.subr.mxu0 0.0
    %1425 = vmatpush1.msra.mxu0 0.0
    %1426 = vmatprep.subr.mxu0 0.0
    %1427 = vmatpush1.msra.mxu0 0.0
    %1428 = vmatprep.subr.mxu0 0.0
    %1429 = vmatpush1.msra.mxu0 0.0
    %1430 = vmatprep.subr.mxu0 0.0
    %1431 = vmatpush1.msra.mxu0 0.0
    %1432 = vmatprep.subr.mxu0 0.0
    %1433 = vmatpush1.msra.mxu0 0.0
    %1434 = vmatprep.subr.mxu0 0.0
    %1435 = vmatpush1.msra.mxu0 0.0
    %1436 = vmatprep.subr.mxu0 0.0
    %1437 = vmatpush1.msra.mxu0 0.0
    %1438 = vmatprep.subr.mxu0 0.0
    %1439 = vmatpush1.msra.mxu0 0.0
    %1440 = vmatprep.subr.mxu0 0.0
    %1441 = vmatpush1.msra.mxu0 0.0
    %1442 = vmatprep.subr.mxu0 0.0
    %1443 = vmatpush1.msra.mxu0 0.0
    %1444 = vmatprep.subr.mxu0 0.0
    %1445 = vmatpush1.msra.mxu0 0.0
    %1446 = vmatprep.subr.mxu0 0.0
    %1447 = vmatpush1.msra.mxu0 0.0
    %1448 = vmatprep.subr.mxu0 0.0
    %1449 = vmatpush1.msra.mxu0 0.0
    %1450 = vmatprep.subr.mxu0 0.0
    %1451 = vmatpush1.msra.mxu0 0.0
    %1452 = vmatprep.subr.mxu0 0.0
    %1453 = vmatpush1.msra.mxu0 0.0
    %1454 = vmatprep.subr.mxu0 0.0
    %1455 = vmatpush1.msra.mxu0 0.0
    %1456 = vmatprep.subr.mxu0 0.0
    %1457 = vmatpush1.msra.mxu0 0.0
    %1458 = vmatprep.subr.mxu0 0.0
    %1459 = vmatpush1.msra.mxu0 0.0
    %1460 = vmatprep.subr.mxu0 0.0
    %1461 = vmatpush1.msra.mxu0 0.0
    %1462 = vmatprep.subr.mxu0 0.0
    %1463 = vmatpush1.msra.mxu0 0.0
    %1464 = vmatprep.mubr.f32.mxu0 0.0
    %1465 = vmatmul.mubr.f32.gmra.mrb[0].mxu0 %v1398
    %v1466 = vpop.f32.mrb[0].mxu0
    %v1467 = vadd.f32 0.0, %v1466
    %v1468 = vpop.f32.mrb[0].mxu0
    %v1469 = vadd.f32 0.0, %v1468
    %1470 = vdwg.mxu0
    %v1472 = vsel %vm215, %v1396, 0
    %1474 = vmatprep.subr.mxu0 %v196
    %1475 = vmatpush1.msra.mxu0 %v195
    %1476 = vmatprep.subr.mxu0 %v198
    %1477 = vmatpush1.msra.mxu0 %v197
    %1478 = vmatprep.subr.mxu0 %v200
    %1479 = vmatpush1.msra.mxu0 %v199
    %1480 = vmatprep.subr.mxu0 %v202
    %1481 = vmatpush1.msra.mxu0 %v201
    %1482 = vmatprep.subr.mxu0 %v204
    %1483 = vmatpush1.msra.mxu0 %v203
    %1484 = vmatprep.subr.mxu0 %v206
    %1485 = vmatpush1.msra.mxu0 %v205
    %1486 = vmatprep.subr.mxu0 %v208
    %1487 = vmatpush1.msra.mxu0 %v207
    %1488 = vmatprep.subr.mxu0 %v210
    %1489 = vmatpush1.msra.mxu0 %v209
    %1490 = vmatprep.subr.mxu0 0.0
    %1491 = vmatpush1.msra.mxu0 0.0
    %1492 = vmatprep.subr.mxu0 0.0
    %1493 = vmatpush1.msra.mxu0 0.0
    %1494 = vmatprep.subr.mxu0 0.0
    %1495 = vmatpush1.msra.mxu0 0.0
    %1496 = vmatprep.subr.mxu0 0.0
    %1497 = vmatpush1.msra.mxu0 0.0
    %1498 = vmatprep.subr.mxu0 0.0
    %1499 = vmatpush1.msra.mxu0 0.0
    %1500 = vmatprep.subr.mxu0 0.0
    %1501 = vmatpush1.msra.mxu0 0.0
    %1502 = vmatprep.subr.mxu0 0.0
    %1503 = vmatpush1.msra.mxu0 0.0
    %1504 = vmatprep.subr.mxu0 0.0
    %1505 = vmatpush1.msra.mxu0 0.0
    %1506 = vmatprep.subr.mxu0 0.0
    %1507 = vmatpush1.msra.mxu0 0.0
    %1508 = vmatprep.subr.mxu0 0.0
    %1509 = vmatpush1.msra.mxu0 0.0
    %1510 = vmatprep.subr.mxu0 0.0
    %1511 = vmatpush1.msra.mxu0 0.0
    %1512 = vmatprep.subr.mxu0 0.0
    %1513 = vmatpush1.msra.mxu0 0.0
    %1514 = vmatprep.subr.mxu0 0.0
    %1515 = vmatpush1.msra.mxu0 0.0
    %1516 = vmatprep.subr.mxu0 0.0
    %1517 = vmatpush1.msra.mxu0 0.0
    %1518 = vmatprep.subr.mxu0 0.0
    %1519 = vmatpush1.msra.mxu0 0.0
    %1520 = vmatprep.subr.mxu0 0.0
    %1521 = vmatpush1.msra.mxu0 0.0
    %1522 = vmatprep.subr.mxu0 0.0
    %1523 = vmatpush1.msra.mxu0 0.0
    %1524 = vmatprep.subr.mxu0 0.0
    %1525 = vmatpush1.msra.mxu0 0.0
    %1526 = vmatprep.subr.mxu0 0.0
    %1527 = vmatpush1.msra.mxu0 0.0
    %1528 = vmatprep.subr.mxu0 0.0
    %1529 = vmatpush1.msra.mxu0 0.0
    %1530 = vmatprep.subr.mxu0 0.0
    %1531 = vmatpush1.msra.mxu0 0.0
    %1532 = vmatprep.subr.mxu0 0.0
    %1533 = vmatpush1.msra.mxu0 0.0
    %1534 = vmatprep.subr.mxu0 0.0
    %1535 = vmatpush1.msra.mxu0 0.0
    %1536 = vmatprep.subr.mxu0 0.0
    %1537 = vmatpush1.msra.mxu0 0.0
    %1538 = vmatprep.mubr.f32.mxu0 0.0
    %1539 = vmatmul.mubr.f32.gmra.mrb[0].mxu0 %v1472
    %v1540 = vpop.f32.mrb[0].mxu0
    %v1541 = vadd.f32 0.0, %v1540
    %v1542 = vpop.f32.mrb[0].mxu0
    %v1543 = vadd.f32 0.0, %v1542
    %1544 = vdwg.mxu0
    %s1545 = scalar_lea.vmem [#allocation6], 20
    %v1546 = vld [vmem:[%s1545] sm:$0xf]
    %v1549 = vcombine.low %v1467, %v1469
    %v1551 = vunpack.c.l.s4 1983009808
    %v1552 = vunpack.c.0.s8 %v1551
    %v1553 = vlaneseq
    %v1554 = vshrl.u32 %v1553, 7
    %v1555 = vsub.s32 %v1552, %v1554
    %v1556 = vrot.slane %v1549, %v1555
    %v1558 = vadd.f32 %v1546, %v1556
    %s1559 = scalar_lea.vmem [#allocation7], 8
    %v1560 = vld [vmem:[%s1559] sm:$0xf]
    %v1563 = vcombine.low %v1541, %v1543
    %v1565 = vunpack.c.l.s4 1983009808
    %v1566 = vunpack.c.0.s8 %v1565
    %v1567 = vlaneseq
    %v1568 = vshrl.u32 %v1567, 7
    %v1569 = vsub.s32 %v1566, %v1568
    %v1570 = vrot.slane %v1563, %v1569
    %v1572 = vadd.f32 %v1560, %v1570
    %v1573 = vxor.u32 %v1558, 2147483648
    %v1574 = vmul.f32 %v1573, 1.442695
    %v1575 = vpow.pop %v1574
    %v1576 = vadd.f32 %v1575, 1.0
    %v1577 = vrcp.pop %v1576
    %v1578 = vmul.f32 1.0, %v1577
    %v1579 = vxor.u32 %v1572, 2147483648
    %v1580 = vmul.f32 %v1579, 1.442695
    %v1581 = vpow.pop %v1580
    %v1582 = vadd.f32 %v1581, 1.0
    %v1583 = vrcp.pop %v1582
    %v1584 = vmul.f32 1.0, %v1583
    %1586 = vrot.lane.b32.xlu0 %v1558, 64
    %v1587 = vpop.permute.xlu0 %1586
    %v1588 = vrot.slane %v1587, 2
    %v1590 = vtanh.pop %v1588
    %1592 = vrot.lane.b32.xlu0 %v1572, 64
    %v1593 = vpop.permute.xlu0 %1592
    %v1594 = vrot.slane %v1593, 2
    %v1596 = vtanh.pop %v1594
    %v1597 = vmul.f32 %v1578, %v1371
    %v1598 = vmul.f32 %v1578, %v1590
    %1600 = vrot.lane.b32.xlu0 %v1598, 64
    %v1601 = vpop.permute.xlu0 %1600
    %v1603 = vadd.f32 %v1597, %v1601
    %v1604 = vmul.f32 %v1584, %v1378
    %v1605 = vmul.f32 %v1584, %v1596
    %1607 = vrot.lane.b32.xlu0 %v1605, 64
    %v1608 = vpop.permute.xlu0 %1607
    %v1610 = vadd.f32 %v1604, %v1608
    %v1611 = vtanh.pop %v1603
    %v1613 = vrot.slane %v1578, 2
    %1616 = vrot.lane.b32.xlu0 %v1611, 64
    %v1617 = vpop.permute.xlu0 %1616
    %v1619 = vmul.f32 %v1613, %v1617
    %v1620 = vtanh.pop %v1610
    %v1622 = vrot.slane %v1584, 2
    %1625 = vrot.lane.b32.xlu0 %v1620, 64
    %v1626 = vpop.permute.xlu0 %1625
    %v1628 = vmul.f32 %v1622, %v1626
    %v1630 = vsel %vm215, %v1619, 0
    %1632 = vmatprep.subr.mxu0 %v180
    %1633 = vmatpush1.msra.mxu0 %v179
    %1634 = vmatprep.subr.mxu0 %v182
    %1635 = vmatpush1.msra.mxu0 %v181
    %1636 = vmatprep.subr.mxu0 %v184
    %1637 = vmatpush1.msra.mxu0 %v183
    %1638 = vmatprep.subr.mxu0 %v186
    %1639 = vmatpush1.msra.mxu0 %v185
    %1640 = vmatprep.subr.mxu0 %v188
    %1641 = vmatpush1.msra.mxu0 %v187
    %1642 = vmatprep.subr.mxu0 %v190
    %1643 = vmatpush1.msra.mxu0 %v189
    %1644 = vmatprep.subr.mxu0 %v192
    %1645 = vmatpush1.msra.mxu0 %v191
    %1646 = vmatprep.subr.mxu0 %v194
    %1647 = vmatpush1.msra.mxu0 %v193
    %1648 = vmatprep.subr.mxu0 0.0
    %1649 = vmatpush1.msra.mxu0 0.0
    %1650 = vmatprep.subr.mxu0 0.0
    %1651 = vmatpush1.msra.mxu0 0.0
    %1652 = vmatprep.subr.mxu0 0.0
    %1653 = vmatpush1.msra.mxu0 0.0
    %1654 = vmatprep.subr.mxu0 0.0
    %1655 = vmatpush1.msra.mxu0 0.0
    %1656 = vmatprep.subr.mxu0 0.0
    %1657 = vmatpush1.msra.mxu0 0.0
    %1658 = vmatprep.subr.mxu0 0.0
    %1659 = vmatpush1.msra.mxu0 0.0
    %1660 = vmatprep.subr.mxu0 0.0
    %1661 = vmatpush1.msra.mxu0 0.0
    %1662 = vmatprep.subr.mxu0 0.0
    %1663 = vmatpush1.msra.mxu0 0.0
    %1664 = vmatprep.subr.mxu0 0.0
    %1665 = vmatpush1.msra.mxu0 0.0
    %1666 = vmatprep.subr.mxu0 0.0
    %1667 = vmatpush1.msra.mxu0 0.0
    %1668 = vmatprep.subr.mxu0 0.0
    %1669 = vmatpush1.msra.mxu0 0.0
    %1670 = vmatprep.subr.mxu0 0.0
    %1671 = vmatpush1.msra.mxu0 0.0
    %1672 = vmatprep.subr.mxu0 0.0
    %1673 = vmatpush1.msra.mxu0 0.0
    %1674 = vmatprep.subr.mxu0 0.0
    %1675 = vmatpush1.msra.mxu0 0.0
    %1676 = vmatprep.subr.mxu0 0.0
    %1677 = vmatpush1.msra.mxu0 0.0
    %1678 = vmatprep.subr.mxu0 0.0
    %1679 = vmatpush1.msra.mxu0 0.0
    %1680 = vmatprep.subr.mxu0 0.0
    %1681 = vmatpush1.msra.mxu0 0.0
    %1682 = vmatprep.subr.mxu0 0.0
    %1683 = vmatpush1.msra.mxu0 0.0
    %1684 = vmatprep.subr.mxu0 0.0
    %1685 = vmatpush1.msra.mxu0 0.0
    %1686 = vmatprep.subr.mxu0 0.0
    %1687 = vmatpush1.msra.mxu0 0.0
    %1688 = vmatprep.subr.mxu0 0.0
    %1689 = vmatpush1.msra.mxu0 0.0
    %1690 = vmatprep.subr.mxu0 0.0
    %1691 = vmatpush1.msra.mxu0 0.0
    %1692 = vmatprep.subr.mxu0 0.0
    %1693 = vmatpush1.msra.mxu0 0.0
    %1694 = vmatprep.subr.mxu0 0.0
    %1695 = vmatpush1.msra.mxu0 0.0
    %1696 = vmatprep.mubr.f32.mxu0 0.0
    %1697 = vmatmul.mubr.f32.gmra.mrb[0].mxu0 %v1630
    %v1698 = vpop.f32.mrb[0].mxu0
    %v1699 = vadd.f32 0.0, %v1698
    %v1700 = vpop.f32.mrb[0].mxu0
    %v1701 = vadd.f32 0.0, %v1700
    %1702 = vdwg.mxu0
    %v1704 = vsel %vm215, %v1628, 0
    %1706 = vmatprep.subr.mxu0 %v196
    %1707 = vmatpush1.msra.mxu0 %v195
    %1708 = vmatprep.subr.mxu0 %v198
    %1709 = vmatpush1.msra.mxu0 %v197
    %1710 = vmatprep.subr.mxu0 %v200
    %1711 = vmatpush1.msra.mxu0 %v199
    %1712 = vmatprep.subr.mxu0 %v202
    %1713 = vmatpush1.msra.mxu0 %v201
    %1714 = vmatprep.subr.mxu0 %v204
    %1715 = vmatpush1.msra.mxu0 %v203
    %1716 = vmatprep.subr.mxu0 %v206
    %1717 = vmatpush1.msra.mxu0 %v205
    %1718 = vmatprep.subr.mxu0 %v208
    %1719 = vmatpush1.msra.mxu0 %v207
    %1720 = vmatprep.subr.mxu0 %v210
    %1721 = vmatpush1.msra.mxu0 %v209
    %1722 = vmatprep.subr.mxu0 0.0
    %1723 = vmatpush1.msra.mxu0 0.0
    %1724 = vmatprep.subr.mxu0 0.0
    %1725 = vmatpush1.msra.mxu0 0.0
    %1726 = vmatprep.subr.mxu0 0.0
    %1727 = vmatpush1.msra.mxu0 0.0
    %1728 = vmatprep.subr.mxu0 0.0
    %1729 = vmatpush1.msra.mxu0 0.0
    %1730 = vmatprep.subr.mxu0 0.0
    %1731 = vmatpush1.msra.mxu0 0.0
    %1732 = vmatprep.subr.mxu0 0.0
    %1733 = vmatpush1.msra.mxu0 0.0
    %1734 = vmatprep.subr.mxu0 0.0
    %1735 = vmatpush1.msra.mxu0 0.0
    %1736 = vmatprep.subr.mxu0 0.0
    %1737 = vmatpush1.msra.mxu0 0.0
    %1738 = vmatprep.subr.mxu0 0.0
    %1739 = vmatpush1.msra.mxu0 0.0
    %1740 = vmatprep.subr.mxu0 0.0
    %1741 = vmatpush1.msra.mxu0 0.0
    %1742 = vmatprep.subr.mxu0 0.0
    %1743 = vmatpush1.msra.mxu0 0.0
    %1744 = vmatprep.subr.mxu0 0.0
    %1745 = vmatpush1.msra.mxu0 0.0
    %1746 = vmatprep.subr.mxu0 0.0
    %1747 = vmatpush1.msra.mxu0 0.0
    %1748 = vmatprep.subr.mxu0 0.0
    %1749 = vmatpush1.msra.mxu0 0.0
    %1750 = vmatprep.subr.mxu0 0.0
    %1751 = vmatpush1.msra.mxu0 0.0
    %1752 = vmatprep.subr.mxu0 0.0
    %1753 = vmatpush1.msra.mxu0 0.0
    %1754 = vmatprep.subr.mxu0 0.0
    %1755 = vmatpush1.msra.mxu0 0.0
    %1756 = vmatprep.subr.mxu0 0.0
    %1757 = vmatpush1.msra.mxu0 0.0
    %1758 = vmatprep.subr.mxu0 0.0
    %1759 = vmatpush1.msra.mxu0 0.0
    %1760 = vmatprep.subr.mxu0 0.0
    %1761 = vmatpush1.msra.mxu0 0.0
    %1762 = vmatprep.subr.mxu0 0.0
    %1763 = vmatpush1.msra.mxu0 0.0
    %1764 = vmatprep.subr.mxu0 0.0
    %1765 = vmatpush1.msra.mxu0 0.0
    %1766 = vmatprep.subr.mxu0 0.0
    %1767 = vmatpush1.msra.mxu0 0.0
    %1768 = vmatprep.subr.mxu0 0.0
    %1769 = vmatpush1.msra.mxu0 0.0
    %1770 = vmatprep.mubr.f32.mxu0 0.0
    %1771 = vmatmul.mubr.f32.gmra.mrb[0].mxu0 %v1704
    %v1772 = vpop.f32.mrb[0].mxu0
    %v1773 = vadd.f32 0.0, %v1772
    %v1774 = vpop.f32.mrb[0].mxu0
    %v1775 = vadd.f32 0.0, %v1774
    %1776 = vdwg.mxu0
    %s1777 = scalar_lea.vmem [#allocation6], 24
    %v1778 = vld [vmem:[%s1777] sm:$0xf]
    %v1781 = vcombine.low %v1699, %v1701
    %v1783 = vunpack.c.l.s4 1983009808
    %v1784 = vunpack.c.0.s8 %v1783
    %v1785 = vlaneseq
    %v1786 = vshrl.u32 %v1785, 7
    %v1787 = vsub.s32 %v1784, %v1786
    %v1788 = vrot.slane %v1781, %v1787
    %v1790 = vadd.f32 %v1778, %v1788
    %s1791 = scalar_lea.vmem [#allocation7], 4
    %v1792 = vld [vmem:[%s1791] sm:$0xf]
    %v1795 = vcombine.low %v1773, %v1775
    %v1797 = vunpack.c.l.s4 1983009808
    %v1798 = vunpack.c.0.s8 %v1797
    %v1799 = vlaneseq
    %v1800 = vshrl.u32 %v1799, 7
    %v1801 = vsub.s32 %v1798, %v1800
    %v1802 = vrot.slane %v1795, %v1801
    %v1804 = vadd.f32 %v1792, %v1802
    %v1805 = vxor.u32 %v1790, 2147483648
    %v1806 = vmul.f32 %v1805, 1.442695
    %v1807 = vpow.pop %v1806
    %v1808 = vadd.f32 %v1807, 1.0
    %v1809 = vrcp.pop %v1808
    %v1810 = vmul.f32 1.0, %v1809
    %v1811 = vxor.u32 %v1804, 2147483648
    %v1812 = vmul.f32 %v1811, 1.442695
    %v1813 = vpow.pop %v1812
    %v1814 = vadd.f32 %v1813, 1.0
    %v1815 = vrcp.pop %v1814
    %v1816 = vmul.f32 1.0, %v1815
    %1818 = vrot.lane.b32.xlu0 %v1790, 64
    %v1819 = vpop.permute.xlu0 %1818
    %v1820 = vrot.slane %v1819, 2
    %v1822 = vtanh.pop %v1820
    %1824 = vrot.lane.b32.xlu0 %v1804, 64
    %v1825 = vpop.permute.xlu0 %1824
    %v1826 = vrot.slane %v1825, 2
    %v1828 = vtanh.pop %v1826
    %v1829 = vmul.f32 %v1810, %v1603
    %v1830 = vmul.f32 %v1810, %v1822
    %1832 = vrot.lane.b32.xlu0 %v1830, 64
    %v1833 = vpop.permute.xlu0 %1832
    %v1835 = vadd.f32 %v1829, %v1833
    %v1836 = vmul.f32 %v1816, %v1610
    %v1837 = vmul.f32 %v1816, %v1828
    %1839 = vrot.lane.b32.xlu0 %v1837, 64
    %v1840 = vpop.permute.xlu0 %1839
    %v1842 = vadd.f32 %v1836, %v1840
    %v1843 = vtanh.pop %v1835
    %v1845 = vrot.slane %v1810, 2
    %1848 = vrot.lane.b32.xlu0 %v1843, 64
    %v1849 = vpop.permute.xlu0 %1848
    %v1851 = vmul.f32 %v1845, %v1849
    %v1852 = vtanh.pop %v1842
    %v1854 = vrot.slane %v1816, 2
    %1857 = vrot.lane.b32.xlu0 %v1852, 64
    %v1858 = vpop.permute.xlu0 %1857
    %v1860 = vmul.f32 %v1854, %v1858
    %v1862 = vsel %vm215, %v1851, 0
    %1864 = vmatprep.subr.mxu0 %v180
    %1865 = vmatpush1.msra.mxu0 %v179
    %1866 = vmatprep.subr.mxu0 %v182
    %1867 = vmatpush1.msra.mxu0 %v181
    %1868 = vmatprep.subr.mxu0 %v184
    %1869 = vmatpush1.msra.mxu0 %v183
    %1870 = vmatprep.subr.mxu0 %v186
    %1871 = vmatpush1.msra.mxu0 %v185
    %1872 = vmatprep.subr.mxu0 %v188
    %1873 = vmatpush1.msra.mxu0 %v187
    %1874 = vmatprep.subr.mxu0 %v190
    %1875 = vmatpush1.msra.mxu0 %v189
    %1876 = vmatprep.subr.mxu0 %v192
    %1877 = vmatpush1.msra.mxu0 %v191
    %1878 = vmatprep.subr.mxu0 %v194
    %1879 = vmatpush1.msra.mxu0 %v193
    %1880 = vmatprep.subr.mxu0 0.0
    %1881 = vmatpush1.msra.mxu0 0.0
    %1882 = vmatprep.subr.mxu0 0.0
    %1883 = vmatpush1.msra.mxu0 0.0
    %1884 = vmatprep.subr.mxu0 0.0
    %1885 = vmatpush1.msra.mxu0 0.0
    %1886 = vmatprep.subr.mxu0 0.0
    %1887 = vmatpush1.msra.mxu0 0.0
    %1888 = vmatprep.subr.mxu0 0.0
    %1889 = vmatpush1.msra.mxu0 0.0
    %1890 = vmatprep.subr.mxu0 0.0
    %1891 = vmatpush1.msra.mxu0 0.0
    %1892 = vmatprep.subr.mxu0 0.0
    %1893 = vmatpush1.msra.mxu0 0.0
    %1894 = vmatprep.subr.mxu0 0.0
    %1895 = vmatpush1.msra.mxu0 0.0
    %1896 = vmatprep.subr.mxu0 0.0
    %1897 = vmatpush1.msra.mxu0 0.0
    %1898 = vmatprep.subr.mxu0 0.0
    %1899 = vmatpush1.msra.mxu0 0.0
    %1900 = vmatprep.subr.mxu0 0.0
    %1901 = vmatpush1.msra.mxu0 0.0
    %1902 = vmatprep.subr.mxu0 0.0
    %1903 = vmatpush1.msra.mxu0 0.0
    %1904 = vmatprep.subr.mxu0 0.0
    %1905 = vmatpush1.msra.mxu0 0.0
    %1906 = vmatprep.subr.mxu0 0.0
    %1907 = vmatpush1.msra.mxu0 0.0
    %1908 = vmatprep.subr.mxu0 0.0
    %1909 = vmatpush1.msra.mxu0 0.0
    %1910 = vmatprep.subr.mxu0 0.0
    %1911 = vmatpush1.msra.mxu0 0.0
    %1912 = vmatprep.subr.mxu0 0.0
    %1913 = vmatpush1.msra.mxu0 0.0
    %1914 = vmatprep.subr.mxu0 0.0
    %1915 = vmatpush1.msra.mxu0 0.0
    %1916 = vmatprep.subr.mxu0 0.0
    %1917 = vmatpush1.msra.mxu0 0.0
    %1918 = vmatprep.subr.mxu0 0.0
    %1919 = vmatpush1.msra.mxu0 0.0
    %1920 = vmatprep.subr.mxu0 0.0
    %1921 = vmatpush1.msra.mxu0 0.0
    %1922 = vmatprep.subr.mxu0 0.0
    %1923 = vmatpush1.msra.mxu0 0.0
    %1924 = vmatprep.subr.mxu0 0.0
    %1925 = vmatpush1.msra.mxu0 0.0
    %1926 = vmatprep.subr.mxu0 0.0
    %1927 = vmatpush1.msra.mxu0 0.0
    %1928 = vmatprep.mubr.f32.mxu0 0.0
    %1929 = vmatmul.mubr.f32.gmra.mrb[0].mxu0 %v1862
    %v1930 = vpop.f32.mrb[0].mxu0
    %v1931 = vadd.f32 0.0, %v1930
    %v1932 = vpop.f32.mrb[0].mxu0
    %v1933 = vadd.f32 0.0, %v1932
    %1934 = vdwg.mxu0
    %v1936 = vsel %vm215, %v1860, 0
    %1938 = vmatprep.subr.mxu0 %v196
    %1939 = vmatpush1.msra.mxu0 %v195
    %1940 = vmatprep.subr.mxu0 %v198
    %1941 = vmatpush1.msra.mxu0 %v197
    %1942 = vmatprep.subr.mxu0 %v200
    %1943 = vmatpush1.msra.mxu0 %v199
    %1944 = vmatprep.subr.mxu0 %v202
    %1945 = vmatpush1.msra.mxu0 %v201
    %1946 = vmatprep.subr.mxu0 %v204
    %1947 = vmatpush1.msra.mxu0 %v203
    %1948 = vmatprep.subr.mxu0 %v206
    %1949 = vmatpush1.msra.mxu0 %v205
    %1950 = vmatprep.subr.mxu0 %v208
    %1951 = vmatpush1.msra.mxu0 %v207
    %1952 = vmatprep.subr.mxu0 %v210
    %1953 = vmatpush1.msra.mxu0 %v209
    %1954 = vmatprep.subr.mxu0 0.0
    %1955 = vmatpush1.msra.mxu0 0.0
    %1956 = vmatprep.subr.mxu0 0.0
    %1957 = vmatpush1.msra.mxu0 0.0
    %1958 = vmatprep.subr.mxu0 0.0
    %1959 = vmatpush1.msra.mxu0 0.0
    %1960 = vmatprep.subr.mxu0 0.0
    %1961 = vmatpush1.msra.mxu0 0.0
    %1962 = vmatprep.subr.mxu0 0.0
    %1963 = vmatpush1.msra.mxu0 0.0
    %1964 = vmatprep.subr.mxu0 0.0
    %1965 = vmatpush1.msra.mxu0 0.0
    %1966 = vmatprep.subr.mxu0 0.0
    %1967 = vmatpush1.msra.mxu0 0.0
    %1968 = vmatprep.subr.mxu0 0.0
    %1969 = vmatpush1.msra.mxu0 0.0
    %1970 = vmatprep.subr.mxu0 0.0
    %1971 = vmatpush1.msra.mxu0 0.0
    %1972 = vmatprep.subr.mxu0 0.0
    %1973 = vmatpush1.msra.mxu0 0.0
    %1974 = vmatprep.subr.mxu0 0.0
    %1975 = vmatpush1.msra.mxu0 0.0
    %1976 = vmatprep.subr.mxu0 0.0
    %1977 = vmatpush1.msra.mxu0 0.0
    %1978 = vmatprep.subr.mxu0 0.0
    %1979 = vmatpush1.msra.mxu0 0.0
    %1980 = vmatprep.subr.mxu0 0.0
    %1981 = vmatpush1.msra.mxu0 0.0
    %1982 = vmatprep.subr.mxu0 0.0
    %1983 = vmatpush1.msra.mxu0 0.0
    %1984 = vmatprep.subr.mxu0 0.0
    %1985 = vmatpush1.msra.mxu0 0.0
    %1986 = vmatprep.subr.mxu0 0.0
    %1987 = vmatpush1.msra.mxu0 0.0
    %1988 = vmatprep.subr.mxu0 0.0
    %1989 = vmatpush1.msra.mxu0 0.0
    %1990 = vmatprep.subr.mxu0 0.0
    %1991 = vmatpush1.msra.mxu0 0.0
    %1992 = vmatprep.subr.mxu0 0.0
    %1993 = vmatpush1.msra.mxu0 0.0
    %1994 = vmatprep.subr.mxu0 0.0
    %1995 = vmatpush1.msra.mxu0 0.0
    %1996 = vmatprep.subr.mxu0 0.0
    %1997 = vmatpush1.msra.mxu0 0.0
    %1998 = vmatprep.subr.mxu0 0.0
    %1999 = vmatpush1.msra.mxu0 0.0
    %2000 = vmatprep.subr.mxu0 0.0
    %2001 = vmatpush1.msra.mxu0 0.0
    %2002 = vmatprep.mubr.f32.mxu0 0.0
    %2003 = vmatmul.mubr.f32.gmra.mrb[0].mxu0 %v1936
    %v2004 = vpop.f32.mrb[0].mxu0
    %v2005 = vadd.f32 0.0, %v2004
    %v2006 = vpop.f32.mrb[0].mxu0
    %v2007 = vadd.f32 0.0, %v2006
    %2008 = vdwg.mxu0
    %s2009 = scalar_lea.vmem [#allocation6], 28
    %v2010 = vld [vmem:[%s2009] sm:$0xf]
    %v2013 = vcombine.low %v1931, %v1933
    %v2015 = vunpack.c.l.s4 1983009808
    %v2016 = vunpack.c.0.s8 %v2015
    %v2017 = vlaneseq
    %v2018 = vshrl.u32 %v2017, 7
    %v2019 = vsub.s32 %v2016, %v2018
    %v2020 = vrot.slane %v2013, %v2019
    %v2022 = vadd.f32 %v2010, %v2020
    %v2023 = vld [vmem:[#allocation7] sm:$0xf]
    %v2026 = vcombine.low %v2005, %v2007
    %v2028 = vunpack.c.l.s4 1983009808
    %v2029 = vunpack.c.0.s8 %v2028
    %v2030 = vlaneseq
    %v2031 = vshrl.u32 %v2030, 7
    %v2032 = vsub.s32 %v2029, %v2031
    %v2033 = vrot.slane %v2026, %v2032
    %v2035 = vadd.f32 %v2023, %v2033
    %v2036 = vxor.u32 %v2022, 2147483648
    %v2037 = vmul.f32 %v2036, 1.442695
    %v2038 = vpow.pop %v2037
    %v2039 = vadd.f32 %v2038, 1.0
    %v2040 = vrcp.pop %v2039
    %v2041 = vmul.f32 1.0, %v2040
    %v2042 = vxor.u32 %v2035, 2147483648
    %v2043 = vmul.f32 %v2042, 1.442695
    %v2044 = vpow.pop %v2043
    %v2045 = vadd.f32 %v2044, 1.0
    %v2046 = vrcp.pop %v2045
    %v2047 = vmul.f32 1.0, %v2046
    %2049 = vrot.lane.b32.xlu0 %v2022, 64
    %v2050 = vpop.permute.xlu0 %2049
    %v2051 = vrot.slane %v2050, 2
    %v2053 = vtanh.pop %v2051
    %2055 = vrot.lane.b32.xlu0 %v2035, 64
    %v2056 = vpop.permute.xlu0 %2055
    %v2057 = vrot.slane %v2056, 2
    %v2059 = vtanh.pop %v2057
    %v2060 = vmul.f32 %v2041, %v1835
    %v2061 = vmul.f32 %v2041, %v2053
    %2063 = vrot.lane.b32.xlu0 %v2061, 64
    %v2064 = vpop.permute.xlu0 %2063
    %v2066 = vadd.f32 %v2060, %v2064
    %v2067 = vmul.f32 %v2047, %v1842
    %v2068 = vmul.f32 %v2047, %v2059
    %2070 = vrot.lane.b32.xlu0 %v2068, 64
    %v2071 = vpop.permute.xlu0 %2070
    %v2073 = vadd.f32 %v2067, %v2071
    %v2074 = vtanh.pop %v2066
    %v2076 = vrot.slane %v2041, 2
    %2079 = vrot.lane.b32.xlu0 %v2074, 64
    %v2080 = vpop.permute.xlu0 %2079
    %v2082 = vmul.f32 %v2076, %v2080
    %v2083 = vtanh.pop %v2073
    %v2085 = vrot.slane %v2047, 2
    %2088 = vrot.lane.b32.xlu0 %v2083, 64
    %v2089 = vpop.permute.xlu0 %2088
    %v2091 = vmul.f32 %v2085, %v2089
    %vm2092 = vcmask 517120
    %2093 = vst.msk [vmem:[#allocation2] sm:$0x3] %vm2092, %v2082
    %2094 = vst.msk [vmem:[#allocation3] sm:$0x3] %vm2092, %v2091
    %v2097 = vunpack.c.l.s4 1983009808
    %v2098 = vunpack.c.0.s8 %v2097
    %v2099 = vlaneseq
    %v2100 = vshrl.u32 %v2099, 7
    %v2101 = vsub.s32 %v2098, %v2100
    %v2102 = vrot.slane %v2066, %v2101
    %2103 = vrot.lane.b32.xlu0 %v2102, 64
    %v2104 = vpop.permute.xlu0 %2103
    %2106 = vst.msk [vmem:[#allocation4] sm:$0x3] %vm2092, %v2104
    %v2109 = vunpack.c.l.s4 1983009808
    %v2110 = vunpack.c.0.s8 %v2109
    %v2111 = vlaneseq
    %v2112 = vshrl.u32 %v2111, 7
    %v2113 = vsub.s32 %v2110, %v2112
    %v2114 = vrot.slane %v2073, %v2113
    %2115 = vrot.lane.b32.xlu0 %v2114, 64
    %v2116 = vpop.permute.xlu0 %2115
    %2118 = vst.msk [vmem:[#allocation5] sm:$0x3] %vm2092, %v2116
    // Predicated region
    $region112: #{anomaly_clip_lstm3_forward.3} parent=1 // pred_check
      %p2119 = pneg %p170
    $region113: #{anomaly_clip_lstm3_forward.3} parent=1 // pred_check_branch
      %2121 = sbr.rel (%p2119) target = $region115
    $region114: #{anomaly_clip_lstm3_forward.3} parent=1 // pred_region
      %v2122 = vadd.f32 %v2082, %v2091
      %v2123 = vld [vmem:[%s4] sm:$0xff]
      %v2124 = vld [vmem:[%s4 + $0x8] sm:$0xff]
      %v2125 = vld [vmem:[%s4 + $0x10] sm:$0xff]
      %v2126 = vld [vmem:[%s4 + $0x18] sm:$0xff]
      %v2127 = vld [vmem:[%s4 + $0x20] sm:$0xff]
      %v2128 = vld [vmem:[%s4 + $0x28] sm:$0xff]
      %v2129 = vld [vmem:[%s4 + $0x30] sm:$0xff]
      %v2130 = vld [vmem:[%s4 + $0x38] sm:$0xff]
      %v2131 = vld [vmem:[%s5] sm:$0x1]
      %v2133 = vlaneseq
      %v2134 = vshrl.u32 %v2133, 7
      %v2135 = vsub.s32 0, %v2134
      %v2136 = vrot.slane %v2131, %v2135
      %v2139 = vsel %vm215, %v2122, 0
      %2141 = vmatprep.subr.mxu0 0.0
      %2142 = vmatpush1.msra.mxu0 %v2123
      %2143 = vmatprep.subr.mxu0 0.0
      %2144 = vmatpush1.msra.mxu0 %v2124
      %2145 = vmatprep.subr.mxu0 0.0
      %2146 = vmatpush1.msra.mxu0 %v2125
      %2147 = vmatprep.subr.mxu0 0.0
      %2148 = vmatpush1.msra.mxu0 %v2126
      %2149 = vmatprep.subr.mxu0 0.0
      %2150 = vmatpush1.msra.mxu0 %v2127
      %2151 = vmatprep.subr.mxu0 0.0
      %2152 = vmatpush1.msra.mxu0 %v2128
      %2153 = vmatprep.subr.mxu0 0.0
      %2154 = vmatpush1.msra.mxu0 %v2129
      %2155 = vmatprep.subr.mxu0 0.0
      %2156 = vmatpush1.msra.mxu0 %v2130
      %2157 = vmatprep.subr.mxu0 0.0
      %2158 = vmatpush1.msra.mxu0 0.0
      %2159 = vmatprep.subr.mxu0 0.0
      %2160 = vmatpush1.msra.mxu0 0.0
      %2161 = vmatprep.subr.mxu0 0.0
      %2162 = vmatpush1.msra.mxu0 0.0
      %2163 = vmatprep.subr.mxu0 0.0
      %2164 = vmatpush1.msra.mxu0 0.0
      %2165 = vmatprep.subr.mxu0 0.0
      %2166 = vmatpush1.msra.mxu0 0.0
      %2167 = vmatprep.subr.mxu0 0.0
      %2168 = vmatpush1.msra.mxu0 0.0
      %2169 = vmatprep.subr.mxu0 0.0
      %2170 = vmatpush1.msra.mxu0 0.0
      %2171 = vmatprep.subr.mxu0 0.0
      %2172 = vmatpush1.msra.mxu0 0.0
      %2173 = vmatprep.subr.mxu0 0.0
      %2174 = vmatpush1.msra.mxu0 0.0
      %2175 = vmatprep.subr.mxu0 0.0
      %2176 = vmatpush1.msra.mxu0 0.0
      %2177 = vmatprep.subr.mxu0 0.0
      %2178 = vmatpush1.msra.mxu0 0.0
      %2179 = vmatprep.subr.mxu0 0.0
      %2180 = vmatpush1.msra.mxu0 0.0
      %2181 = vmatprep.subr.mxu0 0.0
      %2182 = vmatpush1.msra.mxu0 0.0
      %2183 = vmatprep.subr.mxu0 0.0
      %2184 = vmatpush1.msra.mxu0 0.0
      %2185 = vmatprep.subr.mxu0 0.0
      %2186 = vmatpush1.msra.mxu0 0.0
      %2187 = vmatprep.subr.mxu0 0.0
      %2188 = vmatpush1.msra.mxu0 0.0
      %2189 = vmatprep.subr.mxu0 0.0
      %2190 = vmatpush1.msra.mxu0 0.0
      %2191 = vmatprep.subr.mxu0 0.0
      %2192 = vmatpush1.msra.mxu0 0.0
      %2193 = vmatprep.subr.mxu0 0.0
      %2194 = vmatpush1.msra.mxu0 0.0
      %2195 = vmatprep.subr.mxu0 0.0
      %2196 = vmatpush1.msra.mxu0 0.0
      %2197 = vmatprep.subr.mxu0 0.0
      %2198 = vmatpush1.msra.mxu0 0.0
      %2199 = vmatprep.subr.mxu0 0.0
      %2200 = vmatpush1.msra.mxu0 0.0
      %2201 = vmatprep.subr.mxu0 0.0
      %2202 = vmatpush1.msra.mxu0 0.0
      %2203 = vmatprep.subr.mxu0 0.0
      %2204 = vmatpush1.msra.mxu0 0.0
      %2205 = vmatprep.mubr.f32.mxu0 0.0
      %2206 = vmatmul.mubr.f32.gmra.mrb[0].mxu0 %v2139
      %v2207 = vpop.f32.mrb[0].mxu0
      %v2208 = vadd.f32 %v2136, %v2207
      %v2209 = vpop.f32.mrb[0].mxu0
      %2210 = vdwg.mxu0
      %vm2211 = vcmask 9216
      %v2212 = vsel %vm2211, %v2208, -inf
      %2213 = vmax.xlane.f32.xlu0 %v2212
      %v2214 = vpop.xlane.xlu0 %2213
      %v2215 = vsub.f32 %v2208, %v2214
      %v2216 = vmul.f32 %v2215, 1.442695
      %v2217 = vpow.pop %v2216
      %v2218 = vsel %vm2211, %v2217, 0.0
      %2219 = vadd.xlane.f32.xlu0 %v2218
      %v2220 = vpop.xlane.xlu0 %2219
      %v2221 = vrcp.pop %v2220
      %v2222 = vmul.f32 %v2217, %v2221
      %2223 = vst.msk [vmem:[#allocation8] sm:$0x3] %vm2211, %v2222
    $region115: #{anomaly_clip_lstm3_forward.3} parent=1 // pred_fallthru
      _
    // Predicated region
    $region116: #{anomaly_clip_lstm3_forward.3} parent=1 // pred_check
      _
    $region117: #{anomaly_clip_lstm3_forward.3} parent=1 // pred_check_branch
      %2225 = sbr.rel (0) target = $region119
    $region118: #{anomaly_clip_lstm3_forward.3} parent=1 // pred_region
      %s2227 = ssub.s32 32, 32
      %2228 = vsyncadd [#allocation9], %s2227
      %s2230 = sshll.u32 [#allocation8], 4
      %s2231 = int_to_ptr.vmem [resolvable:$true] %s2230
      %2233 = dma.vmem_to_hbm [thread:$0]  %s2231, 32, %s6, [#allocation9]
    $region119: #{anomaly_clip_lstm3_forward.3} parent=1 // pred_fallthru
      _
    // Predicated region
    $region120: #{anomaly_clip_lstm3_forward.3} parent=1 // pred_check
      _
    $region121: #{anomaly_clip_lstm3_forward.3} parent=1 // pred_check_branch
      %2235 = sbr.rel (0) target = $region123
    $region122: #{anomaly_clip_lstm3_forward.3} parent=1 // pred_region
      %2236 = dma.done [#allocation9], 32
    $region123: #{anomaly_clip_lstm3_forward.3} parent=1 // pred_fallthru
      _
    %2237 = vsyncpa [#allocation9], 1

</llo_original>
